<compile_context>
chip_gen: v5e
topology: v5e:2x2
jax: 0.10.0
libtpu: 0.0.40
codegen_flags: <defaults>
</compile_context>

<pallas_src>
import functools

import jax
import jax.numpy as jnp
from jax.experimental import pallas as pl
from jax.experimental.pallas import tpu as pltpu


_PAD = 128  # zero border (in flat-spatial elements) on each side of the slab


# ---------------------------------------------------------------------------
# Fused RefineNet kernel (one grid step = one image of the batch)
# ---------------------------------------------------------------------------
def _refine_kernel(img_ref, depth_ref,
                   w1_ref, b1_ref, w2_ref, b2_ref, w3_ref, b3_ref,
                   w4_ref, b4_ref,
                   out_ref, e_ref, p_ref, *, H, W):
    N = H * W
    f32 = jnp.float32
    bf16 = jnp.bfloat16

    # Zero the activation slab: VMEM scratch is not zero-initialised and
    # persists across grid steps.  The [:, :PAD] / [:, PAD+N:] borders stay
    # zero for the whole kernel and act as the top/bottom conv padding.
    e_ref[...] = jnp.zeros_like(e_ref)

    # Column-validity masks for the horizontal taps (dx = -1 / +1); vertical
    # out-of-bounds taps land in the zero borders instead.
    x_col = jax.lax.broadcasted_iota(jnp.int32, (1, N), 1) % W
    mask_l = jnp.where(x_col >= 1, 1.0, 0.0).astype(f32)        # tap dx = -1
    mask_r = jnp.where(x_col <= W - 2, 1.0, 0.0).astype(f32)    # tap dx = +1

    # Layer-1 input: torch.cat((img, depth_init), dim=1), done in VMEM.
    e_ref[0:3, _PAD:_PAD + N] = img_ref[0].astype(f32)
    e_ref[3:4, _PAD:_PAD + N] = depth_ref[0]

    def conv_bn_relu(w_ref, b_ref, cin):
        # im2col: nine lane-shifted copies of the (cin, N) activation slab.
        t = 0
        for dy in (-1, 0, 1):
            for dx in (-1, 0, 1):
                start = _PAD + dy * W + dx          # static lane offset
                shifted = e_ref[0:cin, start:start + N]
                if dx == -1:
                    shifted = shifted * mask_l
                elif dx == 1:
                    shifted = shifted * mask_r
                p_ref[t * cin:(t + 1) * cin, :] = shifted
                t += 1
        # One MXU matmul per layer: (cout, 9*cin) @ (9*cin, N), bf16 operands,
        # f32 accumulation; folded-BN bias + ReLU epilogue in f32.
        acc = jnp.dot(w_ref[...], p_ref[0:9 * cin, :].astype(bf16),
                      preferred_element_type=f32)
        return jnp.maximum(acc + b_ref[...], 0.0)

    a = conv_bn_relu(w1_ref, b1_ref, 4)             # conv1: 4  -> 32
    e_ref[0:32, _PAD:_PAD + N] = a
    a = conv_bn_relu(w2_ref, b2_ref, 32)            # conv2: 32 -> 32
    e_ref[0:32, _PAD:_PAD + N] = a
    a = conv_bn_relu(w3_ref, b3_ref, 32)            # conv3: 32 -> 32
    e_ref[0:32, _PAD:_PAD + N] = a
    res = conv_bn_relu(w4_ref, b4_ref, 32)          # res:   32 -> 1
    out_ref[0] = depth_ref[0] + res                 # depth_init + residual (f32)


# ---------------------------------------------------------------------------
# Wrapper
# ---------------------------------------------------------------------------
def refine_net_forward(img_nchw, depth_nchw, params):
    B, C, H, W = img_nchw.shape
    assert C == 3 and depth_nchw.shape == (B, 1, H, W)
    N = H * W
    assert W + 1 <= _PAD, "spatial tiling needed for this width"

    # Free row-major reshapes into the channel-major, spatial-on-lanes layout.
    # img is cast to bf16 (MXU input dtype) to halve its DMA bytes; depth stays
    # f32 because it is also the residual addend.
    img = img_nchw.reshape(B, 3, N).astype(jnp.bfloat16)
    depth = depth_nchw.reshape(B, 1, N)

    (w1, b1), (w2, b2), (w3, b3), (w4, b4) = params
    flat_params = (w1, b1, w2, b2, w3, b3, w4, b4)

    def _const_spec(a):  # full-array block, resident across the whole grid
        return pl.BlockSpec(a.shape, lambda b, _nd=a.ndim: (0,) * _nd)

    out = pl.pallas_call(
        functools.partial(_refine_kernel, H=H, W=W),
        out_shape=jax.ShapeDtypeStruct((B, 1, N), jnp.float32),
        grid=(B,),
        in_specs=[
            pl.BlockSpec((1, 3, N), lambda b: (b, 0, 0)),   # img   (bf16)
            pl.BlockSpec((1, 1, N), lambda b: (b, 0, 0)),   # depth (f32)
        ] + [_const_spec(a) for a in flat_params],
        out_specs=pl.BlockSpec((1, 1, N), lambda b: (b, 0, 0)),
        scratch_shapes=[
            pltpu.VMEM((32, N + 2 * _PAD), jnp.float32),    # activation slab
            pltpu.VMEM((9 * 32, N), jnp.float32),           # im2col patches
        ],
        compiler_params=pltpu.CompilerParams(
            dimension_semantics=("parallel",)),
    )(img, depth, *flat_params)
    return out.reshape(B, 1, H, W)


# ---------------------------------------------------------------------------
# Parameters (deterministic, synthetic) — shapes from RefineNet.__init__:
#   conv1: ConvBnReLU(4, 32), conv2/3: ConvBnReLU(32, 32), res: ConvBnReLU(32, 1)
# BN (inference stats) is folded: scale into the weights, remainder into bias.
# ---------------------------------------------------------------------------
def init_params(key):
    layer_defs = [(4, 32), (32, 32), (32, 32), (32, 1)]
    params = []
    for i, (cin, cout) in enumerate(layer_defs):
        kw, kg, kb, km, kv = jax.random.split(jax.random.fold_in(key, i), 5)
        w = 0.1 * jax.random.normal(kw, (cout, cin, 3, 3), jnp.float32)  # OIHW
        gamma = 1.0 + 0.1 * jax.random.normal(kg, (cout,), jnp.float32)
        beta = 0.1 * jax.random.normal(kb, (cout,), jnp.float32)
        run_mean = 0.1 * jax.random.normal(km, (cout,), jnp.float32)
        run_var = jnp.abs(jax.random.normal(kv, (cout,), jnp.float32)) + 1.0
        scale = gamma / jnp.sqrt(run_var + 1e-5)
        bias = beta - run_mean * scale
        w_folded = w * scale[:, None, None, None]
        # OIHW -> (O, ky, kx, I) -> (O, 9*I): column k = (ky*3 + kx)*Cin + c,
        # matching the kernel's im2col row ordering.
        w_flat = jnp.transpose(w_folded, (0, 2, 3, 1)).reshape(cout, 9 * cin)
        params.append((w_flat.astype(jnp.bfloat16),
                       bias.reshape(cout, 1).astype(jnp.float32)))
    return params


# ---------------------------------------------------------------------------
# Pure-XLA reference (NCHW lax.conv), matching the kernel's bf16 MXU inputs.
# ---------------------------------------------------------------------------
def reference_forward(img_nchw, depth_nchw, params):
    act = jnp.concatenate([img_nchw, depth_nchw], axis=1)   # (B, 4, H, W) f32
    for w_flat, bias in params:
        cout = w_flat.shape[0]
        cin = w_flat.shape[1] // 9
        w = jnp.transpose(w_flat.reshape(cout, 3, 3, cin), (0, 3, 1, 2))  # OIHW
        y = jax.lax.conv_general_dilated(
            act.astype(jnp.bfloat16), w,
            window_strides=(1, 1), padding="SAME",
            dimension_numbers=("NCHW", "OIHW", "NCHW"),
            preferred_element_type=jnp.float32)
        act = jnp.maximum(y + bias.reshape(1, cout, 1, 1), 0.0)
    return depth_nchw + act                                  # depth_init + res


# ---------------------------------------------------------------------------
if __name__ == "__main__":
    key = jax.random.PRNGKey(0)
    k_img, k_depth, k_param = jax.random.split(key, 3)

    B, H, W = 2, 16, 16
    img = jax.random.normal(k_img, (B, 3, H, W), jnp.float32)          # NCHW
    depth_init = jax.random.normal(k_depth, (B, 1, H, W), jnp.float32)
    params = init_params(k_param)

    depth_refined = jax.block_until_ready(
        jax.jit(refine_net_forward)(img, depth_init, params))

    ref = jax.block_until_ready(reference_forward(img, depth_init, params))
    assert depth_refined.shape == (B, 1, H, W)
    err = float(jnp.max(jnp.abs(depth_refined - ref)))
    # bf16 MXU operands in both paths; tolerance covers accumulation-order
    # differences only (a real layout/tap bug would be O(0.1+)).
    assert err < 2e-2, f"mismatch vs reference: max abs err = {err}"

    print("KERNEL_OK")
</pallas_src>

<mosaic_0001>
module attributes {stable_mosaic.version = 11 : i64} {
  func.func @_refine_kernel(%arg0: i32, %arg1: memref<1x3x256xbf16, #tpu.memory_space<vmem>>, %arg2: memref<1x1x256xf32, #tpu.memory_space<vmem>>, %arg3: memref<32x36xbf16, #tpu.memory_space<vmem>>, %arg4: memref<32x1xf32, #tpu.memory_space<vmem>>, %arg5: memref<32x288xbf16, #tpu.memory_space<vmem>>, %arg6: memref<32x1xf32, #tpu.memory_space<vmem>>, %arg7: memref<32x288xbf16, #tpu.memory_space<vmem>>, %arg8: memref<32x1xf32, #tpu.memory_space<vmem>>, %arg9: memref<1x288xbf16, #tpu.memory_space<vmem>>, %arg10: memref<1x1xf32, #tpu.memory_space<vmem>>, %arg11: memref<1x1x256xf32, #tpu.memory_space<vmem>>, %arg12: memref<32x512xf32, #tpu.memory_space<vmem>>, %arg13: memref<288x256xf32, #tpu.memory_space<vmem>>) attributes {dimension_semantics = [#tpu.dimension_semantics<parallel>], iteration_bounds = array<i64: 2>, scalar_prefetch = 0 : i64, scratch_operands = 2 : i64, tpu.core_type = #tpu.core_type<tc>, window_params = [{transform_indices = @transform_0, window_bounds = array<i64: 1, 3, 256>}, {transform_indices = @transform_1, window_bounds = array<i64: 1, 1, 256>}, {pipeline_mode = #tpu.pipeline_mode<synchronous>, transform_indices = @transform_2, window_bounds = array<i64: 32, 36>}, {pipeline_mode = #tpu.pipeline_mode<synchronous>, transform_indices = @transform_3, window_bounds = array<i64: 32, 1>}, {pipeline_mode = #tpu.pipeline_mode<synchronous>, transform_indices = @transform_4, window_bounds = array<i64: 32, 288>}, {pipeline_mode = #tpu.pipeline_mode<synchronous>, transform_indices = @transform_5, window_bounds = array<i64: 32, 1>}, {pipeline_mode = #tpu.pipeline_mode<synchronous>, transform_indices = @transform_6, window_bounds = array<i64: 32, 288>}, {pipeline_mode = #tpu.pipeline_mode<synchronous>, transform_indices = @transform_7, window_bounds = array<i64: 32, 1>}, {pipeline_mode = #tpu.pipeline_mode<synchronous>, transform_indices = @transform_8, window_bounds = array<i64: 1, 288>}, {pipeline_mode = #tpu.pipeline_mode<synchronous>, transform_indices = @transform_9, window_bounds = array<i64: 1, 1>}, {transform_indices = @transform_10, window_bounds = array<i64: 1, 1, 256>}]} {
    %cst = arith.constant 0.000000e+00 : f32
    %0 = vector.broadcast %cst : f32 to vector<32x512xf32>
    %c0 = arith.constant 0 : index
    %c0_0 = arith.constant 0 : index
    %1 = vector.load %arg12[%c0, %c0_0] : memref<32x512xf32, #tpu.memory_space<vmem>>, vector<32x512xf32>
    tpu.vector_store %arg12[%c0, %c0_0], %0 {strides = array<i32>} : memref<32x512xf32, #tpu.memory_space<vmem>>, vector<32x512xf32>,
    %2 = tpu.iota {dimensions = array<i32: 1>} : vector<1x256xi32>
    %c16_i32 = arith.constant 16 : i32
    %c0_i32 = arith.constant 0 : i32
    %3 = arith.cmpi eq, %c16_i32, %c0_i32 : i32
    %c1_i32 = arith.constant 1 : i32
    %4 = arith.select %3, %c1_i32, %c16_i32 : i32
    %5 = vector.broadcast %4 : i32 to vector<1x256xi32>
    %6 = arith.remsi %2, %5 : vector<1x256xi32>
    %c0_i32_1 = arith.constant 0 : i32
    %7 = vector.broadcast %c0_i32_1 : i32 to vector<1x256xi32>
    %8 = arith.cmpi ne, %6, %7 : vector<1x256xi32>
    %c0_i32_2 = arith.constant 0 : i32
    %9 = vector.broadcast %c0_i32_2 : i32 to vector<1x256xi32>
    %10 = arith.cmpi slt, %6, %9 : vector<1x256xi32>
    %c0_i32_3 = arith.constant 0 : i32
    %11 = arith.cmpi slt, %4, %c0_i32_3 : i32
    %12 = vector.broadcast %11 : i1 to vector<1x256xi1>
    %13 = vector.broadcast %12 : vector<1x256xi1> to vector<1x256xi1>
    %14 = arith.xori %10, %13 : vector<1x256xi1>
    %15 = arith.andi %14, %8 : vector<1x256xi1>
    %16 = vector.broadcast %4 : i32 to vector<1x256xi32>
    %17 = arith.addi %6, %16 : vector<1x256xi32>
    %18 = arith.select %15, %17, %6 : vector<1x256xi1>, vector<1x256xi32>
    %c1_i32_4 = arith.constant 1 : i32
    %19 = vector.broadcast %c1_i32_4 : i32 to vector<1x256xi32>
    %20 = arith.cmpi sge, %18, %19 : vector<1x256xi32>
    %cst_5 = arith.constant 1.000000e+00 : f32
    %cst_6 = arith.constant 0.000000e+00 : f32
    %21 = vector.broadcast %cst_5 : f32 to vector<1x256xf32>
    %22 = vector.broadcast %cst_6 : f32 to vector<1x256xf32>
    %23 = arith.select %20, %21, %22 : vector<1x256xi1>, vector<1x256xf32>
    %c14_i32 = arith.constant 14 : i32
    %24 = vector.broadcast %c14_i32 : i32 to vector<1x256xi32>
    %25 = arith.cmpi sle, %18, %24 : vector<1x256xi32>
    %cst_7 = arith.constant 1.000000e+00 : f32
    %cst_8 = arith.constant 0.000000e+00 : f32
    %26 = vector.broadcast %cst_7 : f32 to vector<1x256xf32>
    %27 = vector.broadcast %cst_8 : f32 to vector<1x256xf32>
    %28 = arith.select %25, %26, %27 : vector<1x256xi1>, vector<1x256xf32>
    %c0_9 = arith.constant 0 : index
    %c0_10 = arith.constant 0 : index
    %c0_11 = arith.constant 0 : index
    %29 = vector.load %arg1[%c0_9, %c0_10, %c0_11] : memref<1x3x256xbf16, #tpu.memory_space<vmem>>, vector<1x3x256xbf16>
    %30 = vector.shape_cast %29 : vector<1x3x256xbf16> to vector<3x256xbf16>
    %31 = arith.extf %30 : vector<3x256xbf16> to vector<3x256xf32>
    %c0_12 = arith.constant 0 : index
    %c128 = arith.constant 128 : index
    %32 = vector.load %arg12[%c0_12, %c128] : memref<32x512xf32, #tpu.memory_space<vmem>>, vector<3x256xf32>
    tpu.vector_store %arg12[%c0_12, %c128], %31 {strides = array<i32>} : memref<32x512xf32, #tpu.memory_space<vmem>>, vector<3x256xf32>,
    %c0_13 = arith.constant 0 : index
    %c0_14 = arith.constant 0 : index
    %c0_15 = arith.constant 0 : index
    %33 = vector.load %arg2[%c0_13, %c0_14, %c0_15] : memref<1x1x256xf32, #tpu.memory_space<vmem>>, vector<1x1x256xf32>
    %34 = vector.shape_cast %33 : vector<1x1x256xf32> to vector<1x256xf32>
    %c3 = arith.constant 3 : index
    %c128_16 = arith.constant 128 : index
    %35 = vector.load %arg12[%c3, %c128_16] : memref<32x512xf32, #tpu.memory_space<vmem>>, vector<1x256xf32>
    tpu.vector_store %arg12[%c3, %c128_16], %34 {strides = array<i32>} : memref<32x512xf32, #tpu.memory_space<vmem>>, vector<1x256xf32>,
    %c0_17 = arith.constant 0 : index
    %c111 = arith.constant 111 : index
    %36 = vector.load %arg12[%c0_17, %c111] : memref<32x512xf32, #tpu.memory_space<vmem>>, vector<4x256xf32>
    %37 = vector.broadcast %23 : vector<1x256xf32> to vector<4x256xf32>
    %38 = arith.mulf %36, %37 : vector<4x256xf32>
    %c0_18 = arith.constant 0 : index
    %c0_19 = arith.constant 0 : index
    %39 = vector.load %arg13[%c0_18, %c0_19] : memref<288x256xf32, #tpu.memory_space<vmem>>, vector<4x256xf32>
    tpu.vector_store %arg13[%c0_18, %c0_19], %38 {strides = array<i32>} : memref<288x256xf32, #tpu.memory_space<vmem>>, vector<4x256xf32>,
    %c0_20 = arith.constant 0 : index
    %c112 = arith.constant 112 : index
    %40 = vector.load %arg12[%c0_20, %c112] : memref<32x512xf32, #tpu.memory_space<vmem>>, vector<4x256xf32>
    %c4 = arith.constant 4 : index
    %c0_21 = arith.constant 0 : index
    %41 = vector.load %arg13[%c4, %c0_21] : memref<288x256xf32, #tpu.memory_space<vmem>>, vector<4x256xf32>
    tpu.vector_store %arg13[%c4, %c0_21], %40 {strides = array<i32>} : memref<288x256xf32, #tpu.memory_space<vmem>>, vector<4x256xf32>,
    %c0_22 = arith.constant 0 : index
    %c113 = arith.constant 113 : index
    %42 = vector.load %arg12[%c0_22, %c113] : memref<32x512xf32, #tpu.memory_space<vmem>>, vector<4x256xf32>
    %43 = vector.broadcast %28 : vector<1x256xf32> to vector<4x256xf32>
    %44 = arith.mulf %42, %43 : vector<4x256xf32>
    %c8 = arith.constant 8 : index
    %c0_23 = arith.constant 0 : index
    %45 = vector.load %arg13[%c8, %c0_23] : memref<288x256xf32, #tpu.memory_space<vmem>>, vector<4x256xf32>
    tpu.vector_store %arg13[%c8, %c0_23], %44 {strides = array<i32>} : memref<288x256xf32, #tpu.memory_space<vmem>>, vector<4x256xf32>,
    %c0_24 = arith.constant 0 : index
    %c127 = arith.constant 127 : index
    %46 = vector.load %arg12[%c0_24, %c127] : memref<32x512xf32, #tpu.memory_space<vmem>>, vector<4x256xf32>
    %47 = vector.broadcast %23 : vector<1x256xf32> to vector<4x256xf32>
    %48 = arith.mulf %46, %47 : vector<4x256xf32>
    %c12 = arith.constant 12 : index
    %c0_25 = arith.constant 0 : index
    %49 = vector.load %arg13[%c12, %c0_25] : memref<288x256xf32, #tpu.memory_space<vmem>>, vector<4x256xf32>
    tpu.vector_store %arg13[%c12, %c0_25], %48 {strides = array<i32>} : memref<288x256xf32, #tpu.memory_space<vmem>>, vector<4x256xf32>,
    %c0_26 = arith.constant 0 : index
    %c128_27 = arith.constant 128 : index
    %50 = vector.load %arg12[%c0_26, %c128_27] : memref<32x512xf32, #tpu.memory_space<vmem>>, vector<4x256xf32>
    %c16 = arith.constant 16 : index
    %c0_28 = arith.constant 0 : index
    %51 = vector.load %arg13[%c16, %c0_28] : memref<288x256xf32, #tpu.memory_space<vmem>>, vector<4x256xf32>
    tpu.vector_store %arg13[%c16, %c0_28], %50 {strides = array<i32>} : memref<288x256xf32, #tpu.memory_space<vmem>>, vector<4x256xf32>,
    %c0_29 = arith.constant 0 : index
    %c129 = arith.constant 129 : index
    %52 = vector.load %arg12[%c0_29, %c129] : memref<32x512xf32, #tpu.memory_space<vmem>>, vector<4x256xf32>
    %53 = vector.broadcast %28 : vector<1x256xf32> to vector<4x256xf32>
    %54 = arith.mulf %52, %53 : vector<4x256xf32>
    %c20 = arith.constant 20 : index
    %c0_30 = arith.constant 0 : index
    %55 = vector.load %arg13[%c20, %c0_30] : memref<288x256xf32, #tpu.memory_space<vmem>>, vector<4x256xf32>
    tpu.vector_store %arg13[%c20, %c0_30], %54 {strides = array<i32>} : memref<288x256xf32, #tpu.memory_space<vmem>>, vector<4x256xf32>,
    %c0_31 = arith.constant 0 : index
    %c143 = arith.constant 143 : index
    %56 = vector.load %arg12[%c0_31, %c143] : memref<32x512xf32, #tpu.memory_space<vmem>>, vector<4x256xf32>
    %57 = vector.broadcast %23 : vector<1x256xf32> to vector<4x256xf32>
    %58 = arith.mulf %56, %57 : vector<4x256xf32>
    %c24 = arith.constant 24 : index
    %c0_32 = arith.constant 0 : index
    %59 = vector.load %arg13[%c24, %c0_32] : memref<288x256xf32, #tpu.memory_space<vmem>>, vector<4x256xf32>
    tpu.vector_store %arg13[%c24, %c0_32], %58 {strides = array<i32>} : memref<288x256xf32, #tpu.memory_space<vmem>>, vector<4x256xf32>,
    %c0_33 = arith.constant 0 : index
    %c144 = arith.constant 144 : index
    %60 = vector.load %arg12[%c0_33, %c144] : memref<32x512xf32, #tpu.memory_space<vmem>>, vector<4x256xf32>
    %c28 = arith.constant 28 : index
    %c0_34 = arith.constant 0 : index
    %61 = vector.load %arg13[%c28, %c0_34] : memref<288x256xf32, #tpu.memory_space<vmem>>, vector<4x256xf32>
    tpu.vector_store %arg13[%c28, %c0_34], %60 {strides = array<i32>} : memref<288x256xf32, #tpu.memory_space<vmem>>, vector<4x256xf32>,
    %c0_35 = arith.constant 0 : index
    %c145 = arith.constant 145 : index
    %62 = vector.load %arg12[%c0_35, %c145] : memref<32x512xf32, #tpu.memory_space<vmem>>, vector<4x256xf32>
    %63 = vector.broadcast %28 : vector<1x256xf32> to vector<4x256xf32>
    %64 = arith.mulf %62, %63 : vector<4x256xf32>
    %c32 = arith.constant 32 : index
    %c0_36 = arith.constant 0 : index
    %65 = vector.load %arg13[%c32, %c0_36] : memref<288x256xf32, #tpu.memory_space<vmem>>, vector<4x256xf32>
    tpu.vector_store %arg13[%c32, %c0_36], %64 {strides = array<i32>} : memref<288x256xf32, #tpu.memory_space<vmem>>, vector<4x256xf32>,
    %c0_37 = arith.constant 0 : index
    %c0_38 = arith.constant 0 : index
    %66 = vector.load %arg3[%c0_37, %c0_38] : memref<32x36xbf16, #tpu.memory_space<vmem>>, vector<32x36xbf16>
    %c0_39 = arith.constant 0 : index
    %c0_40 = arith.constant 0 : index
    %67 = vector.load %arg13[%c0_39, %c0_40] : memref<288x256xf32, #tpu.memory_space<vmem>>, vector<36x256xf32>
    %68 = arith.truncf %67 : vector<36x256xf32> to vector<36x256xbf16>
    %cst_41 = arith.constant dense<0.000000e+00> : vector<32x256xf32>
    %69 = tpu.matmul %66, %68, %cst_41 {dimension_numbers = #tpu.dot_dimension_numbers<[1], [0], [0], [1], [0, 0, 1, 1], [], []>} : vector<32x36xbf16>, vector<36x256xbf16>, vector<32x256xf32> -> vector<32x256xf32>
    %c0_42 = arith.constant 0 : index
    %c0_43 = arith.constant 0 : index
    %70 = vector.load %arg4[%c0_42, %c0_43] : memref<32x1xf32, #tpu.memory_space<vmem>>, vector<32x1xf32>
    %71 = vector.broadcast %70 : vector<32x1xf32> to vector<32x256xf32>
    %72 = arith.addf %69, %71 : vector<32x256xf32>
    %cst_44 = arith.constant 0.000000e+00 : f32
    %73 = vector.broadcast %cst_44 : f32 to vector<32x256xf32>
    %74 = arith.maximumf %72, %73 : vector<32x256xf32>
    %c0_45 = arith.constant 0 : index
    %c128_46 = arith.constant 128 : index
    %75 = vector.load %arg12[%c0_45, %c128_46] : memref<32x512xf32, #tpu.memory_space<vmem>>, vector<32x256xf32>
    tpu.vector_store %arg12[%c0_45, %c128_46], %74 {strides = array<i32>} : memref<32x512xf32, #tpu.memory_space<vmem>>, vector<32x256xf32>,
    %c0_47 = arith.constant 0 : index
    %c111_48 = arith.constant 111 : index
    %76 = vector.load %arg12[%c0_47, %c111_48] : memref<32x512xf32, #tpu.memory_space<vmem>>, vector<32x256xf32>
    %77 = vector.broadcast %23 : vector<1x256xf32> to vector<32x256xf32>
    %78 = arith.mulf %76, %77 : vector<32x256xf32>
    %c0_49 = arith.constant 0 : index
    %c0_50 = arith.constant 0 : index
    %79 = vector.load %arg13[%c0_49, %c0_50] : memref<288x256xf32, #tpu.memory_space<vmem>>, vector<32x256xf32>
    tpu.vector_store %arg13[%c0_49, %c0_50], %78 {strides = array<i32>} : memref<288x256xf32, #tpu.memory_space<vmem>>, vector<32x256xf32>,
    %c0_51 = arith.constant 0 : index
    %c112_52 = arith.constant 112 : index
    %80 = vector.load %arg12[%c0_51, %c112_52] : memref<32x512xf32, #tpu.memory_space<vmem>>, vector<32x256xf32>
    %c32_53 = arith.constant 32 : index
    %c0_54 = arith.constant 0 : index
    %81 = vector.load %arg13[%c32_53, %c0_54] : memref<288x256xf32, #tpu.memory_space<vmem>>, vector<32x256xf32>
    tpu.vector_store %arg13[%c32_53, %c0_54], %80 {strides = array<i32>} : memref<288x256xf32, #tpu.memory_space<vmem>>, vector<32x256xf32>,
    %c0_55 = arith.constant 0 : index
    %c113_56 = arith.constant 113 : index
    %82 = vector.load %arg12[%c0_55, %c113_56] : memref<32x512xf32, #tpu.memory_space<vmem>>, vector<32x256xf32>
    %83 = vector.broadcast %28 : vector<1x256xf32> to vector<32x256xf32>
    %84 = arith.mulf %82, %83 : vector<32x256xf32>
    %c64 = arith.constant 64 : index
    %c0_57 = arith.constant 0 : index
    %85 = vector.load %arg13[%c64, %c0_57] : memref<288x256xf32, #tpu.memory_space<vmem>>, vector<32x256xf32>
    tpu.vector_store %arg13[%c64, %c0_57], %84 {strides = array<i32>} : memref<288x256xf32, #tpu.memory_space<vmem>>, vector<32x256xf32>,
    %c0_58 = arith.constant 0 : index
    %c127_59 = arith.constant 127 : index
    %86 = vector.load %arg12[%c0_58, %c127_59] : memref<32x512xf32, #tpu.memory_space<vmem>>, vector<32x256xf32>
    %87 = vector.broadcast %23 : vector<1x256xf32> to vector<32x256xf32>
    %88 = arith.mulf %86, %87 : vector<32x256xf32>
    %c96 = arith.constant 96 : index
    %c0_60 = arith.constant 0 : index
    %89 = vector.load %arg13[%c96, %c0_60] : memref<288x256xf32, #tpu.memory_space<vmem>>, vector<32x256xf32>
    tpu.vector_store %arg13[%c96, %c0_60], %88 {strides = array<i32>} : memref<288x256xf32, #tpu.memory_space<vmem>>, vector<32x256xf32>,
    %c0_61 = arith.constant 0 : index
    %c128_62 = arith.constant 128 : index
    %90 = vector.load %arg12[%c0_61, %c128_62] : memref<32x512xf32, #tpu.memory_space<vmem>>, vector<32x256xf32>
    %c128_63 = arith.constant 128 : index
    %c0_64 = arith.constant 0 : index
    %91 = vector.load %arg13[%c128_63, %c0_64] : memref<288x256xf32, #tpu.memory_space<vmem>>, vector<32x256xf32>
    tpu.vector_store %arg13[%c128_63, %c0_64], %90 {strides = array<i32>} : memref<288x256xf32, #tpu.memory_space<vmem>>, vector<32x256xf32>,
    %c0_65 = arith.constant 0 : index
    %c129_66 = arith.constant 129 : index
    %92 = vector.load %arg12[%c0_65, %c129_66] : memref<32x512xf32, #tpu.memory_space<vmem>>, vector<32x256xf32>
    %93 = vector.broadcast %28 : vector<1x256xf32> to vector<32x256xf32>
    %94 = arith.mulf %92, %93 : vector<32x256xf32>
    %c160 = arith.constant 160 : index
    %c0_67 = arith.constant 0 : index
    %95 = vector.load %arg13[%c160, %c0_67] : memref<288x256xf32, #tpu.memory_space<vmem>>, vector<32x256xf32>
    tpu.vector_store %arg13[%c160, %c0_67], %94 {strides = array<i32>} : memref<288x256xf32, #tpu.memory_space<vmem>>, vector<32x256xf32>,
    %c0_68 = arith.constant 0 : index
    %c143_69 = arith.constant 143 : index
    %96 = vector.load %arg12[%c0_68, %c143_69] : memref<32x512xf32, #tpu.memory_space<vmem>>, vector<32x256xf32>
    %97 = vector.broadcast %23 : vector<1x256xf32> to vector<32x256xf32>
    %98 = arith.mulf %96, %97 : vector<32x256xf32>
    %c192 = arith.constant 192 : index
    %c0_70 = arith.constant 0 : index
    %99 = vector.load %arg13[%c192, %c0_70] : memref<288x256xf32, #tpu.memory_space<vmem>>, vector<32x256xf32>
    tpu.vector_store %arg13[%c192, %c0_70], %98 {strides = array<i32>} : memref<288x256xf32, #tpu.memory_space<vmem>>, vector<32x256xf32>,
    %c0_71 = arith.constant 0 : index
    %c144_72 = arith.constant 144 : index
    %100 = vector.load %arg12[%c0_71, %c144_72] : memref<32x512xf32, #tpu.memory_space<vmem>>, vector<32x256xf32>
    %c224 = arith.constant 224 : index
    %c0_73 = arith.constant 0 : index
    %101 = vector.load %arg13[%c224, %c0_73] : memref<288x256xf32, #tpu.memory_space<vmem>>, vector<32x256xf32>
    tpu.vector_store %arg13[%c224, %c0_73], %100 {strides = array<i32>} : memref<288x256xf32, #tpu.memory_space<vmem>>, vector<32x256xf32>,
    %c0_74 = arith.constant 0 : index
    %c145_75 = arith.constant 145 : index
    %102 = vector.load %arg12[%c0_74, %c145_75] : memref<32x512xf32, #tpu.memory_space<vmem>>, vector<32x256xf32>
    %103 = vector.broadcast %28 : vector<1x256xf32> to vector<32x256xf32>
    %104 = arith.mulf %102, %103 : vector<32x256xf32>
    %c256 = arith.constant 256 : index
    %c0_76 = arith.constant 0 : index
    %105 = vector.load %arg13[%c256, %c0_76] : memref<288x256xf32, #tpu.memory_space<vmem>>, vector<32x256xf32>
    tpu.vector_store %arg13[%c256, %c0_76], %104 {strides = array<i32>} : memref<288x256xf32, #tpu.memory_space<vmem>>, vector<32x256xf32>,
    %c0_77 = arith.constant 0 : index
    %c0_78 = arith.constant 0 : index
    %106 = vector.load %arg5[%c0_77, %c0_78] : memref<32x288xbf16, #tpu.memory_space<vmem>>, vector<32x288xbf16>
    %c0_79 = arith.constant 0 : index
    %c0_80 = arith.constant 0 : index
    %107 = vector.load %arg13[%c0_79, %c0_80] : memref<288x256xf32, #tpu.memory_space<vmem>>, vector<288x256xf32>
    %108 = arith.truncf %107 : vector<288x256xf32> to vector<288x256xbf16>
    %cst_81 = arith.constant dense<0.000000e+00> : vector<32x256xf32>
    %109 = tpu.matmul %106, %108, %cst_81 {dimension_numbers = #tpu.dot_dimension_numbers<[1], [0], [0], [1], [0, 0, 1, 1], [], []>} : vector<32x288xbf16>, vector<288x256xbf16>, vector<32x256xf32> -> vector<32x256xf32>
    %c0_82 = arith.constant 0 : index
    %c0_83 = arith.constant 0 : index
    %110 = vector.load %arg6[%c0_82, %c0_83] : memref<32x1xf32, #tpu.memory_space<vmem>>, vector<32x1xf32>
    %111 = vector.broadcast %110 : vector<32x1xf32> to vector<32x256xf32>
    %112 = arith.addf %109, %111 : vector<32x256xf32>
    %cst_84 = arith.constant 0.000000e+00 : f32
    %113 = vector.broadcast %cst_84 : f32 to vector<32x256xf32>
    %114 = arith.maximumf %112, %113 : vector<32x256xf32>
    %c0_85 = arith.constant 0 : index
    %c128_86 = arith.constant 128 : index
    %115 = vector.load %arg12[%c0_85, %c128_86] : memref<32x512xf32, #tpu.memory_space<vmem>>, vector<32x256xf32>
    tpu.vector_store %arg12[%c0_85, %c128_86], %114 {strides = array<i32>} : memref<32x512xf32, #tpu.memory_space<vmem>>, vector<32x256xf32>,
    %c0_87 = arith.constant 0 : index
    %c111_88 = arith.constant 111 : index
    %116 = vector.load %arg12[%c0_87, %c111_88] : memref<32x512xf32, #tpu.memory_space<vmem>>, vector<32x256xf32>
    %117 = vector.broadcast %23 : vector<1x256xf32> to vector<32x256xf32>
    %118 = arith.mulf %116, %117 : vector<32x256xf32>
    %c0_89 = arith.constant 0 : index
    %c0_90 = arith.constant 0 : index
    %119 = vector.load %arg13[%c0_89, %c0_90] : memref<288x256xf32, #tpu.memory_space<vmem>>, vector<32x256xf32>
    tpu.vector_store %arg13[%c0_89, %c0_90], %118 {strides = array<i32>} : memref<288x256xf32, #tpu.memory_space<vmem>>, vector<32x256xf32>,
    %c0_91 = arith.constant 0 : index
    %c112_92 = arith.constant 112 : index
    %120 = vector.load %arg12[%c0_91, %c112_92] : memref<32x512xf32, #tpu.memory_space<vmem>>, vector<32x256xf32>
    %c32_93 = arith.constant 32 : index
    %c0_94 = arith.constant 0 : index
    %121 = vector.load %arg13[%c32_93, %c0_94] : memref<288x256xf32, #tpu.memory_space<vmem>>, vector<32x256xf32>
    tpu.vector_store %arg13[%c32_93, %c0_94], %120 {strides = array<i32>} : memref<288x256xf32, #tpu.memory_space<vmem>>, vector<32x256xf32>,
    %c0_95 = arith.constant 0 : index
    %c113_96 = arith.constant 113 : index
    %122 = vector.load %arg12[%c0_95, %c113_96] : memref<32x512xf32, #tpu.memory_space<vmem>>, vector<32x256xf32>
    %123 = vector.broadcast %28 : vector<1x256xf32> to vector<32x256xf32>
    %124 = arith.mulf %122, %123 : vector<32x256xf32>
    %c64_97 = arith.constant 64 : index
    %c0_98 = arith.constant 0 : index
    %125 = vector.load %arg13[%c64_97, %c0_98] : memref<288x256xf32, #tpu.memory_space<vmem>>, vector<32x256xf32>
    tpu.vector_store %arg13[%c64_97, %c0_98], %124 {strides = array<i32>} : memref<288x256xf32, #tpu.memory_space<vmem>>, vector<32x256xf32>,
    %c0_99 = arith.constant 0 : index
    %c127_100 = arith.constant 127 : index
    %126 = vector.load %arg12[%c0_99, %c127_100] : memref<32x512xf32, #tpu.memory_space<vmem>>, vector<32x256xf32>
    %127 = vector.broadcast %23 : vector<1x256xf32> to vector<32x256xf32>
    %128 = arith.mulf %126, %127 : vector<32x256xf32>
    %c96_101 = arith.constant 96 : index
    %c0_102 = arith.constant 0 : index
    %129 = vector.load %arg13[%c96_101, %c0_102] : memref<288x256xf32, #tpu.memory_space<vmem>>, vector<32x256xf32>
    tpu.vector_store %arg13[%c96_101, %c0_102], %128 {strides = array<i32>} : memref<288x256xf32, #tpu.memory_space<vmem>>, vector<32x256xf32>,
    %c0_103 = arith.constant 0 : index
    %c128_104 = arith.constant 128 : index
    %130 = vector.load %arg12[%c0_103, %c128_104] : memref<32x512xf32, #tpu.memory_space<vmem>>, vector<32x256xf32>
    %c128_105 = arith.constant 128 : index
    %c0_106 = arith.constant 0 : index
    %131 = vector.load %arg13[%c128_105, %c0_106] : memref<288x256xf32, #tpu.memory_space<vmem>>, vector<32x256xf32>
    tpu.vector_store %arg13[%c128_105, %c0_106], %130 {strides = array<i32>} : memref<288x256xf32, #tpu.memory_space<vmem>>, vector<32x256xf32>,
    %c0_107 = arith.constant 0 : index
    %c129_108 = arith.constant 129 : index
    %132 = vector.load %arg12[%c0_107, %c129_108] : memref<32x512xf32, #tpu.memory_space<vmem>>, vector<32x256xf32>
    %133 = vector.broadcast %28 : vector<1x256xf32> to vector<32x256xf32>
    %134 = arith.mulf %132, %133 : vector<32x256xf32>
    %c160_109 = arith.constant 160 : index
    %c0_110 = arith.constant 0 : index
    %135 = vector.load %arg13[%c160_109, %c0_110] : memref<288x256xf32, #tpu.memory_space<vmem>>, vector<32x256xf32>
    tpu.vector_store %arg13[%c160_109, %c0_110], %134 {strides = array<i32>} : memref<288x256xf32, #tpu.memory_space<vmem>>, vector<32x256xf32>,
    %c0_111 = arith.constant 0 : index
    %c143_112 = arith.constant 143 : index
    %136 = vector.load %arg12[%c0_111, %c143_112] : memref<32x512xf32, #tpu.memory_space<vmem>>, vector<32x256xf32>
    %137 = vector.broadcast %23 : vector<1x256xf32> to vector<32x256xf32>
    %138 = arith.mulf %136, %137 : vector<32x256xf32>
    %c192_113 = arith.constant 192 : index
    %c0_114 = arith.constant 0 : index
    %139 = vector.load %arg13[%c192_113, %c0_114] : memref<288x256xf32, #tpu.memory_space<vmem>>, vector<32x256xf32>
    tpu.vector_store %arg13[%c192_113, %c0_114], %138 {strides = array<i32>} : memref<288x256xf32, #tpu.memory_space<vmem>>, vector<32x256xf32>,
    %c0_115 = arith.constant 0 : index
    %c144_116 = arith.constant 144 : index
    %140 = vector.load %arg12[%c0_115, %c144_116] : memref<32x512xf32, #tpu.memory_space<vmem>>, vector<32x256xf32>
    %c224_117 = arith.constant 224 : index
    %c0_118 = arith.constant 0 : index
    %141 = vector.load %arg13[%c224_117, %c0_118] : memref<288x256xf32, #tpu.memory_space<vmem>>, vector<32x256xf32>
    tpu.vector_store %arg13[%c224_117, %c0_118], %140 {strides = array<i32>} : memref<288x256xf32, #tpu.memory_space<vmem>>, vector<32x256xf32>,
    %c0_119 = arith.constant 0 : index
    %c145_120 = arith.constant 145 : index
    %142 = vector.load %arg12[%c0_119, %c145_120] : memref<32x512xf32, #tpu.memory_space<vmem>>, vector<32x256xf32>
    %143 = vector.broadcast %28 : vector<1x256xf32> to vector<32x256xf32>
    %144 = arith.mulf %142, %143 : vector<32x256xf32>
    %c256_121 = arith.constant 256 : index
    %c0_122 = arith.constant 0 : index
    %145 = vector.load %arg13[%c256_121, %c0_122] : memref<288x256xf32, #tpu.memory_space<vmem>>, vector<32x256xf32>
    tpu.vector_store %arg13[%c256_121, %c0_122], %144 {strides = array<i32>} : memref<288x256xf32, #tpu.memory_space<vmem>>, vector<32x256xf32>,
    %c0_123 = arith.constant 0 : index
    %c0_124 = arith.constant 0 : index
    %146 = vector.load %arg7[%c0_123, %c0_124] : memref<32x288xbf16, #tpu.memory_space<vmem>>, vector<32x288xbf16>
    %c0_125 = arith.constant 0 : index
    %c0_126 = arith.constant 0 : index
    %147 = vector.load %arg13[%c0_125, %c0_126] : memref<288x256xf32, #tpu.memory_space<vmem>>, vector<288x256xf32>
    %148 = arith.truncf %147 : vector<288x256xf32> to vector<288x256xbf16>
    %cst_127 = arith.constant dense<0.000000e+00> : vector<32x256xf32>
    %149 = tpu.matmul %146, %148, %cst_127 {dimension_numbers = #tpu.dot_dimension_numbers<[1], [0], [0], [1], [0, 0, 1, 1], [], []>} : vector<32x288xbf16>, vector<288x256xbf16>, vector<32x256xf32> -> vector<32x256xf32>
    %c0_128 = arith.constant 0 : index
    %c0_129 = arith.constant 0 : index
    %150 = vector.load %arg8[%c0_128, %c0_129] : memref<32x1xf32, #tpu.memory_space<vmem>>, vector<32x1xf32>
    %151 = vector.broadcast %150 : vector<32x1xf32> to vector<32x256xf32>
    %152 = arith.addf %149, %151 : vector<32x256xf32>
    %cst_130 = arith.constant 0.000000e+00 : f32
    %153 = vector.broadcast %cst_130 : f32 to vector<32x256xf32>
    %154 = arith.maximumf %152, %153 : vector<32x256xf32>
    %c0_131 = arith.constant 0 : index
    %c128_132 = arith.constant 128 : index
    %155 = vector.load %arg12[%c0_131, %c128_132] : memref<32x512xf32, #tpu.memory_space<vmem>>, vector<32x256xf32>
    tpu.vector_store %arg12[%c0_131, %c128_132], %154 {strides = array<i32>} : memref<32x512xf32, #tpu.memory_space<vmem>>, vector<32x256xf32>,
    %c0_133 = arith.constant 0 : index
    %c111_134 = arith.constant 111 : index
    %156 = vector.load %arg12[%c0_133, %c111_134] : memref<32x512xf32, #tpu.memory_space<vmem>>, vector<32x256xf32>
    %157 = vector.broadcast %23 : vector<1x256xf32> to vector<32x256xf32>
    %158 = arith.mulf %156, %157 : vector<32x256xf32>
    %c0_135 = arith.constant 0 : index
    %c0_136 = arith.constant 0 : index
    %159 = vector.load %arg13[%c0_135, %c0_136] : memref<288x256xf32, #tpu.memory_space<vmem>>, vector<32x256xf32>
    tpu.vector_store %arg13[%c0_135, %c0_136], %158 {strides = array<i32>} : memref<288x256xf32, #tpu.memory_space<vmem>>, vector<32x256xf32>,
    %c0_137 = arith.constant 0 : index
    %c112_138 = arith.constant 112 : index
    %160 = vector.load %arg12[%c0_137, %c112_138] : memref<32x512xf32, #tpu.memory_space<vmem>>, vector<32x256xf32>
    %c32_139 = arith.constant 32 : index
    %c0_140 = arith.constant 0 : index
    %161 = vector.load %arg13[%c32_139, %c0_140] : memref<288x256xf32, #tpu.memory_space<vmem>>, vector<32x256xf32>
    tpu.vector_store %arg13[%c32_139, %c0_140], %160 {strides = array<i32>} : memref<288x256xf32, #tpu.memory_space<vmem>>, vector<32x256xf32>,
    %c0_141 = arith.constant 0 : index
    %c113_142 = arith.constant 113 : index
    %162 = vector.load %arg12[%c0_141, %c113_142] : memref<32x512xf32, #tpu.memory_space<vmem>>, vector<32x256xf32>
    %163 = vector.broadcast %28 : vector<1x256xf32> to vector<32x256xf32>
    %164 = arith.mulf %162, %163 : vector<32x256xf32>
    %c64_143 = arith.constant 64 : index
    %c0_144 = arith.constant 0 : index
    %165 = vector.load %arg13[%c64_143, %c0_144] : memref<288x256xf32, #tpu.memory_space<vmem>>, vector<32x256xf32>
    tpu.vector_store %arg13[%c64_143, %c0_144], %164 {strides = array<i32>} : memref<288x256xf32, #tpu.memory_space<vmem>>, vector<32x256xf32>,
    %c0_145 = arith.constant 0 : index
    %c127_146 = arith.constant 127 : index
    %166 = vector.load %arg12[%c0_145, %c127_146] : memref<32x512xf32, #tpu.memory_space<vmem>>, vector<32x256xf32>
    %167 = vector.broadcast %23 : vector<1x256xf32> to vector<32x256xf32>
    %168 = arith.mulf %166, %167 : vector<32x256xf32>
    %c96_147 = arith.constant 96 : index
    %c0_148 = arith.constant 0 : index
    %169 = vector.load %arg13[%c96_147, %c0_148] : memref<288x256xf32, #tpu.memory_space<vmem>>, vector<32x256xf32>
    tpu.vector_store %arg13[%c96_147, %c0_148], %168 {strides = array<i32>} : memref<288x256xf32, #tpu.memory_space<vmem>>, vector<32x256xf32>,
    %c0_149 = arith.constant 0 : index
    %c128_150 = arith.constant 128 : index
    %170 = vector.load %arg12[%c0_149, %c128_150] : memref<32x512xf32, #tpu.memory_space<vmem>>, vector<32x256xf32>
    %c128_151 = arith.constant 128 : index
    %c0_152 = arith.constant 0 : index
    %171 = vector.load %arg13[%c128_151, %c0_152] : memref<288x256xf32, #tpu.memory_space<vmem>>, vector<32x256xf32>
    tpu.vector_store %arg13[%c128_151, %c0_152], %170 {strides = array<i32>} : memref<288x256xf32, #tpu.memory_space<vmem>>, vector<32x256xf32>,
    %c0_153 = arith.constant 0 : index
    %c129_154 = arith.constant 129 : index
    %172 = vector.load %arg12[%c0_153, %c129_154] : memref<32x512xf32, #tpu.memory_space<vmem>>, vector<32x256xf32>
    %173 = vector.broadcast %28 : vector<1x256xf32> to vector<32x256xf32>
    %174 = arith.mulf %172, %173 : vector<32x256xf32>
    %c160_155 = arith.constant 160 : index
    %c0_156 = arith.constant 0 : index
    %175 = vector.load %arg13[%c160_155, %c0_156] : memref<288x256xf32, #tpu.memory_space<vmem>>, vector<32x256xf32>
    tpu.vector_store %arg13[%c160_155, %c0_156], %174 {strides = array<i32>} : memref<288x256xf32, #tpu.memory_space<vmem>>, vector<32x256xf32>,
    %c0_157 = arith.constant 0 : index
    %c143_158 = arith.constant 143 : index
    %176 = vector.load %arg12[%c0_157, %c143_158] : memref<32x512xf32, #tpu.memory_space<vmem>>, vector<32x256xf32>
    %177 = vector.broadcast %23 : vector<1x256xf32> to vector<32x256xf32>
    %178 = arith.mulf %176, %177 : vector<32x256xf32>
    %c192_159 = arith.constant 192 : index
    %c0_160 = arith.constant 0 : index
    %179 = vector.load %arg13[%c192_159, %c0_160] : memref<288x256xf32, #tpu.memory_space<vmem>>, vector<32x256xf32>
    tpu.vector_store %arg13[%c192_159, %c0_160], %178 {strides = array<i32>} : memref<288x256xf32, #tpu.memory_space<vmem>>, vector<32x256xf32>,
    %c0_161 = arith.constant 0 : index
    %c144_162 = arith.constant 144 : index
    %180 = vector.load %arg12[%c0_161, %c144_162] : memref<32x512xf32, #tpu.memory_space<vmem>>, vector<32x256xf32>
    %c224_163 = arith.constant 224 : index
    %c0_164 = arith.constant 0 : index
    %181 = vector.load %arg13[%c224_163, %c0_164] : memref<288x256xf32, #tpu.memory_space<vmem>>, vector<32x256xf32>
    tpu.vector_store %arg13[%c224_163, %c0_164], %180 {strides = array<i32>} : memref<288x256xf32, #tpu.memory_space<vmem>>, vector<32x256xf32>,
    %c0_165 = arith.constant 0 : index
    %c145_166 = arith.constant 145 : index
    %182 = vector.load %arg12[%c0_165, %c145_166] : memref<32x512xf32, #tpu.memory_space<vmem>>, vector<32x256xf32>
    %183 = vector.broadcast %28 : vector<1x256xf32> to vector<32x256xf32>
    %184 = arith.mulf %182, %183 : vector<32x256xf32>
    %c256_167 = arith.constant 256 : index
    %c0_168 = arith.constant 0 : index
    %185 = vector.load %arg13[%c256_167, %c0_168] : memref<288x256xf32, #tpu.memory_space<vmem>>, vector<32x256xf32>
    tpu.vector_store %arg13[%c256_167, %c0_168], %184 {strides = array<i32>} : memref<288x256xf32, #tpu.memory_space<vmem>>, vector<32x256xf32>,
    %c0_169 = arith.constant 0 : index
    %c0_170 = arith.constant 0 : index
    %186 = vector.load %arg9[%c0_169, %c0_170] : memref<1x288xbf16, #tpu.memory_space<vmem>>, vector<1x288xbf16>
    %c0_171 = arith.constant 0 : index
    %c0_172 = arith.constant 0 : index
    %187 = vector.load %arg13[%c0_171, %c0_172] : memref<288x256xf32, #tpu.memory_space<vmem>>, vector<288x256xf32>
    %188 = arith.truncf %187 : vector<288x256xf32> to vector<288x256xbf16>
    %cst_173 = arith.constant dense<0.000000e+00> : vector<1x256xf32>
    %189 = tpu.matmul %186, %188, %cst_173 {dimension_numbers = #tpu.dot_dimension_numbers<[1], [0], [0], [1], [0, 0, 1, 1], [], []>} : vector<1x288xbf16>, vector<288x256xbf16>, vector<1x256xf32> -> vector<1x256xf32>
    %c0_174 = arith.constant 0 : index
    %c0_175 = arith.constant 0 : index
    %190 = vector.load %arg10[%c0_174, %c0_175] : memref<1x1xf32, #tpu.memory_space<vmem>>, vector<1x1xf32>
    %191 = vector.broadcast %190 : vector<1x1xf32> to vector<1x256xf32>
    %192 = arith.addf %189, %191 : vector<1x256xf32>
    %cst_176 = arith.constant 0.000000e+00 : f32
    %193 = vector.broadcast %cst_176 : f32 to vector<1x256xf32>
    %194 = arith.maximumf %192, %193 : vector<1x256xf32>
    %c0_177 = arith.constant 0 : index
    %c0_178 = arith.constant 0 : index
    %c0_179 = arith.constant 0 : index
    %195 = vector.load %arg2[%c0_177, %c0_178, %c0_179] : memref<1x1x256xf32, #tpu.memory_space<vmem>>, vector<1x1x256xf32>
    %196 = vector.shape_cast %195 : vector<1x1x256xf32> to vector<1x256xf32>
    %197 = arith.addf %196, %194 : vector<1x256xf32>
    %c0_180 = arith.constant 0 : index
    %c0_181 = arith.constant 0 : index
    %c0_182 = arith.constant 0 : index
    %198 = vector.load %arg11[%c0_180, %c0_181, %c0_182] : memref<1x1x256xf32, #tpu.memory_space<vmem>>, vector<1x1x256xf32>
    %199 = vector.shape_cast %198 : vector<1x1x256xf32> to vector<1x256xf32>
    %200 = vector.shape_cast %197 : vector<1x256xf32> to vector<1x1x256xf32>
    tpu.vector_store %arg11[%c0_180, %c0_181, %c0_182], %200 {strides = array<i32>} : memref<1x1x256xf32, #tpu.memory_space<vmem>>, vector<1x1x256xf32>,
    return
  }
  func.func @transform_0(%arg0: i32) -> (i32, i32, i32) {
    %c0_i32 = arith.constant 0 : i32
    %c0_i32_0 = arith.constant 0 : i32
    %c0_i32_1 = arith.constant 0 : i32
    return %arg0, %c0_i32, %c0_i32_0 : i32, i32, i32
  }
  func.func @transform_1(%arg0: i32) -> (i32, i32, i32) {
    %c0_i32 = arith.constant 0 : i32
    %c0_i32_0 = arith.constant 0 : i32
    %c0_i32_1 = arith.constant 0 : i32
    return %arg0, %c0_i32, %c0_i32_0 : i32, i32, i32
  }
  func.func @transform_2(%arg0: i32) -> (i32, i32) {
    %c0_i32 = arith.constant 0 : i32
    %c0_i32_0 = arith.constant 0 : i32
    %c0_i32_1 = arith.constant 0 : i32
    return %c0_i32, %c0_i32_0 : i32, i32
  }
  func.func @transform_3(%arg0: i32) -> (i32, i32) {
    %c0_i32 = arith.constant 0 : i32
    %c0_i32_0 = arith.constant 0 : i32
    %c0_i32_1 = arith.constant 0 : i32
    return %c0_i32, %c0_i32_0 : i32, i32
  }
  func.func @transform_4(%arg0: i32) -> (i32, i32) {
    %c0_i32 = arith.constant 0 : i32
    %c0_i32_0 = arith.constant 0 : i32
    %c0_i32_1 = arith.constant 0 : i32
    return %c0_i32, %c0_i32_0 : i32, i32
  }
  func.func @transform_5(%arg0: i32) -> (i32, i32) {
    %c0_i32 = arith.constant 0 : i32
    %c0_i32_0 = arith.constant 0 : i32
    %c0_i32_1 = arith.constant 0 : i32
    return %c0_i32, %c0_i32_0 : i32, i32
  }
  func.func @transform_6(%arg0: i32) -> (i32, i32) {
    %c0_i32 = arith.constant 0 : i32
    %c0_i32_0 = arith.constant 0 : i32
    %c0_i32_1 = arith.constant 0 : i32
    return %c0_i32, %c0_i32_0 : i32, i32
  }
  func.func @transform_7(%arg0: i32) -> (i32, i32) {
    %c0_i32 = arith.constant 0 : i32
    %c0_i32_0 = arith.constant 0 : i32
    %c0_i32_1 = arith.constant 0 : i32
    return %c0_i32, %c0_i32_0 : i32, i32
  }
  func.func @transform_8(%arg0: i32) -> (i32, i32) {
    %c0_i32 = arith.constant 0 : i32
    %c0_i32_0 = arith.constant 0 : i32
    %c0_i32_1 = arith.constant 0 : i32
    return %c0_i32, %c0_i32_0 : i32, i32
  }
  func.func @transform_9(%arg0: i32) -> (i32, i32) {
    %c0_i32 = arith.constant 0 : i32
    %c0_i32_0 = arith.constant 0 : i32
    %c0_i32_1 = arith.constant 0 : i32
    return %c0_i32, %c0_i32_0 : i32, i32
  }
  func.func @transform_10(%arg0: i32) -> (i32, i32, i32) {
    %c0_i32 = arith.constant 0 : i32
    %c0_i32_0 = arith.constant 0 : i32
    %c0_i32_1 = arith.constant 0 : i32
    return %arg0, %c0_i32, %c0_i32_0 : i32, i32, i32
  }
}

</mosaic_0001>

<llo_original>
// kernel: refine_net_forward.1
$region0: #{refine_net_forward.1}
  #allocation0 [shape = 'u32[]', space=smem, size = 0x4, offset = 0x4, fixed_abs, tag = 'smem constant byte address 0x4 - core index']
  #allocation1 [shape = 'u32[72,128]{1,0:T(1,128)}', space=vmem, size = 0x9000, scoped, tag = 'internal scratch']
  #allocation2 [shape = 'f32[32,512]{1,0:T(8,128)}', space=vmem, size = 0x10000, scoped, tag = 'scratch operand']
  #allocation3 [shape = 'f32[288,256]{1,0:T(8,128)}', space=vmem, size = 0x48000, scoped, tag = 'scratch operand']
  #allocation4 [shape = 'f32[1,1]{1,0:T(1,128)S(1)}', space=vmem, size = 0x200, scoped, tag = 'scoped memory for refine_net_forward.1']
  %s0 = inlined_call_operand.vmem [shape: bf16[2,3,256], index: 0, kind: input, shape index: {}]
  %s1 = inlined_call_operand.vmem [shape: f32[2,1,256], index: 1, kind: input, shape index: {}]
  %s2 = inlined_call_operand.vmem [shape: bf16[32,36], index: 2, kind: input, shape index: {}]
  %s3 = inlined_call_operand.vmem [shape: f32[32,1], index: 3, kind: input, shape index: {}]
  %s4 = inlined_call_operand.vmem [shape: bf16[32,288], index: 4, kind: input, shape index: {}]
  %s5 = inlined_call_operand.vmem [shape: f32[32,1], index: 5, kind: input, shape index: {}]
  %s6 = inlined_call_operand.vmem [shape: bf16[32,288], index: 6, kind: input, shape index: {}]
  %s7 = inlined_call_operand.vmem [shape: f32[32,1], index: 7, kind: input, shape index: {}]
  %s8 = inlined_call_operand.vmem [shape: bf16[1,288], index: 8, kind: input, shape index: {}]
  %s9 = inlined_call_operand.<no memory space> [shape: f32[1,1], index: 9, kind: input, shape index: {}]
  %s10 = inlined_call_operand.vmem [shape: f32[2,1,256], index: 10, kind: output, shape index: {}]
  %s11 = sld [smem:[#allocation0]]
  $region73: #{refine_net_forward.1} parent=0
    _
  %s13 = ssub.s32 1, %s11
  %s14 = scalar_select 0, %s13, %s11
  %v15 = vstv %s9
  %16 = vst [vmem:[#allocation4] sm:$0x1] %v15
  loop: start=0, step=1, limit=4
  $region2: #{refine_net_forward.1} parent=0 // loop_pre_header
    _
  $region3: #{refine_net_forward.1} parent=0 // loop_header
    %s18 = sphi 0, %s22
    %p19 = scmp.ge.s32.totalorder %s18, 4
    %s28 = sphi 0, %s30
    %s31 = sphi 0, %s28
    %s32 = sphi 0, %s31
    %s48 = sphi 0, %s32
    %s54 = sphi 0, %s56
    %s57 = sphi 0, %s54
    %s58 = sphi 0, %s57
    %s74 = sphi 0, %s58
    %s78 = sphi 0, %s78
    %s80 = sphi 0, %s78
    %s81 = sphi 0, %s80
    %s95 = sphi 0, %s81
    %s99 = sphi 0, %s99
    %s101 = sphi 0, %s99
    %s102 = sphi 0, %s101
    %s116 = sphi 0, %s102
    %s120 = sphi 0, %s120
    %s122 = sphi 0, %s120
    %s123 = sphi 0, %s122
    %s137 = sphi 0, %s123
    %s141 = sphi 0, %s141
    %s143 = sphi 0, %s141
    %s144 = sphi 0, %s143
    %s158 = sphi 0, %s144
    %s162 = sphi 0, %s162
    %s164 = sphi 0, %s162
    %s165 = sphi 0, %s164
    %s179 = sphi 0, %s165
    %s183 = sphi 0, %s183
    %s185 = sphi 0, %s183
    %s186 = sphi 0, %s185
    %s200 = sphi 0, %s186
    %s204 = sphi 0, %s204
    %s206 = sphi 0, %s204
    %s207 = sphi 0, %s206
    %s221 = sphi 0, %s207
    %s225 = sphi 0, %s225
    %s227 = sphi 0, %s225
    %s228 = sphi 0, %s227
    %s242 = sphi 0, %s228
    %s248 = sphi 0, %s250
    %s251 = sphi 0, %s248
    %s252 = sphi 0, %s251
    %s268 = sphi 0, %s252
  $region4: #{refine_net_forward.1} parent=0 // loop_header_branch
    %21 = sbr.rel (%p19) target = $region8
  $region5: #{refine_net_forward.1} parent=0 // loop_body
    %s23 = ssub.s32 %s18, 1
    %s24 = ssub.s32 %s18, 2
    %s25 = sadd.s32 %s18, 1
    %s26 = ssub.s32 %s18, %s25
    %p27 = scmp.eq.s32.totalorder %s26, 0
    %s29 = sadd.s32 %s28, 1
    %s30 = scalar_select %p27, %s28, %s29
    %p33 = pneg %p27
    %p34 = scmp.eq.s32.totalorder %s18, 1
    %p35 = por %p33, %p34
    %p36 = scmp.ne.s32.totalorder %s28, %s31
    %p37 = scmp.eq.s32.totalorder %s18, 0
    %p38 = por %p36, %p37
    %p39 = scmp.ne.s32.totalorder %s28, %s31
    %p40 = scmp.eq.s32.totalorder %s23, 1
    %p41 = por %p39, %p40
    %p42 = scmp.ne.s32.totalorder %s31, %s32
    %p43 = scmp.eq.s32.totalorder %s23, 0
    %p44 = por %p42, %p43
    %p45 = scmp.ne.s32.totalorder %s31, %s32
    %p46 = scmp.eq.s32.totalorder %s24, 1
    %p47 = por %p45, %p46
    %p49 = scmp.ne.s32.totalorder %s32, %s48
    %p50 = scmp.eq.s32.totalorder %s24, 0
    %p51 = por %p49, %p50
    %s52 = ssub.s32 %s18, %s25
    %p53 = scmp.eq.s32.totalorder %s52, 0
    %s55 = sadd.s32 %s54, 1
    %s56 = scalar_select %p53, %s54, %s55
    %p59 = pneg %p53
    %p60 = scmp.eq.s32.totalorder %s18, 1
    %p61 = por %p59, %p60
    %p62 = scmp.ne.s32.totalorder %s54, %s57
    %p63 = scmp.eq.s32.totalorder %s18, 0
    %p64 = por %p62, %p63
    %p65 = scmp.ne.s32.totalorder %s54, %s57
    %p66 = scmp.eq.s32.totalorder %s23, 1
    %p67 = por %p65, %p66
    %p68 = scmp.ne.s32.totalorder %s57, %s58
    %p69 = scmp.eq.s32.totalorder %s23, 0
    %p70 = por %p68, %p69
    %p71 = scmp.ne.s32.totalorder %s57, %s58
    %p72 = scmp.eq.s32.totalorder %s24, 1
    %p73 = por %p71, %p72
    %p75 = scmp.ne.s32.totalorder %s58, %s74
    %p76 = scmp.eq.s32.totalorder %s24, 0
    %p77 = por %p75, %p76
    %s79 = sadd.s32 %s78, 1
    %p82 = scmp.eq.s32.totalorder %s18, 1
    %p83 = scmp.ne.s32.totalorder %s78, %s80
    %p84 = scmp.eq.s32.totalorder %s18, 0
    %p85 = por %p83, %p84
    %p86 = scmp.ne.s32.totalorder %s78, %s80
    %p87 = scmp.eq.s32.totalorder %s23, 1
    %p88 = por %p86, %p87
    %p89 = scmp.ne.s32.totalorder %s80, %s81
    %p90 = scmp.eq.s32.totalorder %s23, 0
    %p91 = por %p89, %p90
    %p92 = scmp.ne.s32.totalorder %s80, %s81
    %p93 = scmp.eq.s32.totalorder %s24, 1
    %p94 = por %p92, %p93
    %p96 = scmp.ne.s32.totalorder %s81, %s95
    %p97 = scmp.eq.s32.totalorder %s24, 0
    %p98 = por %p96, %p97
    %s100 = sadd.s32 %s99, 1
    %p103 = scmp.eq.s32.totalorder %s18, 1
    %p104 = scmp.ne.s32.totalorder %s99, %s101
    %p105 = scmp.eq.s32.totalorder %s18, 0
    %p106 = por %p104, %p105
    %p107 = scmp.ne.s32.totalorder %s99, %s101
    %p108 = scmp.eq.s32.totalorder %s23, 1
    %p109 = por %p107, %p108
    %p110 = scmp.ne.s32.totalorder %s101, %s102
    %p111 = scmp.eq.s32.totalorder %s23, 0
    %p112 = por %p110, %p111
    %p113 = scmp.ne.s32.totalorder %s101, %s102
    %p114 = scmp.eq.s32.totalorder %s24, 1
    %p115 = por %p113, %p114
    %p117 = scmp.ne.s32.totalorder %s102, %s116
    %p118 = scmp.eq.s32.totalorder %s24, 0
    %p119 = por %p117, %p118
    %s121 = sadd.s32 %s120, 1
    %p124 = scmp.eq.s32.totalorder %s18, 1
    %p125 = scmp.ne.s32.totalorder %s120, %s122
    %p126 = scmp.eq.s32.totalorder %s18, 0
    %p127 = por %p125, %p126
    %p128 = scmp.ne.s32.totalorder %s120, %s122
    %p129 = scmp.eq.s32.totalorder %s23, 1
    %p130 = por %p128, %p129
    %p131 = scmp.ne.s32.totalorder %s122, %s123
    %p132 = scmp.eq.s32.totalorder %s23, 0
    %p133 = por %p131, %p132
    %p134 = scmp.ne.s32.totalorder %s122, %s123
    %p135 = scmp.eq.s32.totalorder %s24, 1
    %p136 = por %p134, %p135
    %p138 = scmp.ne.s32.totalorder %s123, %s137
    %p139 = scmp.eq.s32.totalorder %s24, 0
    %p140 = por %p138, %p139
    %s142 = sadd.s32 %s141, 1
    %p145 = scmp.eq.s32.totalorder %s18, 1
    %p146 = scmp.ne.s32.totalorder %s141, %s143
    %p147 = scmp.eq.s32.totalorder %s18, 0
    %p148 = por %p146, %p147
    %p149 = scmp.ne.s32.totalorder %s141, %s143
    %p150 = scmp.eq.s32.totalorder %s23, 1
    %p151 = por %p149, %p150
    %p152 = scmp.ne.s32.totalorder %s143, %s144
    %p153 = scmp.eq.s32.totalorder %s23, 0
    %p154 = por %p152, %p153
    %p155 = scmp.ne.s32.totalorder %s143, %s144
    %p156 = scmp.eq.s32.totalorder %s24, 1
    %p157 = por %p155, %p156
    %p159 = scmp.ne.s32.totalorder %s144, %s158
    %p160 = scmp.eq.s32.totalorder %s24, 0
    %p161 = por %p159, %p160
    %s163 = sadd.s32 %s162, 1
    %p166 = scmp.eq.s32.totalorder %s18, 1
    %p167 = scmp.ne.s32.totalorder %s162, %s164
    %p168 = scmp.eq.s32.totalorder %s18, 0
    %p169 = por %p167, %p168
    %p170 = scmp.ne.s32.totalorder %s162, %s164
    %p171 = scmp.eq.s32.totalorder %s23, 1
    %p172 = por %p170, %p171
    %p173 = scmp.ne.s32.totalorder %s164, %s165
    %p174 = scmp.eq.s32.totalorder %s23, 0
    %p175 = por %p173, %p174
    %p176 = scmp.ne.s32.totalorder %s164, %s165
    %p177 = scmp.eq.s32.totalorder %s24, 1
    %p178 = por %p176, %p177
    %p180 = scmp.ne.s32.totalorder %s165, %s179
    %p181 = scmp.eq.s32.totalorder %s24, 0
    %p182 = por %p180, %p181
    %s184 = sadd.s32 %s183, 1
    %p187 = scmp.eq.s32.totalorder %s18, 1
    %p188 = scmp.ne.s32.totalorder %s183, %s185
    %p189 = scmp.eq.s32.totalorder %s18, 0
    %p190 = por %p188, %p189
    %p191 = scmp.ne.s32.totalorder %s183, %s185
    %p192 = scmp.eq.s32.totalorder %s23, 1
    %p193 = por %p191, %p192
    %p194 = scmp.ne.s32.totalorder %s185, %s186
    %p195 = scmp.eq.s32.totalorder %s23, 0
    %p196 = por %p194, %p195
    %p197 = scmp.ne.s32.totalorder %s185, %s186
    %p198 = scmp.eq.s32.totalorder %s24, 1
    %p199 = por %p197, %p198
    %p201 = scmp.ne.s32.totalorder %s186, %s200
    %p202 = scmp.eq.s32.totalorder %s24, 0
    %p203 = por %p201, %p202
    %s205 = sadd.s32 %s204, 1
    %p208 = scmp.eq.s32.totalorder %s18, 1
    %p209 = scmp.ne.s32.totalorder %s204, %s206
    %p210 = scmp.eq.s32.totalorder %s18, 0
    %p211 = por %p209, %p210
    %p212 = scmp.ne.s32.totalorder %s204, %s206
    %p213 = scmp.eq.s32.totalorder %s23, 1
    %p214 = por %p212, %p213
    %p215 = scmp.ne.s32.totalorder %s206, %s207
    %p216 = scmp.eq.s32.totalorder %s23, 0
    %p217 = por %p215, %p216
    %p218 = scmp.ne.s32.totalorder %s206, %s207
    %p219 = scmp.eq.s32.totalorder %s24, 1
    %p220 = por %p218, %p219
    %p222 = scmp.ne.s32.totalorder %s207, %s221
    %p223 = scmp.eq.s32.totalorder %s24, 0
    %p224 = por %p222, %p223
    %s226 = sadd.s32 %s225, 1
    %p229 = scmp.eq.s32.totalorder %s18, 1
    %p230 = scmp.ne.s32.totalorder %s225, %s227
    %p231 = scmp.eq.s32.totalorder %s18, 0
    %p232 = por %p230, %p231
    %p233 = scmp.ne.s32.totalorder %s225, %s227
    %p234 = scmp.eq.s32.totalorder %s23, 1
    %p235 = por %p233, %p234
    %p236 = scmp.ne.s32.totalorder %s227, %s228
    %p237 = scmp.eq.s32.totalorder %s23, 0
    %p238 = por %p236, %p237
    %p239 = scmp.ne.s32.totalorder %s227, %s228
    %p240 = scmp.eq.s32.totalorder %s24, 1
    %p241 = por %p239, %p240
    %p243 = scmp.ne.s32.totalorder %s228, %s242
    %p244 = scmp.eq.s32.totalorder %s24, 0
    %p245 = por %p243, %p244
    %s246 = ssub.s32 %s18, %s25
    %p247 = scmp.eq.s32.totalorder %s246, 0
    %s249 = sadd.s32 %s248, 1
    %s250 = scalar_select %p247, %s248, %s249
    %p253 = pneg %p247
    %p254 = scmp.eq.s32.totalorder %s18, 1
    %p255 = por %p253, %p254
    %p256 = scmp.ne.s32.totalorder %s248, %s251
    %p257 = scmp.eq.s32.totalorder %s18, 0
    %p258 = por %p256, %p257
    %p259 = scmp.ne.s32.totalorder %s248, %s251
    %p260 = scmp.eq.s32.totalorder %s23, 1
    %p261 = por %p259, %p260
    %p262 = scmp.ne.s32.totalorder %s251, %s252
    %p263 = scmp.eq.s32.totalorder %s23, 0
    %p264 = por %p262, %p263
    %p265 = scmp.ne.s32.totalorder %s251, %s252
    %p266 = scmp.eq.s32.totalorder %s24, 1
    %p267 = por %p265, %p266
    %p269 = scmp.ne.s32.totalorder %s252, %s268
    %p270 = scmp.eq.s32.totalorder %s24, 0
    %p271 = por %p269, %p270
    %p272 = scmp.le.s32.totalorder 1, %s18
    %p273 = scmp.lt.s32.totalorder %s18, 3
    %p274 = pnand %p272, %p273
    %p275 = pneg %p274
    // Predicated region
    $region9: #{refine_net_forward.1} parent=5 // pred_check
      _
    $region10: #{refine_net_forward.1} parent=5 // pred_check_branch
      %277 = sbr.rel (%p274) target = $region12
    $region11: #{refine_net_forward.1} parent=5 // pred_region
      %s278 = ssub.s32 %s18, 1
      // Predicated region
      $region13: #{refine_net_forward.1} parent=11 // pred_check
        %p279 = pneg %p91
      $region14: #{refine_net_forward.1} parent=11 // pred_check_branch
        %281 = sbr.rel (%p279) target = $region16
      $region15: #{refine_net_forward.1} parent=11 // pred_region
        _
      $region16: #{refine_net_forward.1} parent=11 // pred_fallthru
        _
      // Predicated region
      $region17: #{refine_net_forward.1} parent=11 // pred_check
        %p282 = pneg %p112
      $region18: #{refine_net_forward.1} parent=11 // pred_check_branch
        %284 = sbr.rel (%p282) target = $region20
      $region19: #{refine_net_forward.1} parent=11 // pred_region
        _
      $region20: #{refine_net_forward.1} parent=11 // pred_fallthru
        _
      // Predicated region
      $region21: #{refine_net_forward.1} parent=11 // pred_check
        %p285 = pneg %p133
      $region22: #{refine_net_forward.1} parent=11 // pred_check_branch
        %287 = sbr.rel (%p285) target = $region24
      $region23: #{refine_net_forward.1} parent=11 // pred_region
        _
      $region24: #{refine_net_forward.1} parent=11 // pred_fallthru
        _
      // Predicated region
      $region25: #{refine_net_forward.1} parent=11 // pred_check
        %p288 = pneg %p154
      $region26: #{refine_net_forward.1} parent=11 // pred_check_branch
        %290 = sbr.rel (%p288) target = $region28
      $region27: #{refine_net_forward.1} parent=11 // pred_region
        _
      $region28: #{refine_net_forward.1} parent=11 // pred_fallthru
        _
      // Predicated region
      $region29: #{refine_net_forward.1} parent=11 // pred_check
        %p291 = pneg %p175
      $region30: #{refine_net_forward.1} parent=11 // pred_check_branch
        %293 = sbr.rel (%p291) target = $region32
      $region31: #{refine_net_forward.1} parent=11 // pred_region
        _
      $region32: #{refine_net_forward.1} parent=11 // pred_fallthru
        _
      // Predicated region
      $region33: #{refine_net_forward.1} parent=11 // pred_check
        %p294 = pneg %p196
      $region34: #{refine_net_forward.1} parent=11 // pred_check_branch
        %296 = sbr.rel (%p294) target = $region36
      $region35: #{refine_net_forward.1} parent=11 // pred_region
        _
      $region36: #{refine_net_forward.1} parent=11 // pred_fallthru
        _
      // Predicated region
      $region37: #{refine_net_forward.1} parent=11 // pred_check
        %p297 = pneg %p217
      $region38: #{refine_net_forward.1} parent=11 // pred_check_branch
        %299 = sbr.rel (%p297) target = $region40
      $region39: #{refine_net_forward.1} parent=11 // pred_region
        _
      $region40: #{refine_net_forward.1} parent=11 // pred_fallthru
        _
      // Predicated region
      $region41: #{refine_net_forward.1} parent=11 // pred_check
        %p300 = pneg %p238
      $region42: #{refine_net_forward.1} parent=11 // pred_check_branch
        %302 = sbr.rel (%p300) target = $region44
      $region43: #{refine_net_forward.1} parent=11 // pred_region
        _
      $region44: #{refine_net_forward.1} parent=11 // pred_fallthru
        _
    $region12: #{refine_net_forward.1} parent=5 // pred_fallthru
      _
    %p303 = scmp.lt.s32.totalorder %s18, 2
    // Predicated region
    $region45: #{refine_net_forward.1} parent=5 // pred_check
      %p304 = pneg %p303
    $region46: #{refine_net_forward.1} parent=5 // pred_check_branch
      %306 = sbr.rel (%p304) target = $region48
    $region47: #{refine_net_forward.1} parent=5 // pred_region
      // Predicated region
      $region49: #{refine_net_forward.1} parent=47 // pred_check
        %p307 = pneg %p38
      $region50: #{refine_net_forward.1} parent=47 // pred_check_branch
        %309 = sbr.rel (%p307) target = $region52
      $region51: #{refine_net_forward.1} parent=47 // pred_region
        %p310 = scmp.lt.s32.totalorder %s18, 1
        %s311 = scalar_select %p310, %s18, 1
        %s312 = smul.addr %s311, 2
        %s313 = smul.addr %s312, 2
        %s314 = scalar_lea.vmem %s0, %s313
      $region52: #{refine_net_forward.1} parent=47 // pred_fallthru
        _
      // Predicated region
      $region53: #{refine_net_forward.1} parent=47 // pred_check
        %p315 = pneg %p64
      $region54: #{refine_net_forward.1} parent=47 // pred_check_branch
        %317 = sbr.rel (%p315) target = $region56
      $region55: #{refine_net_forward.1} parent=47 // pred_region
        %p318 = scmp.lt.s32.totalorder %s18, 1
        %s319 = scalar_select %p318, %s18, 1
        %s320 = smul.addr %s319, 2
        %s321 = scalar_lea.vmem %s1, %s320
      $region56: #{refine_net_forward.1} parent=47 // pred_fallthru
        _
    $region48: #{refine_net_forward.1} parent=5 // pred_fallthru
      _
    %p322 = scmp.le.s32.totalorder 1, %s18
    %p323 = scmp.lt.s32.totalorder %s18, 3
    %p324 = pnand %p322, %p323
    %p325 = pneg %p324
    // Predicated region
    $region57: #{refine_net_forward.1} parent=5 // pred_check
      _
    $region58: #{refine_net_forward.1} parent=5 // pred_check_branch
      %327 = sbr.rel (%p324) target = $region60
    $region59: #{refine_net_forward.1} parent=5 // pred_region
      %s328 = ssub.s32 %s18, 1
      %p329 = scmp.lt.s32.totalorder %s23, 1
      %s330 = scalar_select %p329, %s23, 1
      %s331 = smul.addr %s330, 2
      %s332 = smul.addr %s331, 2
      %s333 = scalar_lea.vmem %s0, %s332
      %p334 = pneg %p44
      %p335 = pneg %p41
      %p336 = scmp.lt.s32.totalorder %s23, 1
      %s337 = scalar_select %p336, %s23, 1
      %s338 = smul.addr %s337, 2
      %s339 = scalar_lea.vmem %s1, %s338
      %p340 = pneg %p70
      %p341 = pneg %p67
      %p342 = pneg %p91
      %p343 = pneg %p88
      %p344 = pneg %p112
      %p345 = pneg %p109
      %p346 = pneg %p133
      %p347 = pneg %p130
      %p348 = pneg %p154
      %p349 = pneg %p151
      %p350 = pneg %p175
      %p351 = pneg %p172
      %p352 = pneg %p196
      %p353 = pneg %p193
      %p354 = pneg %p217
      %p355 = pneg %p214
      %p356 = pneg %p238
      %p357 = pneg %p235
      %p358 = pneg %p264
      %p359 = pneg %p261
      %p360 = scmp.lt.s32.totalorder %s23, 1
      %s361 = scalar_select %p360, %s23, 1
      %s362 = smul.addr %s361, 2
      %s363 = scalar_lea.vmem %s10, %s362
      %p364 = scmp.lt.s32.totalorder %s23, 1
      %s365 = scalar_select %p364, %s23, 1
      %s366 = smul.addr %s365, 2
      %s367 = smul.addr %s366, 2
      %s368 = scalar_lea.vmem %s0, %s367
      %p369 = scmp.lt.s32.totalorder %s23, 1
      %s370 = scalar_select %p369, %s23, 1
      %s371 = smul.addr %s370, 2
      %s372 = scalar_lea.vmem %s1, %s371
      %p373 = scmp.lt.s32.totalorder %s23, 1
      %s374 = scalar_select %p373, %s23, 1
      %s375 = smul.addr %s374, 2
      %s376 = scalar_lea.vmem %s10, %s375
      %378 = vst [vmem:[#allocation2] sm:$0xff] 0.0
      %379 = vst [vmem:[#allocation2 + $0x8] sm:$0xff] 0.0
      %380 = vst [vmem:[#allocation2 + $0x10] sm:$0xff] 0.0
      %381 = vst [vmem:[#allocation2 + $0x18] sm:$0xff] 0.0
      %382 = vst [vmem:[#allocation2 + $0x20] sm:$0xff] 0.0
      %383 = vst [vmem:[#allocation2 + $0x28] sm:$0xff] 0.0
      %384 = vst [vmem:[#allocation2 + $0x30] sm:$0xff] 0.0
      %385 = vst [vmem:[#allocation2 + $0x38] sm:$0xff] 0.0
      %386 = vst [vmem:[#allocation2 + $0x40] sm:$0xff] 0.0
      %387 = vst [vmem:[#allocation2 + $0x48] sm:$0xff] 0.0
      %388 = vst [vmem:[#allocation2 + $0x50] sm:$0xff] 0.0
      %389 = vst [vmem:[#allocation2 + $0x58] sm:$0xff] 0.0
      %390 = vst [vmem:[#allocation2 + $0x60] sm:$0xff] 0.0
      %391 = vst [vmem:[#allocation2 + $0x68] sm:$0xff] 0.0
      %392 = vst [vmem:[#allocation2 + $0x70] sm:$0xff] 0.0
      %393 = vst [vmem:[#allocation2 + $0x78] sm:$0xff] 0.0
      %v394 = vlaneseq
      %v395 = vand.u32 %v394, 127
      %v396 = vadd.s32 %v395, 128
      %vm397 = vcmp.lt.s32.totalorder %v395, 0
      %v398 = vsub.s32 0, %v395
      %v399 = vsel %vm397, %v398, %v395
      %v400 = vshrl.u32 %v399, 4
      %v401 = vand.u32 %v399, 15
      %v402 = vsub.s32 0, %v401
      %v403 = vsel %vm397, %v402, %v401
      %vm404 = vcmp.lt.s32.totalorder %v396, 0
      %v405 = vsub.s32 0, %v396
      %v406 = vsel %vm404, %v405, %v396
      %v407 = vshrl.u32 %v406, 4
      %v408 = vand.u32 %v406, 15
      %v409 = vsub.s32 0, %v408
      %v410 = vsel %vm404, %v409, %v408
      %vm411 = vcmp.ne.s32.totalorder %v403, 0
      %vm412 = vcmp.ne.s32.totalorder %v410, 0
      %vm413 = vcmp.lt.s32.totalorder %v403, 0
      %vm414 = vcmp.lt.s32.totalorder %v410, 0
      %vm415 = vmand %vm413, %vm411
      %vm416 = vmand %vm414, %vm412
      %v417 = vadd.s32 %v403, 16
      %v418 = vadd.s32 %v410, 16
      %v419 = vsel %vm415, %v417, %v403
      %v420 = vsel %vm416, %v418, %v410
      %vm421 = vcmp.ge.s32.totalorder %v419, 1
      %vm422 = vcmp.ge.s32.totalorder %v420, 1
      %v423 = vsel %vm421, 1.0, 0.0
      %v424 = vsel %vm422, 1.0, 0.0
      %vm425 = vcmp.le.s32.totalorder %v419, 14
      %vm426 = vcmp.le.s32.totalorder %v420, 14
      %v427 = vsel %vm425, 1.0, 0.0
      %v428 = vsel %vm426, 1.0, 0.0
      %v429 = vld [vmem:[%s368] sm:$0xf]
      %v430 = vunpack.c.l.bf16 %v429
      %432 = vst [vmem:[#allocation1] ss:$2 sm:$0xff] %v430
      %v433 = vld.sshfl [vmem:[#allocation1] sm:$0xff pattern:$0x75316420]
      %v434 = vld.sshfl [vmem:[#allocation1 + $0x8] sm:$0xff pattern:$0x75316420]
      %437 = vst [vmem:[#allocation2 + $0x8] sm:$0x7] %v433
      %438 = vst [vmem:[#allocation2 + $0x10] sm:$0x7] %v434
      %v439 = vld [vmem:[%s372] sm:$0x3]
      %v440 = vlaneseq
      %vm441 = vcmp.ge.s32.totalorder %v440, 0
      %vm442 = vcmp.lt.s32.totalorder %v440, 256
      %vm443 = vmand %vm441, %vm442
      %s444 = scalar_lea.vmem [#allocation2], 11
      %445 = vst.msk [vmem:[%s444] ss:$8 sm:$0x3] %vm443, %v439
      %446 = vst.msk [vmem:[%s444] ss:$8 sm:$0x0] %vm443, %v439
      %v447 = vld [vmem:[#allocation2] sm:$0xf]
      %v448 = vld [vmem:[#allocation2 + $0x8] sm:$0xf]
      %v449 = vld [vmem:[#allocation2 + $0x10] sm:$0xf]
      %452 = vrot.lane.b32.xlu0 %v423, 111
      %v453 = vpop.permute.xlu0 %452
      %454 = vrot.lane.b32.xlu0 %v424, 111
      %v455 = vpop.permute.xlu0 %454
      %vm456 = vcmask 908288
      %v457 = vsel %vm456, %v453, %v455
      %v461 = vmul.f32 %v447, %v453
      %v462 = vmul.f32 %v448, %v457
      %v463 = vmul.f32 %v449, %v455
      %467 = vrot.lane.b32.xlu0 %v461, 17
      %v468 = vpop.permute.xlu0 %467
      %469 = vrot.lane.b32.xlu0 %v462, 17
      %v470 = vpop.permute.xlu0 %469
      %471 = vrot.lane.b32.xlu0 %v463, 17
      %v472 = vpop.permute.xlu0 %471
      %vm473 = vcmask 138240
      %v474 = vsel %vm473, %v468, %v470
      %v475 = vsel %vm473, %v470, %v472
      %478 = vst [vmem:[#allocation3] sm:$0xf] %v474
      %479 = vst [vmem:[#allocation3 + $0x8] sm:$0xf] %v475
      %v480 = vld [vmem:[#allocation2] sm:$0xf]
      %v481 = vld [vmem:[#allocation2 + $0x8] sm:$0xf]
      %v482 = vld [vmem:[#allocation2 + $0x10] sm:$0xf]
      %v486 = vrot.slane %v480, 4
      %v487 = vrot.slane %v481, 4
      %v488 = vrot.slane %v482, 4
      %489 = vrot.lane.b32.xlu0 %v486, 16
      %v490 = vpop.permute.xlu0 %489
      %491 = vrot.lane.b32.xlu0 %v487, 16
      %v492 = vpop.permute.xlu0 %491
      %493 = vrot.lane.b32.xlu0 %v488, 16
      %v494 = vpop.permute.xlu0 %493
      %vm495 = vcmask 130048
      %v496 = vsel %vm495, %v490, %v492
      %v497 = vsel %vm495, %v492, %v494
      %500 = vst [vmem:[#allocation3] sm:$0xf0] %v496
      %501 = vst [vmem:[#allocation3 + $0x8] sm:$0xf0] %v497
      %v502 = vld [vmem:[#allocation2] sm:$0xf]
      %v503 = vld [vmem:[#allocation2 + $0x8] sm:$0xf]
      %v504 = vld [vmem:[#allocation2 + $0x10] sm:$0xf]
      %507 = vrot.lane.b32.xlu0 %v427, 113
      %v508 = vpop.permute.xlu0 %507
      %509 = vrot.lane.b32.xlu0 %v428, 113
      %v510 = vpop.permute.xlu0 %509
      %vm511 = vcmask 924672
      %v512 = vsel %vm511, %v508, %v510
      %v516 = vmul.f32 %v502, %v508
      %v517 = vmul.f32 %v503, %v512
      %v518 = vmul.f32 %v504, %v510
      %522 = vrot.lane.b32.xlu0 %v516, 15
      %v523 = vpop.permute.xlu0 %522
      %524 = vrot.lane.b32.xlu0 %v517, 15
      %v525 = vpop.permute.xlu0 %524
      %526 = vrot.lane.b32.xlu0 %v518, 15
      %v527 = vpop.permute.xlu0 %526
      %vm528 = vcmask 121856
      %v529 = vsel %vm528, %v523, %v525
      %v530 = vsel %vm528, %v525, %v527
      %533 = vst [vmem:[#allocation3 + $0x10] sm:$0xf] %v529
      %534 = vst [vmem:[#allocation3 + $0x18] sm:$0xf] %v530
      %v535 = vld [vmem:[#allocation2] sm:$0xf]
      %v536 = vld [vmem:[#allocation2 + $0x8] sm:$0xf]
      %v537 = vld [vmem:[#allocation2 + $0x10] sm:$0xf]
      %538 = vrot.lane.b32.xlu0 %v423, 127
      %v539 = vpop.permute.xlu0 %538
      %540 = vrot.lane.b32.xlu0 %v424, 127
      %v541 = vpop.permute.xlu0 %540
      %vm542 = vcmask 1039360
      %v543 = vsel %vm542, %v539, %v541
      %v547 = vmul.f32 %v535, %v539
      %v548 = vmul.f32 %v536, %v543
      %v549 = vmul.f32 %v537, %v541
      %v553 = vrot.slane %v547, 4
      %v554 = vrot.slane %v548, 4
      %v555 = vrot.slane %v549, 4
      %556 = vrot.lane.b32.xlu0 %v553, 1
      %v557 = vpop.permute.xlu0 %556
      %558 = vrot.lane.b32.xlu0 %v554, 1
      %v559 = vpop.permute.xlu0 %558
      %560 = vrot.lane.b32.xlu0 %v555, 1
      %v561 = vpop.permute.xlu0 %560
      %vm562 = vcmask 7168
      %v563 = vsel %vm562, %v557, %v559
      %v564 = vsel %vm562, %v559, %v561
      %567 = vst [vmem:[#allocation3 + $0x10] sm:$0xf0] %v563
      %568 = vst [vmem:[#allocation3 + $0x18] sm:$0xf0] %v564
      %v569 = vld [vmem:[#allocation2 + $0x8] sm:$0xf]
      %v570 = vld [vmem:[#allocation2 + $0x10] sm:$0xf]
      %571 = vst [vmem:[#allocation3 + $0x20] sm:$0xf] %v569
      %572 = vst [vmem:[#allocation3 + $0x28] sm:$0xf] %v570
      %v573 = vld [vmem:[#allocation2 + $0x8] sm:$0xf]
      %v574 = vld [vmem:[#allocation2 + $0x10] sm:$0xf]
      %v575 = vld [vmem:[#allocation2 + $0x18] sm:$0xf]
      %576 = vrot.lane.b32.xlu0 %v427, 1
      %v577 = vpop.permute.xlu0 %576
      %578 = vrot.lane.b32.xlu0 %v428, 1
      %v579 = vpop.permute.xlu0 %578
      %v580 = vsel %vm562, %v577, %v579
      %v584 = vmul.f32 %v573, %v577
      %v585 = vmul.f32 %v574, %v580
      %v586 = vmul.f32 %v575, %v579
      %v590 = vrot.slane %v584, 4
      %v591 = vrot.slane %v585, 4
      %v592 = vrot.slane %v586, 4
      %593 = vrot.lane.b32.xlu0 %v590, 127
      %v594 = vpop.permute.xlu0 %593
      %595 = vrot.lane.b32.xlu0 %v591, 127
      %v596 = vpop.permute.xlu0 %595
      %597 = vrot.lane.b32.xlu0 %v592, 127
      %v598 = vpop.permute.xlu0 %597
      %v599 = vsel %vm542, %v594, %v596
      %v600 = vsel %vm542, %v596, %v598
      %603 = vst [vmem:[#allocation3 + $0x20] sm:$0xf0] %v599
      %604 = vst [vmem:[#allocation3 + $0x28] sm:$0xf0] %v600
      %v605 = vld [vmem:[#allocation2 + $0x8] sm:$0xf]
      %v606 = vld [vmem:[#allocation2 + $0x10] sm:$0xf]
      %v607 = vld [vmem:[#allocation2 + $0x18] sm:$0xf]
      %608 = vrot.lane.b32.xlu0 %v423, 15
      %v609 = vpop.permute.xlu0 %608
      %610 = vrot.lane.b32.xlu0 %v424, 15
      %v611 = vpop.permute.xlu0 %610
      %v612 = vsel %vm528, %v609, %v611
      %v616 = vmul.f32 %v605, %v609
      %v617 = vmul.f32 %v606, %v612
      %v618 = vmul.f32 %v607, %v611
      %622 = vrot.lane.b32.xlu0 %v616, 113
      %v623 = vpop.permute.xlu0 %622
      %624 = vrot.lane.b32.xlu0 %v617, 113
      %v625 = vpop.permute.xlu0 %624
      %626 = vrot.lane.b32.xlu0 %v618, 113
      %v627 = vpop.permute.xlu0 %626
      %v628 = vsel %vm511, %v623, %v625
      %v629 = vsel %vm511, %v625, %v627
      %632 = vst [vmem:[#allocation3 + $0x30] sm:$0xf] %v628
      %633 = vst [vmem:[#allocation3 + $0x38] sm:$0xf] %v629
      %v634 = vld [vmem:[#allocation2 + $0x8] sm:$0xf]
      %v635 = vld [vmem:[#allocation2 + $0x10] sm:$0xf]
      %v636 = vld [vmem:[#allocation2 + $0x18] sm:$0xf]
      %v640 = vrot.slane %v634, 4
      %v641 = vrot.slane %v635, 4
      %v642 = vrot.slane %v636, 4
      %643 = vrot.lane.b32.xlu0 %v640, 112
      %v644 = vpop.permute.xlu0 %643
      %645 = vrot.lane.b32.xlu0 %v641, 112
      %v646 = vpop.permute.xlu0 %645
      %647 = vrot.lane.b32.xlu0 %v642, 112
      %v648 = vpop.permute.xlu0 %647
      %vm649 = vcmask 916480
      %v650 = vsel %vm649, %v644, %v646
      %v651 = vsel %vm649, %v646, %v648
      %654 = vst [vmem:[#allocation3 + $0x30] sm:$0xf0] %v650
      %655 = vst [vmem:[#allocation3 + $0x38] sm:$0xf0] %v651
      %v656 = vld [vmem:[#allocation2 + $0x8] sm:$0xf]
      %v657 = vld [vmem:[#allocation2 + $0x10] sm:$0xf]
      %v658 = vld [vmem:[#allocation2 + $0x18] sm:$0xf]
      %659 = vrot.lane.b32.xlu0 %v427, 17
      %v660 = vpop.permute.xlu0 %659
      %661 = vrot.lane.b32.xlu0 %v428, 17
      %v662 = vpop.permute.xlu0 %661
      %v663 = vsel %vm473, %v660, %v662
      %v667 = vmul.f32 %v656, %v660
      %v668 = vmul.f32 %v657, %v663
      %v669 = vmul.f32 %v658, %v662
      %673 = vrot.lane.b32.xlu0 %v667, 111
      %v674 = vpop.permute.xlu0 %673
      %675 = vrot.lane.b32.xlu0 %v668, 111
      %v676 = vpop.permute.xlu0 %675
      %677 = vrot.lane.b32.xlu0 %v669, 111
      %v678 = vpop.permute.xlu0 %677
      %v679 = vsel %vm456, %v674, %v676
      %v680 = vsel %vm456, %v676, %v678
      %683 = vst [vmem:[#allocation3 + $0x40] sm:$0xf] %v679
      %684 = vst [vmem:[#allocation3 + $0x48] sm:$0xf] %v680
      %v685 = vld [vmem:[%s2] sm:$0xf]
      %v686 = vld [vmem:[%s2 + $0x4] sm:$0xf]
      %v687 = vld [vmem:[%s2 + $0x8] sm:$0xf]
      %v688 = vld [vmem:[%s2 + $0xc] sm:$0xf]
      %v689 = vld [vmem:[#allocation3] sm:$0xff]
      %v690 = vld [vmem:[#allocation3 + $0x8] sm:$0xff]
      %v691 = vld [vmem:[#allocation3 + $0x10] sm:$0xff]
      %v692 = vld [vmem:[#allocation3 + $0x18] sm:$0xff]
      %v693 = vld [vmem:[#allocation3 + $0x20] sm:$0xff]
      %v694 = vld [vmem:[#allocation3 + $0x28] sm:$0xff]
      %v695 = vld [vmem:[#allocation3 + $0x30] sm:$0xff]
      %v696 = vld [vmem:[#allocation3 + $0x38] sm:$0xff]
      %v697 = vld [vmem:[#allocation3 + $0x40] sm:$0xf]
      %v698 = vld [vmem:[#allocation3 + $0x48] sm:$0xf]
      %v699 = vpack.c.bf16 %v691, %v689
      %v700 = vpack.c.bf16 %v692, %v690
      %v701 = vpack.c.bf16 %v695, %v693
      %v702 = vpack.c.bf16 %v696, %v694
      %v703 = vpack.c.bf16 %v697, %v697
      %v704 = vpack.c.bf16 %v698, %v698
      %v705 = vld [vmem:[%s3] sm:$0xff]
      %v706 = vld [vmem:[%s3 + $0x8] sm:$0xff]
      %v707 = vld [vmem:[%s3 + $0x10] sm:$0xff]
      %v708 = vld [vmem:[%s3 + $0x18] sm:$0xff]
      %710 = vset.pattern.permute.xlu0 0
      %711 = vperm.xlu0 %710, %v705
      %v712 = vpop.permute.xlu0 %711
      %715 = vset.pattern.permute.xlu0 0
      %716 = vperm.xlu0 %715, %v706
      %v717 = vpop.permute.xlu0 %716
      %720 = vset.pattern.permute.xlu0 0
      %721 = vperm.xlu0 %720, %v707
      %v722 = vpop.permute.xlu0 %721
      %725 = vset.pattern.permute.xlu0 0
      %726 = vperm.xlu0 %725, %v708
      %v727 = vpop.permute.xlu0 %726
      %v733 = vunpack.c.l.b16 %v685
      %v734 = vunpack.c.l.b16 %v686
      %v735 = vunpack.c.l.b16 %v687
      %v736 = vunpack.c.l.b16 %v688
      %v737 = vpack.c.b16 %v734, %v733
      %v738 = vpack.c.b16 %v736, %v735
      %vm739 = vcmask 293888
      %v741 = vsel %vm739, %v737, 0
      %v744 = vsel %vm739, %v738, 0
      %vm746 = vcmask 1041408
      %v748 = vsel %vm746, %v703, 0
      %v751 = vsel %vm746, %v704, 0
      %753 = vmatpush.bf16.msra.mxu0 0
      %754 = vmatpush.bf16.msra.mxu0 0
      %755 = vmatpush.bf16.msra.mxu0 0
      %756 = vmatpush.bf16.msra.mxu0 0
      %757 = vmatpush.bf16.msra.mxu0 0
      %758 = vmatpush.bf16.msra.mxu0 %v748
      %759 = vmatpush.bf16.msra.mxu0 %v701
      %760 = vmatpush.bf16.msra.mxu0 %v699
      %761 = vmatmul.bf16.gmra.mxu0 %v741
      %v762 = vpop.f32.mrf.mxu0
      %v763 = vadd.f32 %v712, %v762
      %v764 = vpop.f32.mrf.mxu0
      %v765 = vadd.f32 %v717, %v764
      %766 = vmatmul.bf16.gmra.mxu0 %v744
      %v767 = vpop.f32.mrf.mxu0
      %v768 = vadd.f32 %v722, %v767
      %v769 = vpop.f32.mrf.mxu0
      %v770 = vadd.f32 %v727, %v769
      %771 = vdwg.mxu0
      %772 = vmatpush.bf16.msra.mxu0 0
      %773 = vmatpush.bf16.msra.mxu0 0
      %774 = vmatpush.bf16.msra.mxu0 0
      %775 = vmatpush.bf16.msra.mxu0 0
      %776 = vmatpush.bf16.msra.mxu0 0
      %777 = vmatpush.bf16.msra.mxu0 %v751
      %778 = vmatpush.bf16.msra.mxu0 %v702
      %779 = vmatpush.bf16.msra.mxu0 %v700
      %780 = vmatmul.bf16.gmra.mxu0 %v741
      %v781 = vpop.f32.mrf.mxu0
      %v782 = vadd.f32 %v712, %v781
      %v783 = vpop.f32.mrf.mxu0
      %v784 = vadd.f32 %v717, %v783
      %785 = vmatmul.bf16.gmra.mxu0 %v744
      %v786 = vpop.f32.mrf.mxu0
      %v787 = vadd.f32 %v722, %v786
      %v788 = vpop.f32.mrf.mxu0
      %v789 = vadd.f32 %v727, %v788
      %790 = vdwg.mxu0
      %v791 = vmax.f32 %v763, 0.0
      %v792 = vmax.f32 %v782, 0.0
      %v793 = vmax.f32 %v765, 0.0
      %v794 = vmax.f32 %v784, 0.0
      %v795 = vmax.f32 %v768, 0.0
      %v796 = vmax.f32 %v787, 0.0
      %v797 = vmax.f32 %v770, 0.0
      %v798 = vmax.f32 %v789, 0.0
      %799 = vst [vmem:[#allocation2 + $0x8] sm:$0xff] %v791
      %800 = vst [vmem:[#allocation2 + $0x10] sm:$0xff] %v792
      %801 = vst [vmem:[#allocation2 + $0x28] sm:$0xff] %v793
      %802 = vst [vmem:[#allocation2 + $0x30] sm:$0xff] %v794
      %803 = vst [vmem:[#allocation2 + $0x48] sm:$0xff] %v795
      %804 = vst [vmem:[#allocation2 + $0x50] sm:$0xff] %v796
      %805 = vst [vmem:[#allocation2 + $0x68] sm:$0xff] %v797
      %806 = vst [vmem:[#allocation2 + $0x70] sm:$0xff] %v798
      %v807 = vld [vmem:[#allocation2] sm:$0xff]
      %v808 = vld [vmem:[#allocation2 + $0x8] sm:$0xff]
      %v809 = vld [vmem:[#allocation2 + $0x10] sm:$0xff]
      %v810 = vld [vmem:[#allocation2 + $0x20] sm:$0xff]
      %v811 = vld [vmem:[#allocation2 + $0x28] sm:$0xff]
      %v812 = vld [vmem:[#allocation2 + $0x30] sm:$0xff]
      %v813 = vld [vmem:[#allocation2 + $0x40] sm:$0xff]
      %v814 = vld [vmem:[#allocation2 + $0x48] sm:$0xff]
      %v815 = vld [vmem:[#allocation2 + $0x50] sm:$0xff]
      %v816 = vld [vmem:[#allocation2 + $0x60] sm:$0xff]
      %v817 = vld [vmem:[#allocation2 + $0x68] sm:$0xff]
      %v818 = vld [vmem:[#allocation2 + $0x70] sm:$0xff]
      %v819 = vmul.f32 %v807, %v453
      %v820 = vmul.f32 %v808, %v457
      %v821 = vmul.f32 %v809, %v455
      %v822 = vmul.f32 %v810, %v453
      %v823 = vmul.f32 %v811, %v457
      %v824 = vmul.f32 %v812, %v455
      %v825 = vmul.f32 %v813, %v453
      %v826 = vmul.f32 %v814, %v457
      %v827 = vmul.f32 %v815, %v455
      %v828 = vmul.f32 %v816, %v453
      %v829 = vmul.f32 %v817, %v457
      %v830 = vmul.f32 %v818, %v455
      %843 = vrot.lane.b32.xlu0 %v819, 17
      %v844 = vpop.permute.xlu0 %843
      %845 = vrot.lane.b32.xlu0 %v820, 17
      %v846 = vpop.permute.xlu0 %845
      %847 = vrot.lane.b32.xlu0 %v821, 17
      %v848 = vpop.permute.xlu0 %847
      %849 = vrot.lane.b32.xlu0 %v822, 17
      %v850 = vpop.permute.xlu0 %849
      %851 = vrot.lane.b32.xlu0 %v823, 17
      %v852 = vpop.permute.xlu0 %851
      %853 = vrot.lane.b32.xlu0 %v824, 17
      %v854 = vpop.permute.xlu0 %853
      %855 = vrot.lane.b32.xlu0 %v825, 17
      %v856 = vpop.permute.xlu0 %855
      %857 = vrot.lane.b32.xlu0 %v826, 17
      %v858 = vpop.permute.xlu0 %857
      %859 = vrot.lane.b32.xlu0 %v827, 17
      %v860 = vpop.permute.xlu0 %859
      %861 = vrot.lane.b32.xlu0 %v828, 17
      %v862 = vpop.permute.xlu0 %861
      %863 = vrot.lane.b32.xlu0 %v829, 17
      %v864 = vpop.permute.xlu0 %863
      %865 = vrot.lane.b32.xlu0 %v830, 17
      %v866 = vpop.permute.xlu0 %865
      %v867 = vsel %vm473, %v844, %v846
      %v868 = vsel %vm473, %v846, %v848
      %v869 = vsel %vm473, %v850, %v852
      %v870 = vsel %vm473, %v852, %v854
      %v871 = vsel %vm473, %v856, %v858
      %v872 = vsel %vm473, %v858, %v860
      %v873 = vsel %vm473, %v862, %v864
      %v874 = vsel %vm473, %v864, %v866
      %883 = vst [vmem:[#allocation3] sm:$0xff] %v867
      %884 = vst [vmem:[#allocation3 + $0x8] sm:$0xff] %v868
      %885 = vst [vmem:[#allocation3 + $0x10] sm:$0xff] %v869
      %886 = vst [vmem:[#allocation3 + $0x18] sm:$0xff] %v870
      %887 = vst [vmem:[#allocation3 + $0x20] sm:$0xff] %v871
      %888 = vst [vmem:[#allocation3 + $0x28] sm:$0xff] %v872
      %889 = vst [vmem:[#allocation3 + $0x30] sm:$0xff] %v873
      %890 = vst [vmem:[#allocation3 + $0x38] sm:$0xff] %v874
      %v891 = vld [vmem:[#allocation2] sm:$0xff]
      %v892 = vld [vmem:[#allocation2 + $0x8] sm:$0xff]
      %v893 = vld [vmem:[#allocation2 + $0x10] sm:$0xff]
      %v894 = vld [vmem:[#allocation2 + $0x20] sm:$0xff]
      %v895 = vld [vmem:[#allocation2 + $0x28] sm:$0xff]
      %v896 = vld [vmem:[#allocation2 + $0x30] sm:$0xff]
      %v897 = vld [vmem:[#allocation2 + $0x40] sm:$0xff]
      %v898 = vld [vmem:[#allocation2 + $0x48] sm:$0xff]
      %v899 = vld [vmem:[#allocation2 + $0x50] sm:$0xff]
      %v900 = vld [vmem:[#allocation2 + $0x60] sm:$0xff]
      %v901 = vld [vmem:[#allocation2 + $0x68] sm:$0xff]
      %v902 = vld [vmem:[#allocation2 + $0x70] sm:$0xff]
      %915 = vrot.lane.b32.xlu0 %v891, 16
      %v916 = vpop.permute.xlu0 %915
      %917 = vrot.lane.b32.xlu0 %v892, 16
      %v918 = vpop.permute.xlu0 %917
      %919 = vrot.lane.b32.xlu0 %v893, 16
      %v920 = vpop.permute.xlu0 %919
      %921 = vrot.lane.b32.xlu0 %v894, 16
      %v922 = vpop.permute.xlu0 %921
      %923 = vrot.lane.b32.xlu0 %v895, 16
      %v924 = vpop.permute.xlu0 %923
      %925 = vrot.lane.b32.xlu0 %v896, 16
      %v926 = vpop.permute.xlu0 %925
      %927 = vrot.lane.b32.xlu0 %v897, 16
      %v928 = vpop.permute.xlu0 %927
      %929 = vrot.lane.b32.xlu0 %v898, 16
      %v930 = vpop.permute.xlu0 %929
      %931 = vrot.lane.b32.xlu0 %v899, 16
      %v932 = vpop.permute.xlu0 %931
      %933 = vrot.lane.b32.xlu0 %v900, 16
      %v934 = vpop.permute.xlu0 %933
      %935 = vrot.lane.b32.xlu0 %v901, 16
      %v936 = vpop.permute.xlu0 %935
      %937 = vrot.lane.b32.xlu0 %v902, 16
      %v938 = vpop.permute.xlu0 %937
      %v939 = vsel %vm495, %v916, %v918
      %v940 = vsel %vm495, %v918, %v920
      %v941 = vsel %vm495, %v922, %v924
      %v942 = vsel %vm495, %v924, %v926
      %v943 = vsel %vm495, %v928, %v930
      %v944 = vsel %vm495, %v930, %v932
      %v945 = vsel %vm495, %v934, %v936
      %v946 = vsel %vm495, %v936, %v938
      %955 = vst [vmem:[#allocation3 + $0x40] sm:$0xff] %v939
      %956 = vst [vmem:[#allocation3 + $0x48] sm:$0xff] %v940
      %957 = vst [vmem:[#allocation3 + $0x50] sm:$0xff] %v941
      %958 = vst [vmem:[#allocation3 + $0x58] sm:$0xff] %v942
      %959 = vst [vmem:[#allocation3 + $0x60] sm:$0xff] %v943
      %960 = vst [vmem:[#allocation3 + $0x68] sm:$0xff] %v944
      %961 = vst [vmem:[#allocation3 + $0x70] sm:$0xff] %v945
      %962 = vst [vmem:[#allocation3 + $0x78] sm:$0xff] %v946
      %v963 = vld [vmem:[#allocation2] sm:$0xff]
      %v964 = vld [vmem:[#allocation2 + $0x8] sm:$0xff]
      %v965 = vld [vmem:[#allocation2 + $0x10] sm:$0xff]
      %v966 = vld [vmem:[#allocation2 + $0x20] sm:$0xff]
      %v967 = vld [vmem:[#allocation2 + $0x28] sm:$0xff]
      %v968 = vld [vmem:[#allocation2 + $0x30] sm:$0xff]
      %v969 = vld [vmem:[#allocation2 + $0x40] sm:$0xff]
      %v970 = vld [vmem:[#allocation2 + $0x48] sm:$0xff]
      %v971 = vld [vmem:[#allocation2 + $0x50] sm:$0xff]
      %v972 = vld [vmem:[#allocation2 + $0x60] sm:$0xff]
      %v973 = vld [vmem:[#allocation2 + $0x68] sm:$0xff]
      %v974 = vld [vmem:[#allocation2 + $0x70] sm:$0xff]
      %v975 = vmul.f32 %v963, %v508
      %v976 = vmul.f32 %v964, %v512
      %v977 = vmul.f32 %v965, %v510
      %v978 = vmul.f32 %v966, %v508
      %v979 = vmul.f32 %v967, %v512
      %v980 = vmul.f32 %v968, %v510
      %v981 = vmul.f32 %v969, %v508
      %v982 = vmul.f32 %v970, %v512
      %v983 = vmul.f32 %v971, %v510
      %v984 = vmul.f32 %v972, %v508
      %v985 = vmul.f32 %v973, %v512
      %v986 = vmul.f32 %v974, %v510
      %999 = vrot.lane.b32.xlu0 %v975, 15
      %v1000 = vpop.permute.xlu0 %999
      %1001 = vrot.lane.b32.xlu0 %v976, 15
      %v1002 = vpop.permute.xlu0 %1001
      %1003 = vrot.lane.b32.xlu0 %v977, 15
      %v1004 = vpop.permute.xlu0 %1003
      %1005 = vrot.lane.b32.xlu0 %v978, 15
      %v1006 = vpop.permute.xlu0 %1005
      %1007 = vrot.lane.b32.xlu0 %v979, 15
      %v1008 = vpop.permute.xlu0 %1007
      %1009 = vrot.lane.b32.xlu0 %v980, 15
      %v1010 = vpop.permute.xlu0 %1009
      %1011 = vrot.lane.b32.xlu0 %v981, 15
      %v1012 = vpop.permute.xlu0 %1011
      %1013 = vrot.lane.b32.xlu0 %v982, 15
      %v1014 = vpop.permute.xlu0 %1013
      %1015 = vrot.lane.b32.xlu0 %v983, 15
      %v1016 = vpop.permute.xlu0 %1015
      %1017 = vrot.lane.b32.xlu0 %v984, 15
      %v1018 = vpop.permute.xlu0 %1017
      %1019 = vrot.lane.b32.xlu0 %v985, 15
      %v1020 = vpop.permute.xlu0 %1019
      %1021 = vrot.lane.b32.xlu0 %v986, 15
      %v1022 = vpop.permute.xlu0 %1021
      %v1023 = vsel %vm528, %v1000, %v1002
      %v1024 = vsel %vm528, %v1002, %v1004
      %v1025 = vsel %vm528, %v1006, %v1008
      %v1026 = vsel %vm528, %v1008, %v1010
      %v1027 = vsel %vm528, %v1012, %v1014
      %v1028 = vsel %vm528, %v1014, %v1016
      %v1029 = vsel %vm528, %v1018, %v1020
      %v1030 = vsel %vm528, %v1020, %v1022
      %1039 = vst [vmem:[#allocation3 + $0x80] sm:$0xff] %v1023
      %1040 = vst [vmem:[#allocation3 + $0x88] sm:$0xff] %v1024
      %1041 = vst [vmem:[#allocation3 + $0x90] sm:$0xff] %v1025
      %1042 = vst [vmem:[#allocation3 + $0x98] sm:$0xff] %v1026
      %1043 = vst [vmem:[#allocation3 + $0xa0] sm:$0xff] %v1027
      %1044 = vst [vmem:[#allocation3 + $0xa8] sm:$0xff] %v1028
      %1045 = vst [vmem:[#allocation3 + $0xb0] sm:$0xff] %v1029
      %1046 = vst [vmem:[#allocation3 + $0xb8] sm:$0xff] %v1030
      %v1047 = vld [vmem:[#allocation2] sm:$0xff]
      %v1048 = vld [vmem:[#allocation2 + $0x8] sm:$0xff]
      %v1049 = vld [vmem:[#allocation2 + $0x10] sm:$0xff]
      %v1050 = vld [vmem:[#allocation2 + $0x20] sm:$0xff]
      %v1051 = vld [vmem:[#allocation2 + $0x28] sm:$0xff]
      %v1052 = vld [vmem:[#allocation2 + $0x30] sm:$0xff]
      %v1053 = vld [vmem:[#allocation2 + $0x40] sm:$0xff]
      %v1054 = vld [vmem:[#allocation2 + $0x48] sm:$0xff]
      %v1055 = vld [vmem:[#allocation2 + $0x50] sm:$0xff]
      %v1056 = vld [vmem:[#allocation2 + $0x60] sm:$0xff]
      %v1057 = vld [vmem:[#allocation2 + $0x68] sm:$0xff]
      %v1058 = vld [vmem:[#allocation2 + $0x70] sm:$0xff]
      %v1059 = vmul.f32 %v1047, %v539
      %v1060 = vmul.f32 %v1048, %v543
      %v1061 = vmul.f32 %v1049, %v541
      %v1062 = vmul.f32 %v1050, %v539
      %v1063 = vmul.f32 %v1051, %v543
      %v1064 = vmul.f32 %v1052, %v541
      %v1065 = vmul.f32 %v1053, %v539
      %v1066 = vmul.f32 %v1054, %v543
      %v1067 = vmul.f32 %v1055, %v541
      %v1068 = vmul.f32 %v1056, %v539
      %v1069 = vmul.f32 %v1057, %v543
      %v1070 = vmul.f32 %v1058, %v541
      %1083 = vrot.lane.b32.xlu0 %v1059, 1
      %v1084 = vpop.permute.xlu0 %1083
      %1085 = vrot.lane.b32.xlu0 %v1060, 1
      %v1086 = vpop.permute.xlu0 %1085
      %1087 = vrot.lane.b32.xlu0 %v1061, 1
      %v1088 = vpop.permute.xlu0 %1087
      %1089 = vrot.lane.b32.xlu0 %v1062, 1
      %v1090 = vpop.permute.xlu0 %1089
      %1091 = vrot.lane.b32.xlu0 %v1063, 1
      %v1092 = vpop.permute.xlu0 %1091
      %1093 = vrot.lane.b32.xlu0 %v1064, 1
      %v1094 = vpop.permute.xlu0 %1093
      %1095 = vrot.lane.b32.xlu0 %v1065, 1
      %v1096 = vpop.permute.xlu0 %1095
      %1097 = vrot.lane.b32.xlu0 %v1066, 1
      %v1098 = vpop.permute.xlu0 %1097
      %1099 = vrot.lane.b32.xlu0 %v1067, 1
      %v1100 = vpop.permute.xlu0 %1099
      %1101 = vrot.lane.b32.xlu0 %v1068, 1
      %v1102 = vpop.permute.xlu0 %1101
      %1103 = vrot.lane.b32.xlu0 %v1069, 1
      %v1104 = vpop.permute.xlu0 %1103
      %1105 = vrot.lane.b32.xlu0 %v1070, 1
      %v1106 = vpop.permute.xlu0 %1105
      %v1107 = vsel %vm562, %v1084, %v1086
      %v1108 = vsel %vm562, %v1086, %v1088
      %v1109 = vsel %vm562, %v1090, %v1092
      %v1110 = vsel %vm562, %v1092, %v1094
      %v1111 = vsel %vm562, %v1096, %v1098
      %v1112 = vsel %vm562, %v1098, %v1100
      %v1113 = vsel %vm562, %v1102, %v1104
      %v1114 = vsel %vm562, %v1104, %v1106
      %1123 = vst [vmem:[#allocation3 + $0xc0] sm:$0xff] %v1107
      %1124 = vst [vmem:[#allocation3 + $0xc8] sm:$0xff] %v1108
      %1125 = vst [vmem:[#allocation3 + $0xd0] sm:$0xff] %v1109
      %1126 = vst [vmem:[#allocation3 + $0xd8] sm:$0xff] %v1110
      %1127 = vst [vmem:[#allocation3 + $0xe0] sm:$0xff] %v1111
      %1128 = vst [vmem:[#allocation3 + $0xe8] sm:$0xff] %v1112
      %1129 = vst [vmem:[#allocation3 + $0xf0] sm:$0xff] %v1113
      %1130 = vst [vmem:[#allocation3 + $0xf8] sm:$0xff] %v1114
      %v1131 = vld [vmem:[#allocation2 + $0x8] sm:$0xff]
      %v1132 = vld [vmem:[#allocation2 + $0x10] sm:$0xff]
      %v1133 = vld [vmem:[#allocation2 + $0x28] sm:$0xff]
      %v1134 = vld [vmem:[#allocation2 + $0x30] sm:$0xff]
      %v1135 = vld [vmem:[#allocation2 + $0x48] sm:$0xff]
      %v1136 = vld [vmem:[#allocation2 + $0x50] sm:$0xff]
      %v1137 = vld [vmem:[#allocation2 + $0x68] sm:$0xff]
      %v1138 = vld [vmem:[#allocation2 + $0x70] sm:$0xff]
      %1139 = vst [vmem:[#allocation3 + $0x100] sm:$0xff] %v1131
      %1140 = vst [vmem:[#allocation3 + $0x108] sm:$0xff] %v1132
      %1141 = vst [vmem:[#allocation3 + $0x110] sm:$0xff] %v1133
      %1142 = vst [vmem:[#allocation3 + $0x118] sm:$0xff] %v1134
      %1143 = vst [vmem:[#allocation3 + $0x120] sm:$0xff] %v1135
      %1144 = vst [vmem:[#allocation3 + $0x128] sm:$0xff] %v1136
      %1145 = vst [vmem:[#allocation3 + $0x130] sm:$0xff] %v1137
      %1146 = vst [vmem:[#allocation3 + $0x138] sm:$0xff] %v1138
      %v1147 = vld [vmem:[#allocation2 + $0x8] sm:$0xff]
      %v1148 = vld [vmem:[#allocation2 + $0x10] sm:$0xff]
      %v1149 = vld [vmem:[#allocation2 + $0x18] sm:$0xff]
      %v1150 = vld [vmem:[#allocation2 + $0x28] sm:$0xff]
      %v1151 = vld [vmem:[#allocation2 + $0x30] sm:$0xff]
      %v1152 = vld [vmem:[#allocation2 + $0x38] sm:$0xff]
      %v1153 = vld [vmem:[#allocation2 + $0x48] sm:$0xff]
      %v1154 = vld [vmem:[#allocation2 + $0x50] sm:$0xff]
      %v1155 = vld [vmem:[#allocation2 + $0x58] sm:$0xff]
      %v1156 = vld [vmem:[#allocation2 + $0x68] sm:$0xff]
      %v1157 = vld [vmem:[#allocation2 + $0x70] sm:$0xff]
      %v1158 = vld [vmem:[#allocation2 + $0x78] sm:$0xff]
      %v1159 = vmul.f32 %v1147, %v577
      %v1160 = vmul.f32 %v1148, %v580
      %v1161 = vmul.f32 %v1149, %v579
      %v1162 = vmul.f32 %v1150, %v577
      %v1163 = vmul.f32 %v1151, %v580
      %v1164 = vmul.f32 %v1152, %v579
      %v1165 = vmul.f32 %v1153, %v577
      %v1166 = vmul.f32 %v1154, %v580
      %v1167 = vmul.f32 %v1155, %v579
      %v1168 = vmul.f32 %v1156, %v577
      %v1169 = vmul.f32 %v1157, %v580
      %v1170 = vmul.f32 %v1158, %v579
      %1183 = vrot.lane.b32.xlu0 %v1159, 127
      %v1184 = vpop.permute.xlu0 %1183
      %1185 = vrot.lane.b32.xlu0 %v1160, 127
      %v1186 = vpop.permute.xlu0 %1185
      %1187 = vrot.lane.b32.xlu0 %v1161, 127
      %v1188 = vpop.permute.xlu0 %1187
      %1189 = vrot.lane.b32.xlu0 %v1162, 127
      %v1190 = vpop.permute.xlu0 %1189
      %1191 = vrot.lane.b32.xlu0 %v1163, 127
      %v1192 = vpop.permute.xlu0 %1191
      %1193 = vrot.lane.b32.xlu0 %v1164, 127
      %v1194 = vpop.permute.xlu0 %1193
      %1195 = vrot.lane.b32.xlu0 %v1165, 127
      %v1196 = vpop.permute.xlu0 %1195
      %1197 = vrot.lane.b32.xlu0 %v1166, 127
      %v1198 = vpop.permute.xlu0 %1197
      %1199 = vrot.lane.b32.xlu0 %v1167, 127
      %v1200 = vpop.permute.xlu0 %1199
      %1201 = vrot.lane.b32.xlu0 %v1168, 127
      %v1202 = vpop.permute.xlu0 %1201
      %1203 = vrot.lane.b32.xlu0 %v1169, 127
      %v1204 = vpop.permute.xlu0 %1203
      %1205 = vrot.lane.b32.xlu0 %v1170, 127
      %v1206 = vpop.permute.xlu0 %1205
      %v1207 = vsel %vm542, %v1184, %v1186
      %v1208 = vsel %vm542, %v1186, %v1188
      %v1209 = vsel %vm542, %v1190, %v1192
      %v1210 = vsel %vm542, %v1192, %v1194
      %v1211 = vsel %vm542, %v1196, %v1198
      %v1212 = vsel %vm542, %v1198, %v1200
      %v1213 = vsel %vm542, %v1202, %v1204
      %v1214 = vsel %vm542, %v1204, %v1206
      %1223 = vst [vmem:[#allocation3 + $0x140] sm:$0xff] %v1207
      %1224 = vst [vmem:[#allocation3 + $0x148] sm:$0xff] %v1208
      %1225 = vst [vmem:[#allocation3 + $0x150] sm:$0xff] %v1209
      %1226 = vst [vmem:[#allocation3 + $0x158] sm:$0xff] %v1210
      %1227 = vst [vmem:[#allocation3 + $0x160] sm:$0xff] %v1211
      %1228 = vst [vmem:[#allocation3 + $0x168] sm:$0xff] %v1212
      %1229 = vst [vmem:[#allocation3 + $0x170] sm:$0xff] %v1213
      %1230 = vst [vmem:[#allocation3 + $0x178] sm:$0xff] %v1214
      %v1231 = vld [vmem:[#allocation2 + $0x8] sm:$0xff]
      %v1232 = vld [vmem:[#allocation2 + $0x10] sm:$0xff]
      %v1233 = vld [vmem:[#allocation2 + $0x18] sm:$0xff]
      %v1234 = vld [vmem:[#allocation2 + $0x28] sm:$0xff]
      %v1235 = vld [vmem:[#allocation2 + $0x30] sm:$0xff]
      %v1236 = vld [vmem:[#allocation2 + $0x38] sm:$0xff]
      %v1237 = vld [vmem:[#allocation2 + $0x48] sm:$0xff]
      %v1238 = vld [vmem:[#allocation2 + $0x50] sm:$0xff]
      %v1239 = vld [vmem:[#allocation2 + $0x58] sm:$0xff]
      %v1240 = vld [vmem:[#allocation2 + $0x68] sm:$0xff]
      %v1241 = vld [vmem:[#allocation2 + $0x70] sm:$0xff]
      %v1242 = vld [vmem:[#allocation2 + $0x78] sm:$0xff]
      %v1243 = vmul.f32 %v1231, %v609
      %v1244 = vmul.f32 %v1232, %v612
      %v1245 = vmul.f32 %v1233, %v611
      %v1246 = vmul.f32 %v1234, %v609
      %v1247 = vmul.f32 %v1235, %v612
      %v1248 = vmul.f32 %v1236, %v611
      %v1249 = vmul.f32 %v1237, %v609
      %v1250 = vmul.f32 %v1238, %v612
      %v1251 = vmul.f32 %v1239, %v611
      %v1252 = vmul.f32 %v1240, %v609
      %v1253 = vmul.f32 %v1241, %v612
      %v1254 = vmul.f32 %v1242, %v611
      %1267 = vrot.lane.b32.xlu0 %v1243, 113
      %v1268 = vpop.permute.xlu0 %1267
      %1269 = vrot.lane.b32.xlu0 %v1244, 113
      %v1270 = vpop.permute.xlu0 %1269
      %1271 = vrot.lane.b32.xlu0 %v1245, 113
      %v1272 = vpop.permute.xlu0 %1271
      %1273 = vrot.lane.b32.xlu0 %v1246, 113
      %v1274 = vpop.permute.xlu0 %1273
      %1275 = vrot.lane.b32.xlu0 %v1247, 113
      %v1276 = vpop.permute.xlu0 %1275
      %1277 = vrot.lane.b32.xlu0 %v1248, 113
      %v1278 = vpop.permute.xlu0 %1277
      %1279 = vrot.lane.b32.xlu0 %v1249, 113
      %v1280 = vpop.permute.xlu0 %1279
      %1281 = vrot.lane.b32.xlu0 %v1250, 113
      %v1282 = vpop.permute.xlu0 %1281
      %1283 = vrot.lane.b32.xlu0 %v1251, 113
      %v1284 = vpop.permute.xlu0 %1283
      %1285 = vrot.lane.b32.xlu0 %v1252, 113
      %v1286 = vpop.permute.xlu0 %1285
      %1287 = vrot.lane.b32.xlu0 %v1253, 113
      %v1288 = vpop.permute.xlu0 %1287
      %1289 = vrot.lane.b32.xlu0 %v1254, 113
      %v1290 = vpop.permute.xlu0 %1289
      %v1291 = vsel %vm511, %v1268, %v1270
      %v1292 = vsel %vm511, %v1270, %v1272
      %v1293 = vsel %vm511, %v1274, %v1276
      %v1294 = vsel %vm511, %v1276, %v1278
      %v1295 = vsel %vm511, %v1280, %v1282
      %v1296 = vsel %vm511, %v1282, %v1284
      %v1297 = vsel %vm511, %v1286, %v1288
      %v1298 = vsel %vm511, %v1288, %v1290
      %1307 = vst [vmem:[#allocation3 + $0x180] sm:$0xff] %v1291
      %1308 = vst [vmem:[#allocation3 + $0x188] sm:$0xff] %v1292
      %1309 = vst [vmem:[#allocation3 + $0x190] sm:$0xff] %v1293
      %1310 = vst [vmem:[#allocation3 + $0x198] sm:$0xff] %v1294
      %1311 = vst [vmem:[#allocation3 + $0x1a0] sm:$0xff] %v1295
      %1312 = vst [vmem:[#allocation3 + $0x1a8] sm:$0xff] %v1296
      %1313 = vst [vmem:[#allocation3 + $0x1b0] sm:$0xff] %v1297
      %1314 = vst [vmem:[#allocation3 + $0x1b8] sm:$0xff] %v1298
      %v1315 = vld [vmem:[#allocation2 + $0x8] sm:$0xff]
      %v1316 = vld [vmem:[#allocation2 + $0x10] sm:$0xff]
      %v1317 = vld [vmem:[#allocation2 + $0x18] sm:$0xff]
      %v1318 = vld [vmem:[#allocation2 + $0x28] sm:$0xff]
      %v1319 = vld [vmem:[#allocation2 + $0x30] sm:$0xff]
      %v1320 = vld [vmem:[#allocation2 + $0x38] sm:$0xff]
      %v1321 = vld [vmem:[#allocation2 + $0x48] sm:$0xff]
      %v1322 = vld [vmem:[#allocation2 + $0x50] sm:$0xff]
      %v1323 = vld [vmem:[#allocation2 + $0x58] sm:$0xff]
      %v1324 = vld [vmem:[#allocation2 + $0x68] sm:$0xff]
      %v1325 = vld [vmem:[#allocation2 + $0x70] sm:$0xff]
      %v1326 = vld [vmem:[#allocation2 + $0x78] sm:$0xff]
      %1339 = vrot.lane.b32.xlu0 %v1315, 112
      %v1340 = vpop.permute.xlu0 %1339
      %1341 = vrot.lane.b32.xlu0 %v1316, 112
      %v1342 = vpop.permute.xlu0 %1341
      %1343 = vrot.lane.b32.xlu0 %v1317, 112
      %v1344 = vpop.permute.xlu0 %1343
      %1345 = vrot.lane.b32.xlu0 %v1318, 112
      %v1346 = vpop.permute.xlu0 %1345
      %1347 = vrot.lane.b32.xlu0 %v1319, 112
      %v1348 = vpop.permute.xlu0 %1347
      %1349 = vrot.lane.b32.xlu0 %v1320, 112
      %v1350 = vpop.permute.xlu0 %1349
      %1351 = vrot.lane.b32.xlu0 %v1321, 112
      %v1352 = vpop.permute.xlu0 %1351
      %1353 = vrot.lane.b32.xlu0 %v1322, 112
      %v1354 = vpop.permute.xlu0 %1353
      %1355 = vrot.lane.b32.xlu0 %v1323, 112
      %v1356 = vpop.permute.xlu0 %1355
      %1357 = vrot.lane.b32.xlu0 %v1324, 112
      %v1358 = vpop.permute.xlu0 %1357
      %1359 = vrot.lane.b32.xlu0 %v1325, 112
      %v1360 = vpop.permute.xlu0 %1359
      %1361 = vrot.lane.b32.xlu0 %v1326, 112
      %v1362 = vpop.permute.xlu0 %1361
      %v1363 = vsel %vm649, %v1340, %v1342
      %v1364 = vsel %vm649, %v1342, %v1344
      %v1365 = vsel %vm649, %v1346, %v1348
      %v1366 = vsel %vm649, %v1348, %v1350
      %v1367 = vsel %vm649, %v1352, %v1354
      %v1368 = vsel %vm649, %v1354, %v1356
      %v1369 = vsel %vm649, %v1358, %v1360
      %v1370 = vsel %vm649, %v1360, %v1362
      %1379 = vst [vmem:[#allocation3 + $0x1c0] sm:$0xff] %v1363
      %1380 = vst [vmem:[#allocation3 + $0x1c8] sm:$0xff] %v1364
      %1381 = vst [vmem:[#allocation3 + $0x1d0] sm:$0xff] %v1365
      %1382 = vst [vmem:[#allocation3 + $0x1d8] sm:$0xff] %v1366
      %1383 = vst [vmem:[#allocation3 + $0x1e0] sm:$0xff] %v1367
      %1384 = vst [vmem:[#allocation3 + $0x1e8] sm:$0xff] %v1368
      %1385 = vst [vmem:[#allocation3 + $0x1f0] sm:$0xff] %v1369
      %1386 = vst [vmem:[#allocation3 + $0x1f8] sm:$0xff] %v1370
      %v1387 = vld [vmem:[#allocation2 + $0x8] sm:$0xff]
      %v1388 = vld [vmem:[#allocation2 + $0x10] sm:$0xff]
      %v1389 = vld [vmem:[#allocation2 + $0x18] sm:$0xff]
      %v1390 = vld [vmem:[#allocation2 + $0x28] sm:$0xff]
      %v1391 = vld [vmem:[#allocation2 + $0x30] sm:$0xff]
      %v1392 = vld [vmem:[#allocation2 + $0x38] sm:$0xff]
      %v1393 = vld [vmem:[#allocation2 + $0x48] sm:$0xff]
      %v1394 = vld [vmem:[#allocation2 + $0x50] sm:$0xff]
      %v1395 = vld [vmem:[#allocation2 + $0x58] sm:$0xff]
      %v1396 = vld [vmem:[#allocation2 + $0x68] sm:$0xff]
      %v1397 = vld [vmem:[#allocation2 + $0x70] sm:$0xff]
      %v1398 = vld [vmem:[#allocation2 + $0x78] sm:$0xff]
      %v1399 = vmul.f32 %v1387, %v660
      %v1400 = vmul.f32 %v1388, %v663
      %v1401 = vmul.f32 %v1389, %v662
      %v1402 = vmul.f32 %v1390, %v660
      %v1403 = vmul.f32 %v1391, %v663
      %v1404 = vmul.f32 %v1392, %v662
      %v1405 = vmul.f32 %v1393, %v660
      %v1406 = vmul.f32 %v1394, %v663
      %v1407 = vmul.f32 %v1395, %v662
      %v1408 = vmul.f32 %v1396, %v660
      %v1409 = vmul.f32 %v1397, %v663
      %v1410 = vmul.f32 %v1398, %v662
      %1423 = vrot.lane.b32.xlu0 %v1399, 111
      %v1424 = vpop.permute.xlu0 %1423
      %1425 = vrot.lane.b32.xlu0 %v1400, 111
      %v1426 = vpop.permute.xlu0 %1425
      %1427 = vrot.lane.b32.xlu0 %v1401, 111
      %v1428 = vpop.permute.xlu0 %1427
      %1429 = vrot.lane.b32.xlu0 %v1402, 111
      %v1430 = vpop.permute.xlu0 %1429
      %1431 = vrot.lane.b32.xlu0 %v1403, 111
      %v1432 = vpop.permute.xlu0 %1431
      %1433 = vrot.lane.b32.xlu0 %v1404, 111
      %v1434 = vpop.permute.xlu0 %1433
      %1435 = vrot.lane.b32.xlu0 %v1405, 111
      %v1436 = vpop.permute.xlu0 %1435
      %1437 = vrot.lane.b32.xlu0 %v1406, 111
      %v1438 = vpop.permute.xlu0 %1437
      %1439 = vrot.lane.b32.xlu0 %v1407, 111
      %v1440 = vpop.permute.xlu0 %1439
      %1441 = vrot.lane.b32.xlu0 %v1408, 111
      %v1442 = vpop.permute.xlu0 %1441
      %1443 = vrot.lane.b32.xlu0 %v1409, 111
      %v1444 = vpop.permute.xlu0 %1443
      %1445 = vrot.lane.b32.xlu0 %v1410, 111
      %v1446 = vpop.permute.xlu0 %1445
      %v1447 = vsel %vm456, %v1424, %v1426
      %v1448 = vsel %vm456, %v1426, %v1428
      %v1449 = vsel %vm456, %v1430, %v1432
      %v1450 = vsel %vm456, %v1432, %v1434
      %v1451 = vsel %vm456, %v1436, %v1438
      %v1452 = vsel %vm456, %v1438, %v1440
      %v1453 = vsel %vm456, %v1442, %v1444
      %v1454 = vsel %vm456, %v1444, %v1446
      %1463 = vst [vmem:[#allocation3 + $0x200] sm:$0xff] %v1447
      %1464 = vst [vmem:[#allocation3 + $0x208] sm:$0xff] %v1448
      %1465 = vst [vmem:[#allocation3 + $0x210] sm:$0xff] %v1449
      %1466 = vst [vmem:[#allocation3 + $0x218] sm:$0xff] %v1450
      %1467 = vst [vmem:[#allocation3 + $0x220] sm:$0xff] %v1451
      %1468 = vst [vmem:[#allocation3 + $0x228] sm:$0xff] %v1452
      %1469 = vst [vmem:[#allocation3 + $0x230] sm:$0xff] %v1453
      %1470 = vst [vmem:[#allocation3 + $0x238] sm:$0xff] %v1454
      %v1471 = vld [vmem:[%s4] sm:$0xff]
      %v1472 = vld [vmem:[%s4 + $0x8] sm:$0xf]
      %v1473 = vld [vmem:[%s4 + $0xc] sm:$0xff]
      %v1474 = vld [vmem:[%s4 + $0x14] sm:$0xf]
      %v1475 = vld [vmem:[%s4 + $0x18] sm:$0xff]
      %v1476 = vld [vmem:[%s4 + $0x20] sm:$0xf]
      %v1477 = vld [vmem:[%s4 + $0x24] sm:$0xff]
      %v1478 = vld [vmem:[%s4 + $0x2c] sm:$0xf]
      %v1479 = vld [vmem:[#allocation3] sm:$0xff]
      %v1480 = vld [vmem:[#allocation3 + $0x8] sm:$0xff]
      %v1481 = vld [vmem:[#allocation3 + $0x10] sm:$0xff]
      %v1482 = vld [vmem:[#allocation3 + $0x18] sm:$0xff]
      %v1483 = vld [vmem:[#allocation3 + $0x20] sm:$0xff]
      %v1484 = vld [vmem:[#allocation3 + $0x28] sm:$0xff]
      %v1485 = vld [vmem:[#allocation3 + $0x30] sm:$0xff]
      %v1486 = vld [vmem:[#allocation3 + $0x38] sm:$0xff]
      %v1487 = vld [vmem:[#allocation3 + $0x40] sm:$0xff]
      %v1488 = vld [vmem:[#allocation3 + $0x48] sm:$0xff]
      %v1489 = vld [vmem:[#allocation3 + $0x50] sm:$0xff]
      %v1490 = vld [vmem:[#allocation3 + $0x58] sm:$0xff]
      %v1491 = vld [vmem:[#allocation3 + $0x60] sm:$0xff]
      %v1492 = vld [vmem:[#allocation3 + $0x68] sm:$0xff]
      %v1493 = vld [vmem:[#allocation3 + $0x70] sm:$0xff]
      %v1494 = vld [vmem:[#allocation3 + $0x78] sm:$0xff]
      %v1495 = vld [vmem:[#allocation3 + $0x80] sm:$0xff]
      %v1496 = vld [vmem:[#allocation3 + $0x88] sm:$0xff]
      %v1497 = vld [vmem:[#allocation3 + $0x90] sm:$0xff]
      %v1498 = vld [vmem:[#allocation3 + $0x98] sm:$0xff]
      %v1499 = vld [vmem:[#allocation3 + $0xa0] sm:$0xff]
      %v1500 = vld [vmem:[#allocation3 + $0xa8] sm:$0xff]
      %v1501 = vld [vmem:[#allocation3 + $0xb0] sm:$0xff]
      %v1502 = vld [vmem:[#allocation3 + $0xb8] sm:$0xff]
      %v1503 = vld [vmem:[#allocation3 + $0xc0] sm:$0xff]
      %v1504 = vld [vmem:[#allocation3 + $0xc8] sm:$0xff]
      %v1505 = vld [vmem:[#allocation3 + $0xd0] sm:$0xff]
      %v1506 = vld [vmem:[#allocation3 + $0xd8] sm:$0xff]
      %v1507 = vld [vmem:[#allocation3 + $0xe0] sm:$0xff]
      %v1508 = vld [vmem:[#allocation3 + $0xe8] sm:$0xff]
      %v1509 = vld [vmem:[#allocation3 + $0xf0] sm:$0xff]
      %v1510 = vld [vmem:[#allocation3 + $0xf8] sm:$0xff]
      %v1511 = vld [vmem:[#allocation3 + $0x100] sm:$0xff]
      %v1512 = vld [vmem:[#allocation3 + $0x108] sm:$0xff]
      %v1513 = vld [vmem:[#allocation3 + $0x110] sm:$0xff]
      %v1514 = vld [vmem:[#allocation3 + $0x118] sm:$0xff]
      %v1515 = vld [vmem:[#allocation3 + $0x120] sm:$0xff]
      %v1516 = vld [vmem:[#allocation3 + $0x128] sm:$0xff]
      %v1517 = vld [vmem:[#allocation3 + $0x130] sm:$0xff]
      %v1518 = vld [vmem:[#allocation3 + $0x138] sm:$0xff]
      %v1519 = vld [vmem:[#allocation3 + $0x140] sm:$0xff]
      %v1520 = vld [vmem:[#allocation3 + $0x148] sm:$0xff]
      %v1521 = vld [vmem:[#allocation3 + $0x150] sm:$0xff]
      %v1522 = vld [vmem:[#allocation3 + $0x158] sm:$0xff]
      %v1523 = vld [vmem:[#allocation3 + $0x160] sm:$0xff]
      %v1524 = vld [vmem:[#allocation3 + $0x168] sm:$0xff]
      %v1525 = vld [vmem:[#allocation3 + $0x170] sm:$0xff]
      %v1526 = vld [vmem:[#allocation3 + $0x178] sm:$0xff]
      %v1527 = vld [vmem:[#allocation3 + $0x180] sm:$0xff]
      %v1528 = vld [vmem:[#allocation3 + $0x188] sm:$0xff]
      %v1529 = vld [vmem:[#allocation3 + $0x190] sm:$0xff]
      %v1530 = vld [vmem:[#allocation3 + $0x198] sm:$0xff]
      %v1531 = vld [vmem:[#allocation3 + $0x1a0] sm:$0xff]
      %v1532 = vld [vmem:[#allocation3 + $0x1a8] sm:$0xff]
      %v1533 = vld [vmem:[#allocation3 + $0x1b0] sm:$0xff]
      %v1534 = vld [vmem:[#allocation3 + $0x1b8] sm:$0xff]
      %v1535 = vld [vmem:[#allocation3 + $0x1c0] sm:$0xff]
      %v1536 = vld [vmem:[#allocation3 + $0x1c8] sm:$0xff]
      %v1537 = vld [vmem:[#allocation3 + $0x1d0] sm:$0xff]
      %v1538 = vld [vmem:[#allocation3 + $0x1d8] sm:$0xff]
      %v1539 = vld [vmem:[#allocation3 + $0x1e0] sm:$0xff]
      %v1540 = vld [vmem:[#allocation3 + $0x1e8] sm:$0xff]
      %v1541 = vld [vmem:[#allocation3 + $0x1f0] sm:$0xff]
      %v1542 = vld [vmem:[#allocation3 + $0x1f8] sm:$0xff]
      %v1543 = vld [vmem:[#allocation3 + $0x200] sm:$0xff]
      %v1544 = vld [vmem:[#allocation3 + $0x208] sm:$0xff]
      %v1545 = vld [vmem:[#allocation3 + $0x210] sm:$0xff]
      %v1546 = vld [vmem:[#allocation3 + $0x218] sm:$0xff]
      %v1547 = vld [vmem:[#allocation3 + $0x220] sm:$0xff]
      %v1548 = vld [vmem:[#allocation3 + $0x228] sm:$0xff]
      %v1549 = vld [vmem:[#allocation3 + $0x230] sm:$0xff]
      %v1550 = vld [vmem:[#allocation3 + $0x238] sm:$0xff]
      %v1551 = vpack.c.bf16 %v1481, %v1479
      %v1552 = vpack.c.bf16 %v1482, %v1480
      %v1553 = vpack.c.bf16 %v1485, %v1483
      %v1554 = vpack.c.bf16 %v1486, %v1484
      %v1555 = vpack.c.bf16 %v1489, %v1487
      %v1556 = vpack.c.bf16 %v1490, %v1488
      %v1557 = vpack.c.bf16 %v1493, %v1491
      %v1558 = vpack.c.bf16 %v1494, %v1492
      %v1559 = vpack.c.bf16 %v1497, %v1495
      %v1560 = vpack.c.bf16 %v1498, %v1496
      %v1561 = vpack.c.bf16 %v1501, %v1499
      %v1562 = vpack.c.bf16 %v1502, %v1500
      %v1563 = vpack.c.bf16 %v1505, %v1503
      %v1564 = vpack.c.bf16 %v1506, %v1504
      %v1565 = vpack.c.bf16 %v1509, %v1507
      %v1566 = vpack.c.bf16 %v1510, %v1508
      %v1567 = vpack.c.bf16 %v1513, %v1511
      %v1568 = vpack.c.bf16 %v1514, %v1512
      %v1569 = vpack.c.bf16 %v1517, %v1515
      %v1570 = vpack.c.bf16 %v1518, %v1516
      %v1571 = vpack.c.bf16 %v1521, %v1519
      %v1572 = vpack.c.bf16 %v1522, %v1520
      %v1573 = vpack.c.bf16 %v1525, %v1523
      %v1574 = vpack.c.bf16 %v1526, %v1524
      %v1575 = vpack.c.bf16 %v1529, %v1527
      %v1576 = vpack.c.bf16 %v1530, %v1528
      %v1577 = vpack.c.bf16 %v1533, %v1531
      %v1578 = vpack.c.bf16 %v1534, %v1532
      %v1579 = vpack.c.bf16 %v1537, %v1535
      %v1580 = vpack.c.bf16 %v1538, %v1536
      %v1581 = vpack.c.bf16 %v1541, %v1539
      %v1582 = vpack.c.bf16 %v1542, %v1540
      %v1583 = vpack.c.bf16 %v1545, %v1543
      %v1584 = vpack.c.bf16 %v1546, %v1544
      %v1585 = vpack.c.bf16 %v1549, %v1547
      %v1586 = vpack.c.bf16 %v1550, %v1548
      %v1587 = vld [vmem:[%s5] sm:$0xff]
      %v1588 = vld [vmem:[%s5 + $0x8] sm:$0xff]
      %v1589 = vld [vmem:[%s5 + $0x10] sm:$0xff]
      %v1590 = vld [vmem:[%s5 + $0x18] sm:$0xff]
      %1592 = vset.pattern.permute.xlu0 0
      %1593 = vperm.xlu0 %1592, %v1587
      %v1594 = vpop.permute.xlu0 %1593
      %1597 = vset.pattern.permute.xlu0 0
      %1598 = vperm.xlu0 %1597, %v1588
      %v1599 = vpop.permute.xlu0 %1598
      %1602 = vset.pattern.permute.xlu0 0
      %1603 = vperm.xlu0 %1602, %v1589
      %v1604 = vpop.permute.xlu0 %1603
      %1607 = vset.pattern.permute.xlu0 0
      %1608 = vperm.xlu0 %1607, %v1590
      %v1609 = vpop.permute.xlu0 %1608
      %v1619 = vunpack.c.l.b16 %v1471
      %v1620 = vunpack.c.h.b16 %v1471
      %v1621 = vunpack.c.l.b16 %v1472
      %v1622 = vunpack.c.l.b16 %v1473
      %v1623 = vunpack.c.h.b16 %v1473
      %v1624 = vunpack.c.l.b16 %v1474
      %v1625 = vunpack.c.l.b16 %v1475
      %v1626 = vunpack.c.h.b16 %v1475
      %v1627 = vunpack.c.l.b16 %v1476
      %v1628 = vunpack.c.l.b16 %v1477
      %v1629 = vunpack.c.h.b16 %v1477
      %v1630 = vunpack.c.l.b16 %v1478
      %v1631 = vpack.c.b16 %v1622, %v1619
      %v1632 = vpack.c.b16 %v1623, %v1620
      %v1633 = vpack.c.b16 %v1624, %v1621
      %v1634 = vpack.c.b16 %v1628, %v1625
      %v1635 = vpack.c.b16 %v1629, %v1626
      %v1636 = vpack.c.b16 %v1630, %v1627
      %vm1641 = vcmask 261120
      %v1643 = vsel %vm1641, %v1633, 0
      %v1646 = vsel %vm1641, %v1636, 0
      %1648 = vmatpush.bf16.msra.mxu0 %v1565
      %1649 = vmatpush.bf16.msra.mxu0 %v1563
      %1650 = vmatpush.bf16.msra.mxu0 %v1561
      %1651 = vmatpush.bf16.msra.mxu0 %v1559
      %1652 = vmatpush.bf16.msra.mxu0 %v1557
      %1653 = vmatpush.bf16.msra.mxu0 %v1555
      %1654 = vmatpush.bf16.msra.mxu0 %v1553
      %1655 = vmatpush.bf16.msra.mxu0 %v1551
      %1656 = vmatmul.bf16.gmra.mxu0 %v1631
      %v1657 = vpop.f32.mrf.mxu0
      %v1658 = vadd.f32 %v1594, %v1657
      %v1659 = vpop.f32.mrf.mxu0
      %v1660 = vadd.f32 %v1599, %v1659
      %1661 = vmatmul.bf16.gmra.mxu0 %v1634
      %v1662 = vpop.f32.mrf.mxu0
      %v1663 = vadd.f32 %v1604, %v1662
      %v1664 = vpop.f32.mrf.mxu0
      %v1665 = vadd.f32 %v1609, %v1664
      %1666 = vdwg.mxu0
      %1667 = vmatpush.bf16.msra.mxu0 %v1581
      %1668 = vmatpush.bf16.msra.mxu0 %v1579
      %1669 = vmatpush.bf16.msra.mxu0 %v1577
      %1670 = vmatpush.bf16.msra.mxu0 %v1575
      %1671 = vmatpush.bf16.msra.mxu0 %v1573
      %1672 = vmatpush.bf16.msra.mxu0 %v1571
      %1673 = vmatpush.bf16.msra.mxu0 %v1569
      %1674 = vmatpush.bf16.msra.mxu0 %v1567
      %1675 = vmatmul.bf16.gmra.mxu0 %v1632
      %v1676 = vpop.f32.mrf.mxu0
      %v1677 = vadd.f32 %v1658, %v1676
      %v1678 = vpop.f32.mrf.mxu0
      %v1679 = vadd.f32 %v1660, %v1678
      %1680 = vmatmul.bf16.gmra.mxu0 %v1635
      %v1681 = vpop.f32.mrf.mxu0
      %v1682 = vadd.f32 %v1663, %v1681
      %v1683 = vpop.f32.mrf.mxu0
      %v1684 = vadd.f32 %v1665, %v1683
      %1685 = vdwg.mxu0
      %1686 = vmatpush.bf16.msra.mxu0 0
      %1687 = vmatpush.bf16.msra.mxu0 0
      %1688 = vmatpush.bf16.msra.mxu0 0
      %1689 = vmatpush.bf16.msra.mxu0 0
      %1690 = vmatpush.bf16.msra.mxu0 0
      %1691 = vmatpush.bf16.msra.mxu0 0
      %1692 = vmatpush.bf16.msra.mxu0 %v1585
      %1693 = vmatpush.bf16.msra.mxu0 %v1583
      %1694 = vmatmul.bf16.gmra.mxu0 %v1643
      %v1695 = vpop.f32.mrf.mxu0
      %v1696 = vadd.f32 %v1677, %v1695
      %v1697 = vpop.f32.mrf.mxu0
      %v1698 = vadd.f32 %v1679, %v1697
      %1699 = vmatmul.bf16.gmra.mxu0 %v1646
      %v1700 = vpop.f32.mrf.mxu0
      %v1701 = vadd.f32 %v1682, %v1700
      %v1702 = vpop.f32.mrf.mxu0
      %v1703 = vadd.f32 %v1684, %v1702
      %1704 = vdwg.mxu0
      %1705 = vmatpush.bf16.msra.mxu0 %v1566
      %1706 = vmatpush.bf16.msra.mxu0 %v1564
      %1707 = vmatpush.bf16.msra.mxu0 %v1562
      %1708 = vmatpush.bf16.msra.mxu0 %v1560
      %1709 = vmatpush.bf16.msra.mxu0 %v1558
      %1710 = vmatpush.bf16.msra.mxu0 %v1556
      %1711 = vmatpush.bf16.msra.mxu0 %v1554
      %1712 = vmatpush.bf16.msra.mxu0 %v1552
      %1713 = vmatmul.bf16.gmra.mxu0 %v1631
      %v1714 = vpop.f32.mrf.mxu0
      %v1715 = vadd.f32 %v1594, %v1714
      %v1716 = vpop.f32.mrf.mxu0
      %v1717 = vadd.f32 %v1599, %v1716
      %1718 = vmatmul.bf16.gmra.mxu0 %v1634
      %v1719 = vpop.f32.mrf.mxu0
      %v1720 = vadd.f32 %v1604, %v1719
      %v1721 = vpop.f32.mrf.mxu0
      %v1722 = vadd.f32 %v1609, %v1721
      %1723 = vdwg.mxu0
      %1724 = vmatpush.bf16.msra.mxu0 %v1582
      %1725 = vmatpush.bf16.msra.mxu0 %v1580
      %1726 = vmatpush.bf16.msra.mxu0 %v1578
      %1727 = vmatpush.bf16.msra.mxu0 %v1576
      %1728 = vmatpush.bf16.msra.mxu0 %v1574
      %1729 = vmatpush.bf16.msra.mxu0 %v1572
      %1730 = vmatpush.bf16.msra.mxu0 %v1570
      %1731 = vmatpush.bf16.msra.mxu0 %v1568
      %1732 = vmatmul.bf16.gmra.mxu0 %v1632
      %v1733 = vpop.f32.mrf.mxu0
      %v1734 = vadd.f32 %v1715, %v1733
      %v1735 = vpop.f32.mrf.mxu0
      %v1736 = vadd.f32 %v1717, %v1735
      %1737 = vmatmul.bf16.gmra.mxu0 %v1635
      %v1738 = vpop.f32.mrf.mxu0
      %v1739 = vadd.f32 %v1720, %v1738
      %v1740 = vpop.f32.mrf.mxu0
      %v1741 = vadd.f32 %v1722, %v1740
      %1742 = vdwg.mxu0
      %1743 = vmatpush.bf16.msra.mxu0 0
      %1744 = vmatpush.bf16.msra.mxu0 0
      %1745 = vmatpush.bf16.msra.mxu0 0
      %1746 = vmatpush.bf16.msra.mxu0 0
      %1747 = vmatpush.bf16.msra.mxu0 0
      %1748 = vmatpush.bf16.msra.mxu0 0
      %1749 = vmatpush.bf16.msra.mxu0 %v1586
      %1750 = vmatpush.bf16.msra.mxu0 %v1584
      %1751 = vmatmul.bf16.gmra.mxu0 %v1643
      %v1752 = vpop.f32.mrf.mxu0
      %v1753 = vadd.f32 %v1734, %v1752
      %v1754 = vpop.f32.mrf.mxu0
      %v1755 = vadd.f32 %v1736, %v1754
      %1756 = vmatmul.bf16.gmra.mxu0 %v1646
      %v1757 = vpop.f32.mrf.mxu0
      %v1758 = vadd.f32 %v1739, %v1757
      %v1759 = vpop.f32.mrf.mxu0
      %v1760 = vadd.f32 %v1741, %v1759
      %1761 = vdwg.mxu0
      %v1762 = vmax.f32 %v1696, 0.0
      %v1763 = vmax.f32 %v1753, 0.0
      %v1764 = vmax.f32 %v1698, 0.0
      %v1765 = vmax.f32 %v1755, 0.0
      %v1766 = vmax.f32 %v1701, 0.0
      %v1767 = vmax.f32 %v1758, 0.0
      %v1768 = vmax.f32 %v1703, 0.0
      %v1769 = vmax.f32 %v1760, 0.0
      %1770 = vst [vmem:[#allocation2 + $0x8] sm:$0xff] %v1762
      %1771 = vst [vmem:[#allocation2 + $0x10] sm:$0xff] %v1763
      %1772 = vst [vmem:[#allocation2 + $0x28] sm:$0xff] %v1764
      %1773 = vst [vmem:[#allocation2 + $0x30] sm:$0xff] %v1765
      %1774 = vst [vmem:[#allocation2 + $0x48] sm:$0xff] %v1766
      %1775 = vst [vmem:[#allocation2 + $0x50] sm:$0xff] %v1767
      %1776 = vst [vmem:[#allocation2 + $0x68] sm:$0xff] %v1768
      %1777 = vst [vmem:[#allocation2 + $0x70] sm:$0xff] %v1769
      %v1778 = vld [vmem:[#allocation2] sm:$0xff]
      %v1779 = vld [vmem:[#allocation2 + $0x8] sm:$0xff]
      %v1780 = vld [vmem:[#allocation2 + $0x10] sm:$0xff]
      %v1781 = vld [vmem:[#allocation2 + $0x20] sm:$0xff]
      %v1782 = vld [vmem:[#allocation2 + $0x28] sm:$0xff]
      %v1783 = vld [vmem:[#allocation2 + $0x30] sm:$0xff]
      %v1784 = vld [vmem:[#allocation2 + $0x40] sm:$0xff]
      %v1785 = vld [vmem:[#allocation2 + $0x48] sm:$0xff]
      %v1786 = vld [vmem:[#allocation2 + $0x50] sm:$0xff]
      %v1787 = vld [vmem:[#allocation2 + $0x60] sm:$0xff]
      %v1788 = vld [vmem:[#allocation2 + $0x68] sm:$0xff]
      %v1789 = vld [vmem:[#allocation2 + $0x70] sm:$0xff]
      %v1790 = vmul.f32 %v1778, %v453
      %v1791 = vmul.f32 %v1779, %v457
      %v1792 = vmul.f32 %v1780, %v455
      %v1793 = vmul.f32 %v1781, %v453
      %v1794 = vmul.f32 %v1782, %v457
      %v1795 = vmul.f32 %v1783, %v455
      %v1796 = vmul.f32 %v1784, %v453
      %v1797 = vmul.f32 %v1785, %v457
      %v1798 = vmul.f32 %v1786, %v455
      %v1799 = vmul.f32 %v1787, %v453
      %v1800 = vmul.f32 %v1788, %v457
      %v1801 = vmul.f32 %v1789, %v455
      %1814 = vrot.lane.b32.xlu0 %v1790, 17
      %v1815 = vpop.permute.xlu0 %1814
      %1816 = vrot.lane.b32.xlu0 %v1791, 17
      %v1817 = vpop.permute.xlu0 %1816
      %1818 = vrot.lane.b32.xlu0 %v1792, 17
      %v1819 = vpop.permute.xlu0 %1818
      %1820 = vrot.lane.b32.xlu0 %v1793, 17
      %v1821 = vpop.permute.xlu0 %1820
      %1822 = vrot.lane.b32.xlu0 %v1794, 17
      %v1823 = vpop.permute.xlu0 %1822
      %1824 = vrot.lane.b32.xlu0 %v1795, 17
      %v1825 = vpop.permute.xlu0 %1824
      %1826 = vrot.lane.b32.xlu0 %v1796, 17
      %v1827 = vpop.permute.xlu0 %1826
      %1828 = vrot.lane.b32.xlu0 %v1797, 17
      %v1829 = vpop.permute.xlu0 %1828
      %1830 = vrot.lane.b32.xlu0 %v1798, 17
      %v1831 = vpop.permute.xlu0 %1830
      %1832 = vrot.lane.b32.xlu0 %v1799, 17
      %v1833 = vpop.permute.xlu0 %1832
      %1834 = vrot.lane.b32.xlu0 %v1800, 17
      %v1835 = vpop.permute.xlu0 %1834
      %1836 = vrot.lane.b32.xlu0 %v1801, 17
      %v1837 = vpop.permute.xlu0 %1836
      %v1838 = vsel %vm473, %v1815, %v1817
      %v1839 = vsel %vm473, %v1817, %v1819
      %v1840 = vsel %vm473, %v1821, %v1823
      %v1841 = vsel %vm473, %v1823, %v1825
      %v1842 = vsel %vm473, %v1827, %v1829
      %v1843 = vsel %vm473, %v1829, %v1831
      %v1844 = vsel %vm473, %v1833, %v1835
      %v1845 = vsel %vm473, %v1835, %v1837
      %1854 = vst [vmem:[#allocation3] sm:$0xff] %v1838
      %1855 = vst [vmem:[#allocation3 + $0x8] sm:$0xff] %v1839
      %1856 = vst [vmem:[#allocation3 + $0x10] sm:$0xff] %v1840
      %1857 = vst [vmem:[#allocation3 + $0x18] sm:$0xff] %v1841
      %1858 = vst [vmem:[#allocation3 + $0x20] sm:$0xff] %v1842
      %1859 = vst [vmem:[#allocation3 + $0x28] sm:$0xff] %v1843
      %1860 = vst [vmem:[#allocation3 + $0x30] sm:$0xff] %v1844
      %1861 = vst [vmem:[#allocation3 + $0x38] sm:$0xff] %v1845
      %v1862 = vld [vmem:[#allocation2] sm:$0xff]
      %v1863 = vld [vmem:[#allocation2 + $0x8] sm:$0xff]
      %v1864 = vld [vmem:[#allocation2 + $0x10] sm:$0xff]
      %v1865 = vld [vmem:[#allocation2 + $0x20] sm:$0xff]
      %v1866 = vld [vmem:[#allocation2 + $0x28] sm:$0xff]
      %v1867 = vld [vmem:[#allocation2 + $0x30] sm:$0xff]
      %v1868 = vld [vmem:[#allocation2 + $0x40] sm:$0xff]
      %v1869 = vld [vmem:[#allocation2 + $0x48] sm:$0xff]
      %v1870 = vld [vmem:[#allocation2 + $0x50] sm:$0xff]
      %v1871 = vld [vmem:[#allocation2 + $0x60] sm:$0xff]
      %v1872 = vld [vmem:[#allocation2 + $0x68] sm:$0xff]
      %v1873 = vld [vmem:[#allocation2 + $0x70] sm:$0xff]
      %1886 = vrot.lane.b32.xlu0 %v1862, 16
      %v1887 = vpop.permute.xlu0 %1886
      %1888 = vrot.lane.b32.xlu0 %v1863, 16
      %v1889 = vpop.permute.xlu0 %1888
      %1890 = vrot.lane.b32.xlu0 %v1864, 16
      %v1891 = vpop.permute.xlu0 %1890
      %1892 = vrot.lane.b32.xlu0 %v1865, 16
      %v1893 = vpop.permute.xlu0 %1892
      %1894 = vrot.lane.b32.xlu0 %v1866, 16
      %v1895 = vpop.permute.xlu0 %1894
      %1896 = vrot.lane.b32.xlu0 %v1867, 16
      %v1897 = vpop.permute.xlu0 %1896
      %1898 = vrot.lane.b32.xlu0 %v1868, 16
      %v1899 = vpop.permute.xlu0 %1898
      %1900 = vrot.lane.b32.xlu0 %v1869, 16
      %v1901 = vpop.permute.xlu0 %1900
      %1902 = vrot.lane.b32.xlu0 %v1870, 16
      %v1903 = vpop.permute.xlu0 %1902
      %1904 = vrot.lane.b32.xlu0 %v1871, 16
      %v1905 = vpop.permute.xlu0 %1904
      %1906 = vrot.lane.b32.xlu0 %v1872, 16
      %v1907 = vpop.permute.xlu0 %1906
      %1908 = vrot.lane.b32.xlu0 %v1873, 16
      %v1909 = vpop.permute.xlu0 %1908
      %v1910 = vsel %vm495, %v1887, %v1889
      %v1911 = vsel %vm495, %v1889, %v1891
      %v1912 = vsel %vm495, %v1893, %v1895
      %v1913 = vsel %vm495, %v1895, %v1897
      %v1914 = vsel %vm495, %v1899, %v1901
      %v1915 = vsel %vm495, %v1901, %v1903
      %v1916 = vsel %vm495, %v1905, %v1907
      %v1917 = vsel %vm495, %v1907, %v1909
      %1926 = vst [vmem:[#allocation3 + $0x40] sm:$0xff] %v1910
      %1927 = vst [vmem:[#allocation3 + $0x48] sm:$0xff] %v1911
      %1928 = vst [vmem:[#allocation3 + $0x50] sm:$0xff] %v1912
      %1929 = vst [vmem:[#allocation3 + $0x58] sm:$0xff] %v1913
      %1930 = vst [vmem:[#allocation3 + $0x60] sm:$0xff] %v1914
      %1931 = vst [vmem:[#allocation3 + $0x68] sm:$0xff] %v1915
      %1932 = vst [vmem:[#allocation3 + $0x70] sm:$0xff] %v1916
      %1933 = vst [vmem:[#allocation3 + $0x78] sm:$0xff] %v1917
      %v1934 = vld [vmem:[#allocation2] sm:$0xff]
      %v1935 = vld [vmem:[#allocation2 + $0x8] sm:$0xff]
      %v1936 = vld [vmem:[#allocation2 + $0x10] sm:$0xff]
      %v1937 = vld [vmem:[#allocation2 + $0x20] sm:$0xff]
      %v1938 = vld [vmem:[#allocation2 + $0x28] sm:$0xff]
      %v1939 = vld [vmem:[#allocation2 + $0x30] sm:$0xff]
      %v1940 = vld [vmem:[#allocation2 + $0x40] sm:$0xff]
      %v1941 = vld [vmem:[#allocation2 + $0x48] sm:$0xff]
      %v1942 = vld [vmem:[#allocation2 + $0x50] sm:$0xff]
      %v1943 = vld [vmem:[#allocation2 + $0x60] sm:$0xff]
      %v1944 = vld [vmem:[#allocation2 + $0x68] sm:$0xff]
      %v1945 = vld [vmem:[#allocation2 + $0x70] sm:$0xff]
      %v1946 = vmul.f32 %v1934, %v508
      %v1947 = vmul.f32 %v1935, %v512
      %v1948 = vmul.f32 %v1936, %v510
      %v1949 = vmul.f32 %v1937, %v508
      %v1950 = vmul.f32 %v1938, %v512
      %v1951 = vmul.f32 %v1939, %v510
      %v1952 = vmul.f32 %v1940, %v508
      %v1953 = vmul.f32 %v1941, %v512
      %v1954 = vmul.f32 %v1942, %v510
      %v1955 = vmul.f32 %v1943, %v508
      %v1956 = vmul.f32 %v1944, %v512
      %v1957 = vmul.f32 %v1945, %v510
      %1970 = vrot.lane.b32.xlu0 %v1946, 15
      %v1971 = vpop.permute.xlu0 %1970
      %1972 = vrot.lane.b32.xlu0 %v1947, 15
      %v1973 = vpop.permute.xlu0 %1972
      %1974 = vrot.lane.b32.xlu0 %v1948, 15
      %v1975 = vpop.permute.xlu0 %1974
      %1976 = vrot.lane.b32.xlu0 %v1949, 15
      %v1977 = vpop.permute.xlu0 %1976
      %1978 = vrot.lane.b32.xlu0 %v1950, 15
      %v1979 = vpop.permute.xlu0 %1978
      %1980 = vrot.lane.b32.xlu0 %v1951, 15
      %v1981 = vpop.permute.xlu0 %1980
      %1982 = vrot.lane.b32.xlu0 %v1952, 15
      %v1983 = vpop.permute.xlu0 %1982
      %1984 = vrot.lane.b32.xlu0 %v1953, 15
      %v1985 = vpop.permute.xlu0 %1984
      %1986 = vrot.lane.b32.xlu0 %v1954, 15
      %v1987 = vpop.permute.xlu0 %1986
      %1988 = vrot.lane.b32.xlu0 %v1955, 15
      %v1989 = vpop.permute.xlu0 %1988
      %1990 = vrot.lane.b32.xlu0 %v1956, 15
      %v1991 = vpop.permute.xlu0 %1990
      %1992 = vrot.lane.b32.xlu0 %v1957, 15
      %v1993 = vpop.permute.xlu0 %1992
      %v1994 = vsel %vm528, %v1971, %v1973
      %v1995 = vsel %vm528, %v1973, %v1975
      %v1996 = vsel %vm528, %v1977, %v1979
      %v1997 = vsel %vm528, %v1979, %v1981
      %v1998 = vsel %vm528, %v1983, %v1985
      %v1999 = vsel %vm528, %v1985, %v1987
      %v2000 = vsel %vm528, %v1989, %v1991
      %v2001 = vsel %vm528, %v1991, %v1993
      %2010 = vst [vmem:[#allocation3 + $0x80] sm:$0xff] %v1994
      %2011 = vst [vmem:[#allocation3 + $0x88] sm:$0xff] %v1995
      %2012 = vst [vmem:[#allocation3 + $0x90] sm:$0xff] %v1996
      %2013 = vst [vmem:[#allocation3 + $0x98] sm:$0xff] %v1997
      %2014 = vst [vmem:[#allocation3 + $0xa0] sm:$0xff] %v1998
      %2015 = vst [vmem:[#allocation3 + $0xa8] sm:$0xff] %v1999
      %2016 = vst [vmem:[#allocation3 + $0xb0] sm:$0xff] %v2000
      %2017 = vst [vmem:[#allocation3 + $0xb8] sm:$0xff] %v2001
      %v2018 = vld [vmem:[#allocation2] sm:$0xff]
      %v2019 = vld [vmem:[#allocation2 + $0x8] sm:$0xff]
      %v2020 = vld [vmem:[#allocation2 + $0x10] sm:$0xff]
      %v2021 = vld [vmem:[#allocation2 + $0x20] sm:$0xff]
      %v2022 = vld [vmem:[#allocation2 + $0x28] sm:$0xff]
      %v2023 = vld [vmem:[#allocation2 + $0x30] sm:$0xff]
      %v2024 = vld [vmem:[#allocation2 + $0x40] sm:$0xff]
      %v2025 = vld [vmem:[#allocation2 + $0x48] sm:$0xff]
      %v2026 = vld [vmem:[#allocation2 + $0x50] sm:$0xff]
      %v2027 = vld [vmem:[#allocation2 + $0x60] sm:$0xff]
      %v2028 = vld [vmem:[#allocation2 + $0x68] sm:$0xff]
      %v2029 = vld [vmem:[#allocation2 + $0x70] sm:$0xff]
      %v2030 = vmul.f32 %v2018, %v539
      %v2031 = vmul.f32 %v2019, %v543
      %v2032 = vmul.f32 %v2020, %v541
      %v2033 = vmul.f32 %v2021, %v539
      %v2034 = vmul.f32 %v2022, %v543
      %v2035 = vmul.f32 %v2023, %v541
      %v2036 = vmul.f32 %v2024, %v539
      %v2037 = vmul.f32 %v2025, %v543
      %v2038 = vmul.f32 %v2026, %v541
      %v2039 = vmul.f32 %v2027, %v539
      %v2040 = vmul.f32 %v2028, %v543
      %v2041 = vmul.f32 %v2029, %v541
      %2054 = vrot.lane.b32.xlu0 %v2030, 1
      %v2055 = vpop.permute.xlu0 %2054
      %2056 = vrot.lane.b32.xlu0 %v2031, 1
      %v2057 = vpop.permute.xlu0 %2056
      %2058 = vrot.lane.b32.xlu0 %v2032, 1
      %v2059 = vpop.permute.xlu0 %2058
      %2060 = vrot.lane.b32.xlu0 %v2033, 1
      %v2061 = vpop.permute.xlu0 %2060
      %2062 = vrot.lane.b32.xlu0 %v2034, 1
      %v2063 = vpop.permute.xlu0 %2062
      %2064 = vrot.lane.b32.xlu0 %v2035, 1
      %v2065 = vpop.permute.xlu0 %2064
      %2066 = vrot.lane.b32.xlu0 %v2036, 1
      %v2067 = vpop.permute.xlu0 %2066
      %2068 = vrot.lane.b32.xlu0 %v2037, 1
      %v2069 = vpop.permute.xlu0 %2068
      %2070 = vrot.lane.b32.xlu0 %v2038, 1
      %v2071 = vpop.permute.xlu0 %2070
      %2072 = vrot.lane.b32.xlu0 %v2039, 1
      %v2073 = vpop.permute.xlu0 %2072
      %2074 = vrot.lane.b32.xlu0 %v2040, 1
      %v2075 = vpop.permute.xlu0 %2074
      %2076 = vrot.lane.b32.xlu0 %v2041, 1
      %v2077 = vpop.permute.xlu0 %2076
      %v2078 = vsel %vm562, %v2055, %v2057
      %v2079 = vsel %vm562, %v2057, %v2059
      %v2080 = vsel %vm562, %v2061, %v2063
      %v2081 = vsel %vm562, %v2063, %v2065
      %v2082 = vsel %vm562, %v2067, %v2069
      %v2083 = vsel %vm562, %v2069, %v2071
      %v2084 = vsel %vm562, %v2073, %v2075
      %v2085 = vsel %vm562, %v2075, %v2077
      %2094 = vst [vmem:[#allocation3 + $0xc0] sm:$0xff] %v2078
      %2095 = vst [vmem:[#allocation3 + $0xc8] sm:$0xff] %v2079
      %2096 = vst [vmem:[#allocation3 + $0xd0] sm:$0xff] %v2080
      %2097 = vst [vmem:[#allocation3 + $0xd8] sm:$0xff] %v2081
      %2098 = vst [vmem:[#allocation3 + $0xe0] sm:$0xff] %v2082
      %2099 = vst [vmem:[#allocation3 + $0xe8] sm:$0xff] %v2083
      %2100 = vst [vmem:[#allocation3 + $0xf0] sm:$0xff] %v2084
      %2101 = vst [vmem:[#allocation3 + $0xf8] sm:$0xff] %v2085
      %v2102 = vld [vmem:[#allocation2 + $0x8] sm:$0xff]
      %v2103 = vld [vmem:[#allocation2 + $0x10] sm:$0xff]
      %v2104 = vld [vmem:[#allocation2 + $0x28] sm:$0xff]
      %v2105 = vld [vmem:[#allocation2 + $0x30] sm:$0xff]
      %v2106 = vld [vmem:[#allocation2 + $0x48] sm:$0xff]
      %v2107 = vld [vmem:[#allocation2 + $0x50] sm:$0xff]
      %v2108 = vld [vmem:[#allocation2 + $0x68] sm:$0xff]
      %v2109 = vld [vmem:[#allocation2 + $0x70] sm:$0xff]
      %2110 = vst [vmem:[#allocation3 + $0x100] sm:$0xff] %v2102
      %2111 = vst [vmem:[#allocation3 + $0x108] sm:$0xff] %v2103
      %2112 = vst [vmem:[#allocation3 + $0x110] sm:$0xff] %v2104
      %2113 = vst [vmem:[#allocation3 + $0x118] sm:$0xff] %v2105
      %2114 = vst [vmem:[#allocation3 + $0x120] sm:$0xff] %v2106
      %2115 = vst [vmem:[#allocation3 + $0x128] sm:$0xff] %v2107
      %2116 = vst [vmem:[#allocation3 + $0x130] sm:$0xff] %v2108
      %2117 = vst [vmem:[#allocation3 + $0x138] sm:$0xff] %v2109
      %v2118 = vld [vmem:[#allocation2 + $0x8] sm:$0xff]
      %v2119 = vld [vmem:[#allocation2 + $0x10] sm:$0xff]
      %v2120 = vld [vmem:[#allocation2 + $0x18] sm:$0xff]
      %v2121 = vld [vmem:[#allocation2 + $0x28] sm:$0xff]
      %v2122 = vld [vmem:[#allocation2 + $0x30] sm:$0xff]
      %v2123 = vld [vmem:[#allocation2 + $0x38] sm:$0xff]
      %v2124 = vld [vmem:[#allocation2 + $0x48] sm:$0xff]
      %v2125 = vld [vmem:[#allocation2 + $0x50] sm:$0xff]
      %v2126 = vld [vmem:[#allocation2 + $0x58] sm:$0xff]
      %v2127 = vld [vmem:[#allocation2 + $0x68] sm:$0xff]
      %v2128 = vld [vmem:[#allocation2 + $0x70] sm:$0xff]
      %v2129 = vld [vmem:[#allocation2 + $0x78] sm:$0xff]
      %v2130 = vmul.f32 %v2118, %v577
      %v2131 = vmul.f32 %v2119, %v580
      %v2132 = vmul.f32 %v2120, %v579
      %v2133 = vmul.f32 %v2121, %v577
      %v2134 = vmul.f32 %v2122, %v580
      %v2135 = vmul.f32 %v2123, %v579
      %v2136 = vmul.f32 %v2124, %v577
      %v2137 = vmul.f32 %v2125, %v580
      %v2138 = vmul.f32 %v2126, %v579
      %v2139 = vmul.f32 %v2127, %v577
      %v2140 = vmul.f32 %v2128, %v580
      %v2141 = vmul.f32 %v2129, %v579
      %2154 = vrot.lane.b32.xlu0 %v2130, 127
      %v2155 = vpop.permute.xlu0 %2154
      %2156 = vrot.lane.b32.xlu0 %v2131, 127
      %v2157 = vpop.permute.xlu0 %2156
      %2158 = vrot.lane.b32.xlu0 %v2132, 127
      %v2159 = vpop.permute.xlu0 %2158
      %2160 = vrot.lane.b32.xlu0 %v2133, 127
      %v2161 = vpop.permute.xlu0 %2160
      %2162 = vrot.lane.b32.xlu0 %v2134, 127
      %v2163 = vpop.permute.xlu0 %2162
      %2164 = vrot.lane.b32.xlu0 %v2135, 127
      %v2165 = vpop.permute.xlu0 %2164
      %2166 = vrot.lane.b32.xlu0 %v2136, 127
      %v2167 = vpop.permute.xlu0 %2166
      %2168 = vrot.lane.b32.xlu0 %v2137, 127
      %v2169 = vpop.permute.xlu0 %2168
      %2170 = vrot.lane.b32.xlu0 %v2138, 127
      %v2171 = vpop.permute.xlu0 %2170
      %2172 = vrot.lane.b32.xlu0 %v2139, 127
      %v2173 = vpop.permute.xlu0 %2172
      %2174 = vrot.lane.b32.xlu0 %v2140, 127
      %v2175 = vpop.permute.xlu0 %2174
      %2176 = vrot.lane.b32.xlu0 %v2141, 127
      %v2177 = vpop.permute.xlu0 %2176
      %v2178 = vsel %vm542, %v2155, %v2157
      %v2179 = vsel %vm542, %v2157, %v2159
      %v2180 = vsel %vm542, %v2161, %v2163
      %v2181 = vsel %vm542, %v2163, %v2165
      %v2182 = vsel %vm542, %v2167, %v2169
      %v2183 = vsel %vm542, %v2169, %v2171
      %v2184 = vsel %vm542, %v2173, %v2175
      %v2185 = vsel %vm542, %v2175, %v2177
      %2194 = vst [vmem:[#allocation3 + $0x140] sm:$0xff] %v2178
      %2195 = vst [vmem:[#allocation3 + $0x148] sm:$0xff] %v2179
      %2196 = vst [vmem:[#allocation3 + $0x150] sm:$0xff] %v2180
      %2197 = vst [vmem:[#allocation3 + $0x158] sm:$0xff] %v2181
      %2198 = vst [vmem:[#allocation3 + $0x160] sm:$0xff] %v2182
      %2199 = vst [vmem:[#allocation3 + $0x168] sm:$0xff] %v2183
      %2200 = vst [vmem:[#allocation3 + $0x170] sm:$0xff] %v2184
      %2201 = vst [vmem:[#allocation3 + $0x178] sm:$0xff] %v2185
      %v2202 = vld [vmem:[#allocation2 + $0x8] sm:$0xff]
      %v2203 = vld [vmem:[#allocation2 + $0x10] sm:$0xff]
      %v2204 = vld [vmem:[#allocation2 + $0x18] sm:$0xff]
      %v2205 = vld [vmem:[#allocation2 + $0x28] sm:$0xff]
      %v2206 = vld [vmem:[#allocation2 + $0x30] sm:$0xff]
      %v2207 = vld [vmem:[#allocation2 + $0x38] sm:$0xff]
      %v2208 = vld [vmem:[#allocation2 + $0x48] sm:$0xff]
      %v2209 = vld [vmem:[#allocation2 + $0x50] sm:$0xff]
      %v2210 = vld [vmem:[#allocation2 + $0x58] sm:$0xff]
      %v2211 = vld [vmem:[#allocation2 + $0x68] sm:$0xff]
      %v2212 = vld [vmem:[#allocation2 + $0x70] sm:$0xff]
      %v2213 = vld [vmem:[#allocation2 + $0x78] sm:$0xff]
      %v2214 = vmul.f32 %v2202, %v609
      %v2215 = vmul.f32 %v2203, %v612
      %v2216 = vmul.f32 %v2204, %v611
      %v2217 = vmul.f32 %v2205, %v609
      %v2218 = vmul.f32 %v2206, %v612
      %v2219 = vmul.f32 %v2207, %v611
      %v2220 = vmul.f32 %v2208, %v609
      %v2221 = vmul.f32 %v2209, %v612
      %v2222 = vmul.f32 %v2210, %v611
      %v2223 = vmul.f32 %v2211, %v609
      %v2224 = vmul.f32 %v2212, %v612
      %v2225 = vmul.f32 %v2213, %v611
      %2238 = vrot.lane.b32.xlu0 %v2214, 113
      %v2239 = vpop.permute.xlu0 %2238
      %2240 = vrot.lane.b32.xlu0 %v2215, 113
      %v2241 = vpop.permute.xlu0 %2240
      %2242 = vrot.lane.b32.xlu0 %v2216, 113
      %v2243 = vpop.permute.xlu0 %2242
      %2244 = vrot.lane.b32.xlu0 %v2217, 113
      %v2245 = vpop.permute.xlu0 %2244
      %2246 = vrot.lane.b32.xlu0 %v2218, 113
      %v2247 = vpop.permute.xlu0 %2246
      %2248 = vrot.lane.b32.xlu0 %v2219, 113
      %v2249 = vpop.permute.xlu0 %2248
      %2250 = vrot.lane.b32.xlu0 %v2220, 113
      %v2251 = vpop.permute.xlu0 %2250
      %2252 = vrot.lane.b32.xlu0 %v2221, 113
      %v2253 = vpop.permute.xlu0 %2252
      %2254 = vrot.lane.b32.xlu0 %v2222, 113
      %v2255 = vpop.permute.xlu0 %2254
      %2256 = vrot.lane.b32.xlu0 %v2223, 113
      %v2257 = vpop.permute.xlu0 %2256
      %2258 = vrot.lane.b32.xlu0 %v2224, 113
      %v2259 = vpop.permute.xlu0 %2258
      %2260 = vrot.lane.b32.xlu0 %v2225, 113
      %v2261 = vpop.permute.xlu0 %2260
      %v2262 = vsel %vm511, %v2239, %v2241
      %v2263 = vsel %vm511, %v2241, %v2243
      %v2264 = vsel %vm511, %v2245, %v2247
      %v2265 = vsel %vm511, %v2247, %v2249
      %v2266 = vsel %vm511, %v2251, %v2253
      %v2267 = vsel %vm511, %v2253, %v2255
      %v2268 = vsel %vm511, %v2257, %v2259
      %v2269 = vsel %vm511, %v2259, %v2261
      %2278 = vst [vmem:[#allocation3 + $0x180] sm:$0xff] %v2262
      %2279 = vst [vmem:[#allocation3 + $0x188] sm:$0xff] %v2263
      %2280 = vst [vmem:[#allocation3 + $0x190] sm:$0xff] %v2264
      %2281 = vst [vmem:[#allocation3 + $0x198] sm:$0xff] %v2265
      %2282 = vst [vmem:[#allocation3 + $0x1a0] sm:$0xff] %v2266
      %2283 = vst [vmem:[#allocation3 + $0x1a8] sm:$0xff] %v2267
      %2284 = vst [vmem:[#allocation3 + $0x1b0] sm:$0xff] %v2268
      %2285 = vst [vmem:[#allocation3 + $0x1b8] sm:$0xff] %v2269
      %v2286 = vld [vmem:[#allocation2 + $0x8] sm:$0xff]
      %v2287 = vld [vmem:[#allocation2 + $0x10] sm:$0xff]
      %v2288 = vld [vmem:[#allocation2 + $0x18] sm:$0xff]
      %v2289 = vld [vmem:[#allocation2 + $0x28] sm:$0xff]
      %v2290 = vld [vmem:[#allocation2 + $0x30] sm:$0xff]
      %v2291 = vld [vmem:[#allocation2 + $0x38] sm:$0xff]
      %v2292 = vld [vmem:[#allocation2 + $0x48] sm:$0xff]
      %v2293 = vld [vmem:[#allocation2 + $0x50] sm:$0xff]
      %v2294 = vld [vmem:[#allocation2 + $0x58] sm:$0xff]
      %v2295 = vld [vmem:[#allocation2 + $0x68] sm:$0xff]
      %v2296 = vld [vmem:[#allocation2 + $0x70] sm:$0xff]
      %v2297 = vld [vmem:[#allocation2 + $0x78] sm:$0xff]
      %2310 = vrot.lane.b32.xlu0 %v2286, 112
      %v2311 = vpop.permute.xlu0 %2310
      %2312 = vrot.lane.b32.xlu0 %v2287, 112
      %v2313 = vpop.permute.xlu0 %2312
      %2314 = vrot.lane.b32.xlu0 %v2288, 112
      %v2315 = vpop.permute.xlu0 %2314
      %2316 = vrot.lane.b32.xlu0 %v2289, 112
      %v2317 = vpop.permute.xlu0 %2316
      %2318 = vrot.lane.b32.xlu0 %v2290, 112
      %v2319 = vpop.permute.xlu0 %2318
      %2320 = vrot.lane.b32.xlu0 %v2291, 112
      %v2321 = vpop.permute.xlu0 %2320
      %2322 = vrot.lane.b32.xlu0 %v2292, 112
      %v2323 = vpop.permute.xlu0 %2322
      %2324 = vrot.lane.b32.xlu0 %v2293, 112
      %v2325 = vpop.permute.xlu0 %2324
      %2326 = vrot.lane.b32.xlu0 %v2294, 112
      %v2327 = vpop.permute.xlu0 %2326
      %2328 = vrot.lane.b32.xlu0 %v2295, 112
      %v2329 = vpop.permute.xlu0 %2328
      %2330 = vrot.lane.b32.xlu0 %v2296, 112
      %v2331 = vpop.permute.xlu0 %2330
      %2332 = vrot.lane.b32.xlu0 %v2297, 112
      %v2333 = vpop.permute.xlu0 %2332
      %v2334 = vsel %vm649, %v2311, %v2313
      %v2335 = vsel %vm649, %v2313, %v2315
      %v2336 = vsel %vm649, %v2317, %v2319
      %v2337 = vsel %vm649, %v2319, %v2321
      %v2338 = vsel %vm649, %v2323, %v2325
      %v2339 = vsel %vm649, %v2325, %v2327
      %v2340 = vsel %vm649, %v2329, %v2331
      %v2341 = vsel %vm649, %v2331, %v2333
      %2350 = vst [vmem:[#allocation3 + $0x1c0] sm:$0xff] %v2334
      %2351 = vst [vmem:[#allocation3 + $0x1c8] sm:$0xff] %v2335
      %2352 = vst [vmem:[#allocation3 + $0x1d0] sm:$0xff] %v2336
      %2353 = vst [vmem:[#allocation3 + $0x1d8] sm:$0xff] %v2337
      %2354 = vst [vmem:[#allocation3 + $0x1e0] sm:$0xff] %v2338
      %2355 = vst [vmem:[#allocation3 + $0x1e8] sm:$0xff] %v2339
      %2356 = vst [vmem:[#allocation3 + $0x1f0] sm:$0xff] %v2340
      %2357 = vst [vmem:[#allocation3 + $0x1f8] sm:$0xff] %v2341
      %v2358 = vld [vmem:[#allocation2 + $0x8] sm:$0xff]
      %v2359 = vld [vmem:[#allocation2 + $0x10] sm:$0xff]
      %v2360 = vld [vmem:[#allocation2 + $0x18] sm:$0xff]
      %v2361 = vld [vmem:[#allocation2 + $0x28] sm:$0xff]
      %v2362 = vld [vmem:[#allocation2 + $0x30] sm:$0xff]
      %v2363 = vld [vmem:[#allocation2 + $0x38] sm:$0xff]
      %v2364 = vld [vmem:[#allocation2 + $0x48] sm:$0xff]
      %v2365 = vld [vmem:[#allocation2 + $0x50] sm:$0xff]
      %v2366 = vld [vmem:[#allocation2 + $0x58] sm:$0xff]
      %v2367 = vld [vmem:[#allocation2 + $0x68] sm:$0xff]
      %v2368 = vld [vmem:[#allocation2 + $0x70] sm:$0xff]
      %v2369 = vld [vmem:[#allocation2 + $0x78] sm:$0xff]
      %v2370 = vmul.f32 %v2358, %v660
      %v2371 = vmul.f32 %v2359, %v663
      %v2372 = vmul.f32 %v2360, %v662
      %v2373 = vmul.f32 %v2361, %v660
      %v2374 = vmul.f32 %v2362, %v663
      %v2375 = vmul.f32 %v2363, %v662
      %v2376 = vmul.f32 %v2364, %v660
      %v2377 = vmul.f32 %v2365, %v663
      %v2378 = vmul.f32 %v2366, %v662
      %v2379 = vmul.f32 %v2367, %v660
      %v2380 = vmul.f32 %v2368, %v663
      %v2381 = vmul.f32 %v2369, %v662
      %2394 = vrot.lane.b32.xlu0 %v2370, 111
      %v2395 = vpop.permute.xlu0 %2394
      %2396 = vrot.lane.b32.xlu0 %v2371, 111
      %v2397 = vpop.permute.xlu0 %2396
      %2398 = vrot.lane.b32.xlu0 %v2372, 111
      %v2399 = vpop.permute.xlu0 %2398
      %2400 = vrot.lane.b32.xlu0 %v2373, 111
      %v2401 = vpop.permute.xlu0 %2400
      %2402 = vrot.lane.b32.xlu0 %v2374, 111
      %v2403 = vpop.permute.xlu0 %2402
      %2404 = vrot.lane.b32.xlu0 %v2375, 111
      %v2405 = vpop.permute.xlu0 %2404
      %2406 = vrot.lane.b32.xlu0 %v2376, 111
      %v2407 = vpop.permute.xlu0 %2406
      %2408 = vrot.lane.b32.xlu0 %v2377, 111
      %v2409 = vpop.permute.xlu0 %2408
      %2410 = vrot.lane.b32.xlu0 %v2378, 111
      %v2411 = vpop.permute.xlu0 %2410
      %2412 = vrot.lane.b32.xlu0 %v2379, 111
      %v2413 = vpop.permute.xlu0 %2412
      %2414 = vrot.lane.b32.xlu0 %v2380, 111
      %v2415 = vpop.permute.xlu0 %2414
      %2416 = vrot.lane.b32.xlu0 %v2381, 111
      %v2417 = vpop.permute.xlu0 %2416
      %v2418 = vsel %vm456, %v2395, %v2397
      %v2419 = vsel %vm456, %v2397, %v2399
      %v2420 = vsel %vm456, %v2401, %v2403
      %v2421 = vsel %vm456, %v2403, %v2405
      %v2422 = vsel %vm456, %v2407, %v2409
      %v2423 = vsel %vm456, %v2409, %v2411
      %v2424 = vsel %vm456, %v2413, %v2415
      %v2425 = vsel %vm456, %v2415, %v2417
      %2434 = vst [vmem:[#allocation3 + $0x200] sm:$0xff] %v2418
      %2435 = vst [vmem:[#allocation3 + $0x208] sm:$0xff] %v2419
      %2436 = vst [vmem:[#allocation3 + $0x210] sm:$0xff] %v2420
      %2437 = vst [vmem:[#allocation3 + $0x218] sm:$0xff] %v2421
      %2438 = vst [vmem:[#allocation3 + $0x220] sm:$0xff] %v2422
      %2439 = vst [vmem:[#allocation3 + $0x228] sm:$0xff] %v2423
      %2440 = vst [vmem:[#allocation3 + $0x230] sm:$0xff] %v2424
      %2441 = vst [vmem:[#allocation3 + $0x238] sm:$0xff] %v2425
      %v2442 = vld [vmem:[%s6] sm:$0xff]
      %v2443 = vld [vmem:[%s6 + $0x8] sm:$0xf]
      %v2444 = vld [vmem:[%s6 + $0xc] sm:$0xff]
      %v2445 = vld [vmem:[%s6 + $0x14] sm:$0xf]
      %v2446 = vld [vmem:[%s6 + $0x18] sm:$0xff]
      %v2447 = vld [vmem:[%s6 + $0x20] sm:$0xf]
      %v2448 = vld [vmem:[%s6 + $0x24] sm:$0xff]
      %v2449 = vld [vmem:[%s6 + $0x2c] sm:$0xf]
      %v2450 = vld [vmem:[#allocation3] sm:$0xff]
      %v2451 = vld [vmem:[#allocation3 + $0x8] sm:$0xff]
      %v2452 = vld [vmem:[#allocation3 + $0x10] sm:$0xff]
      %v2453 = vld [vmem:[#allocation3 + $0x18] sm:$0xff]
      %v2454 = vld [vmem:[#allocation3 + $0x20] sm:$0xff]
      %v2455 = vld [vmem:[#allocation3 + $0x28] sm:$0xff]
      %v2456 = vld [vmem:[#allocation3 + $0x30] sm:$0xff]
      %v2457 = vld [vmem:[#allocation3 + $0x38] sm:$0xff]
      %v2458 = vld [vmem:[#allocation3 + $0x40] sm:$0xff]
      %v2459 = vld [vmem:[#allocation3 + $0x48] sm:$0xff]
      %v2460 = vld [vmem:[#allocation3 + $0x50] sm:$0xff]
      %v2461 = vld [vmem:[#allocation3 + $0x58] sm:$0xff]
      %v2462 = vld [vmem:[#allocation3 + $0x60] sm:$0xff]
      %v2463 = vld [vmem:[#allocation3 + $0x68] sm:$0xff]
      %v2464 = vld [vmem:[#allocation3 + $0x70] sm:$0xff]
      %v2465 = vld [vmem:[#allocation3 + $0x78] sm:$0xff]
      %v2466 = vld [vmem:[#allocation3 + $0x80] sm:$0xff]
      %v2467 = vld [vmem:[#allocation3 + $0x88] sm:$0xff]
      %v2468 = vld [vmem:[#allocation3 + $0x90] sm:$0xff]
      %v2469 = vld [vmem:[#allocation3 + $0x98] sm:$0xff]
      %v2470 = vld [vmem:[#allocation3 + $0xa0] sm:$0xff]
      %v2471 = vld [vmem:[#allocation3 + $0xa8] sm:$0xff]
      %v2472 = vld [vmem:[#allocation3 + $0xb0] sm:$0xff]
      %v2473 = vld [vmem:[#allocation3 + $0xb8] sm:$0xff]
      %v2474 = vld [vmem:[#allocation3 + $0xc0] sm:$0xff]
      %v2475 = vld [vmem:[#allocation3 + $0xc8] sm:$0xff]
      %v2476 = vld [vmem:[#allocation3 + $0xd0] sm:$0xff]
      %v2477 = vld [vmem:[#allocation3 + $0xd8] sm:$0xff]
      %v2478 = vld [vmem:[#allocation3 + $0xe0] sm:$0xff]
      %v2479 = vld [vmem:[#allocation3 + $0xe8] sm:$0xff]
      %v2480 = vld [vmem:[#allocation3 + $0xf0] sm:$0xff]
      %v2481 = vld [vmem:[#allocation3 + $0xf8] sm:$0xff]
      %v2482 = vld [vmem:[#allocation3 + $0x100] sm:$0xff]
      %v2483 = vld [vmem:[#allocation3 + $0x108] sm:$0xff]
      %v2484 = vld [vmem:[#allocation3 + $0x110] sm:$0xff]
      %v2485 = vld [vmem:[#allocation3 + $0x118] sm:$0xff]
      %v2486 = vld [vmem:[#allocation3 + $0x120] sm:$0xff]
      %v2487 = vld [vmem:[#allocation3 + $0x128] sm:$0xff]
      %v2488 = vld [vmem:[#allocation3 + $0x130] sm:$0xff]
      %v2489 = vld [vmem:[#allocation3 + $0x138] sm:$0xff]
      %v2490 = vld [vmem:[#allocation3 + $0x140] sm:$0xff]
      %v2491 = vld [vmem:[#allocation3 + $0x148] sm:$0xff]
      %v2492 = vld [vmem:[#allocation3 + $0x150] sm:$0xff]
      %v2493 = vld [vmem:[#allocation3 + $0x158] sm:$0xff]
      %v2494 = vld [vmem:[#allocation3 + $0x160] sm:$0xff]
      %v2495 = vld [vmem:[#allocation3 + $0x168] sm:$0xff]
      %v2496 = vld [vmem:[#allocation3 + $0x170] sm:$0xff]
      %v2497 = vld [vmem:[#allocation3 + $0x178] sm:$0xff]
      %v2498 = vld [vmem:[#allocation3 + $0x180] sm:$0xff]
      %v2499 = vld [vmem:[#allocation3 + $0x188] sm:$0xff]
      %v2500 = vld [vmem:[#allocation3 + $0x190] sm:$0xff]
      %v2501 = vld [vmem:[#allocation3 + $0x198] sm:$0xff]
      %v2502 = vld [vmem:[#allocation3 + $0x1a0] sm:$0xff]
      %v2503 = vld [vmem:[#allocation3 + $0x1a8] sm:$0xff]
      %v2504 = vld [vmem:[#allocation3 + $0x1b0] sm:$0xff]
      %v2505 = vld [vmem:[#allocation3 + $0x1b8] sm:$0xff]
      %v2506 = vld [vmem:[#allocation3 + $0x1c0] sm:$0xff]
      %v2507 = vld [vmem:[#allocation3 + $0x1c8] sm:$0xff]
      %v2508 = vld [vmem:[#allocation3 + $0x1d0] sm:$0xff]
      %v2509 = vld [vmem:[#allocation3 + $0x1d8] sm:$0xff]
      %v2510 = vld [vmem:[#allocation3 + $0x1e0] sm:$0xff]
      %v2511 = vld [vmem:[#allocation3 + $0x1e8] sm:$0xff]
      %v2512 = vld [vmem:[#allocation3 + $0x1f0] sm:$0xff]
      %v2513 = vld [vmem:[#allocation3 + $0x1f8] sm:$0xff]
      %v2514 = vld [vmem:[#allocation3 + $0x200] sm:$0xff]
      %v2515 = vld [vmem:[#allocation3 + $0x208] sm:$0xff]
      %v2516 = vld [vmem:[#allocation3 + $0x210] sm:$0xff]
      %v2517 = vld [vmem:[#allocation3 + $0x218] sm:$0xff]
      %v2518 = vld [vmem:[#allocation3 + $0x220] sm:$0xff]
      %v2519 = vld [vmem:[#allocation3 + $0x228] sm:$0xff]
      %v2520 = vld [vmem:[#allocation3 + $0x230] sm:$0xff]
      %v2521 = vld [vmem:[#allocation3 + $0x238] sm:$0xff]
      %v2522 = vpack.c.bf16 %v2452, %v2450
      %v2523 = vpack.c.bf16 %v2453, %v2451
      %v2524 = vpack.c.bf16 %v2456, %v2454
      %v2525 = vpack.c.bf16 %v2457, %v2455
      %v2526 = vpack.c.bf16 %v2460, %v2458
      %v2527 = vpack.c.bf16 %v2461, %v2459
      %v2528 = vpack.c.bf16 %v2464, %v2462
      %v2529 = vpack.c.bf16 %v2465, %v2463
      %v2530 = vpack.c.bf16 %v2468, %v2466
      %v2531 = vpack.c.bf16 %v2469, %v2467
      %v2532 = vpack.c.bf16 %v2472, %v2470
      %v2533 = vpack.c.bf16 %v2473, %v2471
      %v2534 = vpack.c.bf16 %v2476, %v2474
      %v2535 = vpack.c.bf16 %v2477, %v2475
      %v2536 = vpack.c.bf16 %v2480, %v2478
      %v2537 = vpack.c.bf16 %v2481, %v2479
      %v2538 = vpack.c.bf16 %v2484, %v2482
      %v2539 = vpack.c.bf16 %v2485, %v2483
      %v2540 = vpack.c.bf16 %v2488, %v2486
      %v2541 = vpack.c.bf16 %v2489, %v2487
      %v2542 = vpack.c.bf16 %v2492, %v2490
      %v2543 = vpack.c.bf16 %v2493, %v2491
      %v2544 = vpack.c.bf16 %v2496, %v2494
      %v2545 = vpack.c.bf16 %v2497, %v2495
      %v2546 = vpack.c.bf16 %v2500, %v2498
      %v2547 = vpack.c.bf16 %v2501, %v2499
      %v2548 = vpack.c.bf16 %v2504, %v2502
      %v2549 = vpack.c.bf16 %v2505, %v2503
      %v2550 = vpack.c.bf16 %v2508, %v2506
      %v2551 = vpack.c.bf16 %v2509, %v2507
      %v2552 = vpack.c.bf16 %v2512, %v2510
      %v2553 = vpack.c.bf16 %v2513, %v2511
      %v2554 = vpack.c.bf16 %v2516, %v2514
      %v2555 = vpack.c.bf16 %v2517, %v2515
      %v2556 = vpack.c.bf16 %v2520, %v2518
      %v2557 = vpack.c.bf16 %v2521, %v2519
      %v2558 = vld [vmem:[%s7] sm:$0xff]
      %v2559 = vld [vmem:[%s7 + $0x8] sm:$0xff]
      %v2560 = vld [vmem:[%s7 + $0x10] sm:$0xff]
      %v2561 = vld [vmem:[%s7 + $0x18] sm:$0xff]
      %2563 = vset.pattern.permute.xlu0 0
      %2564 = vperm.xlu0 %2563, %v2558
      %v2565 = vpop.permute.xlu0 %2564
      %2568 = vset.pattern.permute.xlu0 0
      %2569 = vperm.xlu0 %2568, %v2559
      %v2570 = vpop.permute.xlu0 %2569
      %2573 = vset.pattern.permute.xlu0 0
      %2574 = vperm.xlu0 %2573, %v2560
      %v2575 = vpop.permute.xlu0 %2574
      %2578 = vset.pattern.permute.xlu0 0
      %2579 = vperm.xlu0 %2578, %v2561
      %v2580 = vpop.permute.xlu0 %2579
      %v2590 = vunpack.c.l.b16 %v2442
      %v2591 = vunpack.c.h.b16 %v2442
      %v2592 = vunpack.c.l.b16 %v2443
      %v2593 = vunpack.c.l.b16 %v2444
      %v2594 = vunpack.c.h.b16 %v2444
      %v2595 = vunpack.c.l.b16 %v2445
      %v2596 = vunpack.c.l.b16 %v2446
      %v2597 = vunpack.c.h.b16 %v2446
      %v2598 = vunpack.c.l.b16 %v2447
      %v2599 = vunpack.c.l.b16 %v2448
      %v2600 = vunpack.c.h.b16 %v2448
      %v2601 = vunpack.c.l.b16 %v2449
      %v2602 = vpack.c.b16 %v2593, %v2590
      %v2603 = vpack.c.b16 %v2594, %v2591
      %v2604 = vpack.c.b16 %v2595, %v2592
      %v2605 = vpack.c.b16 %v2599, %v2596
      %v2606 = vpack.c.b16 %v2600, %v2597
      %v2607 = vpack.c.b16 %v2601, %v2598
      %v2613 = vsel %vm1641, %v2604, 0
      %v2616 = vsel %vm1641, %v2607, 0
      %2618 = vmatpush.bf16.msra.mxu0 %v2536
      %2619 = vmatpush.bf16.msra.mxu0 %v2534
      %2620 = vmatpush.bf16.msra.mxu0 %v2532
      %2621 = vmatpush.bf16.msra.mxu0 %v2530
      %2622 = vmatpush.bf16.msra.mxu0 %v2528
      %2623 = vmatpush.bf16.msra.mxu0 %v2526
      %2624 = vmatpush.bf16.msra.mxu0 %v2524
      %2625 = vmatpush.bf16.msra.mxu0 %v2522
      %2626 = vmatmul.bf16.gmra.mxu0 %v2602
      %v2627 = vpop.f32.mrf.mxu0
      %v2628 = vadd.f32 %v2565, %v2627
      %v2629 = vpop.f32.mrf.mxu0
      %v2630 = vadd.f32 %v2570, %v2629
      %2631 = vmatmul.bf16.gmra.mxu0 %v2605
      %v2632 = vpop.f32.mrf.mxu0
      %v2633 = vadd.f32 %v2575, %v2632
      %v2634 = vpop.f32.mrf.mxu0
      %v2635 = vadd.f32 %v2580, %v2634
      %2636 = vdwg.mxu0
      %2637 = vmatpush.bf16.msra.mxu0 %v2552
      %2638 = vmatpush.bf16.msra.mxu0 %v2550
      %2639 = vmatpush.bf16.msra.mxu0 %v2548
      %2640 = vmatpush.bf16.msra.mxu0 %v2546
      %2641 = vmatpush.bf16.msra.mxu0 %v2544
      %2642 = vmatpush.bf16.msra.mxu0 %v2542
      %2643 = vmatpush.bf16.msra.mxu0 %v2540
      %2644 = vmatpush.bf16.msra.mxu0 %v2538
      %2645 = vmatmul.bf16.gmra.mxu0 %v2603
      %v2646 = vpop.f32.mrf.mxu0
      %v2647 = vadd.f32 %v2628, %v2646
      %v2648 = vpop.f32.mrf.mxu0
      %v2649 = vadd.f32 %v2630, %v2648
      %2650 = vmatmul.bf16.gmra.mxu0 %v2606
      %v2651 = vpop.f32.mrf.mxu0
      %v2652 = vadd.f32 %v2633, %v2651
      %v2653 = vpop.f32.mrf.mxu0
      %v2654 = vadd.f32 %v2635, %v2653
      %2655 = vdwg.mxu0
      %2656 = vmatpush.bf16.msra.mxu0 0
      %2657 = vmatpush.bf16.msra.mxu0 0
      %2658 = vmatpush.bf16.msra.mxu0 0
      %2659 = vmatpush.bf16.msra.mxu0 0
      %2660 = vmatpush.bf16.msra.mxu0 0
      %2661 = vmatpush.bf16.msra.mxu0 0
      %2662 = vmatpush.bf16.msra.mxu0 %v2556
      %2663 = vmatpush.bf16.msra.mxu0 %v2554
      %2664 = vmatmul.bf16.gmra.mxu0 %v2613
      %v2665 = vpop.f32.mrf.mxu0
      %v2666 = vadd.f32 %v2647, %v2665
      %v2667 = vpop.f32.mrf.mxu0
      %v2668 = vadd.f32 %v2649, %v2667
      %2669 = vmatmul.bf16.gmra.mxu0 %v2616
      %v2670 = vpop.f32.mrf.mxu0
      %v2671 = vadd.f32 %v2652, %v2670
      %v2672 = vpop.f32.mrf.mxu0
      %v2673 = vadd.f32 %v2654, %v2672
      %2674 = vdwg.mxu0
      %2675 = vmatpush.bf16.msra.mxu0 %v2537
      %2676 = vmatpush.bf16.msra.mxu0 %v2535
      %2677 = vmatpush.bf16.msra.mxu0 %v2533
      %2678 = vmatpush.bf16.msra.mxu0 %v2531
      %2679 = vmatpush.bf16.msra.mxu0 %v2529
      %2680 = vmatpush.bf16.msra.mxu0 %v2527
      %2681 = vmatpush.bf16.msra.mxu0 %v2525
      %2682 = vmatpush.bf16.msra.mxu0 %v2523
      %2683 = vmatmul.bf16.gmra.mxu0 %v2602
      %v2684 = vpop.f32.mrf.mxu0
      %v2685 = vadd.f32 %v2565, %v2684
      %v2686 = vpop.f32.mrf.mxu0
      %v2687 = vadd.f32 %v2570, %v2686
      %2688 = vmatmul.bf16.gmra.mxu0 %v2605
      %v2689 = vpop.f32.mrf.mxu0
      %v2690 = vadd.f32 %v2575, %v2689
      %v2691 = vpop.f32.mrf.mxu0
      %v2692 = vadd.f32 %v2580, %v2691
      %2693 = vdwg.mxu0
      %2694 = vmatpush.bf16.msra.mxu0 %v2553
      %2695 = vmatpush.bf16.msra.mxu0 %v2551
      %2696 = vmatpush.bf16.msra.mxu0 %v2549
      %2697 = vmatpush.bf16.msra.mxu0 %v2547
      %2698 = vmatpush.bf16.msra.mxu0 %v2545
      %2699 = vmatpush.bf16.msra.mxu0 %v2543
      %2700 = vmatpush.bf16.msra.mxu0 %v2541
      %2701 = vmatpush.bf16.msra.mxu0 %v2539
      %2702 = vmatmul.bf16.gmra.mxu0 %v2603
      %v2703 = vpop.f32.mrf.mxu0
      %v2704 = vadd.f32 %v2685, %v2703
      %v2705 = vpop.f32.mrf.mxu0
      %v2706 = vadd.f32 %v2687, %v2705
      %2707 = vmatmul.bf16.gmra.mxu0 %v2606
      %v2708 = vpop.f32.mrf.mxu0
      %v2709 = vadd.f32 %v2690, %v2708
      %v2710 = vpop.f32.mrf.mxu0
      %v2711 = vadd.f32 %v2692, %v2710
      %2712 = vdwg.mxu0
      %2713 = vmatpush.bf16.msra.mxu0 0
      %2714 = vmatpush.bf16.msra.mxu0 0
      %2715 = vmatpush.bf16.msra.mxu0 0
      %2716 = vmatpush.bf16.msra.mxu0 0
      %2717 = vmatpush.bf16.msra.mxu0 0
      %2718 = vmatpush.bf16.msra.mxu0 0
      %2719 = vmatpush.bf16.msra.mxu0 %v2557
      %2720 = vmatpush.bf16.msra.mxu0 %v2555
      %2721 = vmatmul.bf16.gmra.mxu0 %v2613
      %v2722 = vpop.f32.mrf.mxu0
      %v2723 = vadd.f32 %v2704, %v2722
      %v2724 = vpop.f32.mrf.mxu0
      %v2725 = vadd.f32 %v2706, %v2724
      %2726 = vmatmul.bf16.gmra.mxu0 %v2616
      %v2727 = vpop.f32.mrf.mxu0
      %v2728 = vadd.f32 %v2709, %v2727
      %v2729 = vpop.f32.mrf.mxu0
      %v2730 = vadd.f32 %v2711, %v2729
      %2731 = vdwg.mxu0
      %v2732 = vmax.f32 %v2666, 0.0
      %v2733 = vmax.f32 %v2723, 0.0
      %v2734 = vmax.f32 %v2668, 0.0
      %v2735 = vmax.f32 %v2725, 0.0
      %v2736 = vmax.f32 %v2671, 0.0
      %v2737 = vmax.f32 %v2728, 0.0
      %v2738 = vmax.f32 %v2673, 0.0
      %v2739 = vmax.f32 %v2730, 0.0
      %2740 = vst [vmem:[#allocation2 + $0x8] sm:$0xff] %v2732
      %2741 = vst [vmem:[#allocation2 + $0x10] sm:$0xff] %v2733
      %2742 = vst [vmem:[#allocation2 + $0x28] sm:$0xff] %v2734
      %2743 = vst [vmem:[#allocation2 + $0x30] sm:$0xff] %v2735
      %2744 = vst [vmem:[#allocation2 + $0x48] sm:$0xff] %v2736
      %2745 = vst [vmem:[#allocation2 + $0x50] sm:$0xff] %v2737
      %2746 = vst [vmem:[#allocation2 + $0x68] sm:$0xff] %v2738
      %2747 = vst [vmem:[#allocation2 + $0x70] sm:$0xff] %v2739
      %v2748 = vld [vmem:[#allocation2] sm:$0xff]
      %v2749 = vld [vmem:[#allocation2 + $0x8] sm:$0xff]
      %v2750 = vld [vmem:[#allocation2 + $0x10] sm:$0xff]
      %v2751 = vld [vmem:[#allocation2 + $0x20] sm:$0xff]
      %v2752 = vld [vmem:[#allocation2 + $0x28] sm:$0xff]
      %v2753 = vld [vmem:[#allocation2 + $0x30] sm:$0xff]
      %v2754 = vld [vmem:[#allocation2 + $0x40] sm:$0xff]
      %v2755 = vld [vmem:[#allocation2 + $0x48] sm:$0xff]
      %v2756 = vld [vmem:[#allocation2 + $0x50] sm:$0xff]
      %v2757 = vld [vmem:[#allocation2 + $0x60] sm:$0xff]
      %v2758 = vld [vmem:[#allocation2 + $0x68] sm:$0xff]
      %v2759 = vld [vmem:[#allocation2 + $0x70] sm:$0xff]
      %v2760 = vmul.f32 %v2748, %v453
      %v2761 = vmul.f32 %v2749, %v457
      %v2762 = vmul.f32 %v2750, %v455
      %v2763 = vmul.f32 %v2751, %v453
      %v2764 = vmul.f32 %v2752, %v457
      %v2765 = vmul.f32 %v2753, %v455
      %v2766 = vmul.f32 %v2754, %v453
      %v2767 = vmul.f32 %v2755, %v457
      %v2768 = vmul.f32 %v2756, %v455
      %v2769 = vmul.f32 %v2757, %v453
      %v2770 = vmul.f32 %v2758, %v457
      %v2771 = vmul.f32 %v2759, %v455
      %2784 = vrot.lane.b32.xlu0 %v2760, 17
      %v2785 = vpop.permute.xlu0 %2784
      %2786 = vrot.lane.b32.xlu0 %v2761, 17
      %v2787 = vpop.permute.xlu0 %2786
      %2788 = vrot.lane.b32.xlu0 %v2762, 17
      %v2789 = vpop.permute.xlu0 %2788
      %2790 = vrot.lane.b32.xlu0 %v2763, 17
      %v2791 = vpop.permute.xlu0 %2790
      %2792 = vrot.lane.b32.xlu0 %v2764, 17
      %v2793 = vpop.permute.xlu0 %2792
      %2794 = vrot.lane.b32.xlu0 %v2765, 17
      %v2795 = vpop.permute.xlu0 %2794
      %2796 = vrot.lane.b32.xlu0 %v2766, 17
      %v2797 = vpop.permute.xlu0 %2796
      %2798 = vrot.lane.b32.xlu0 %v2767, 17
      %v2799 = vpop.permute.xlu0 %2798
      %2800 = vrot.lane.b32.xlu0 %v2768, 17
      %v2801 = vpop.permute.xlu0 %2800
      %2802 = vrot.lane.b32.xlu0 %v2769, 17
      %v2803 = vpop.permute.xlu0 %2802
      %2804 = vrot.lane.b32.xlu0 %v2770, 17
      %v2805 = vpop.permute.xlu0 %2804
      %2806 = vrot.lane.b32.xlu0 %v2771, 17
      %v2807 = vpop.permute.xlu0 %2806
      %v2808 = vsel %vm473, %v2785, %v2787
      %v2809 = vsel %vm473, %v2787, %v2789
      %v2810 = vsel %vm473, %v2791, %v2793
      %v2811 = vsel %vm473, %v2793, %v2795
      %v2812 = vsel %vm473, %v2797, %v2799
      %v2813 = vsel %vm473, %v2799, %v2801
      %v2814 = vsel %vm473, %v2803, %v2805
      %v2815 = vsel %vm473, %v2805, %v2807
      %2824 = vst [vmem:[#allocation3] sm:$0xff] %v2808
      %2825 = vst [vmem:[#allocation3 + $0x8] sm:$0xff] %v2809
      %2826 = vst [vmem:[#allocation3 + $0x10] sm:$0xff] %v2810
      %2827 = vst [vmem:[#allocation3 + $0x18] sm:$0xff] %v2811
      %2828 = vst [vmem:[#allocation3 + $0x20] sm:$0xff] %v2812
      %2829 = vst [vmem:[#allocation3 + $0x28] sm:$0xff] %v2813
      %2830 = vst [vmem:[#allocation3 + $0x30] sm:$0xff] %v2814
      %2831 = vst [vmem:[#allocation3 + $0x38] sm:$0xff] %v2815
      %v2832 = vld [vmem:[#allocation2] sm:$0xff]
      %v2833 = vld [vmem:[#allocation2 + $0x8] sm:$0xff]
      %v2834 = vld [vmem:[#allocation2 + $0x10] sm:$0xff]
      %v2835 = vld [vmem:[#allocation2 + $0x20] sm:$0xff]
      %v2836 = vld [vmem:[#allocation2 + $0x28] sm:$0xff]
      %v2837 = vld [vmem:[#allocation2 + $0x30] sm:$0xff]
      %v2838 = vld [vmem:[#allocation2 + $0x40] sm:$0xff]
      %v2839 = vld [vmem:[#allocation2 + $0x48] sm:$0xff]
      %v2840 = vld [vmem:[#allocation2 + $0x50] sm:$0xff]
      %v2841 = vld [vmem:[#allocation2 + $0x60] sm:$0xff]
      %v2842 = vld [vmem:[#allocation2 + $0x68] sm:$0xff]
      %v2843 = vld [vmem:[#allocation2 + $0x70] sm:$0xff]
      %2856 = vrot.lane.b32.xlu0 %v2832, 16
      %v2857 = vpop.permute.xlu0 %2856
      %2858 = vrot.lane.b32.xlu0 %v2833, 16
      %v2859 = vpop.permute.xlu0 %2858
      %2860 = vrot.lane.b32.xlu0 %v2834, 16
      %v2861 = vpop.permute.xlu0 %2860
      %2862 = vrot.lane.b32.xlu0 %v2835, 16
      %v2863 = vpop.permute.xlu0 %2862
      %2864 = vrot.lane.b32.xlu0 %v2836, 16
      %v2865 = vpop.permute.xlu0 %2864
      %2866 = vrot.lane.b32.xlu0 %v2837, 16
      %v2867 = vpop.permute.xlu0 %2866
      %2868 = vrot.lane.b32.xlu0 %v2838, 16
      %v2869 = vpop.permute.xlu0 %2868
      %2870 = vrot.lane.b32.xlu0 %v2839, 16
      %v2871 = vpop.permute.xlu0 %2870
      %2872 = vrot.lane.b32.xlu0 %v2840, 16
      %v2873 = vpop.permute.xlu0 %2872
      %2874 = vrot.lane.b32.xlu0 %v2841, 16
      %v2875 = vpop.permute.xlu0 %2874
      %2876 = vrot.lane.b32.xlu0 %v2842, 16
      %v2877 = vpop.permute.xlu0 %2876
      %2878 = vrot.lane.b32.xlu0 %v2843, 16
      %v2879 = vpop.permute.xlu0 %2878
      %v2880 = vsel %vm495, %v2857, %v2859
      %v2881 = vsel %vm495, %v2859, %v2861
      %v2882 = vsel %vm495, %v2863, %v2865
      %v2883 = vsel %vm495, %v2865, %v2867
      %v2884 = vsel %vm495, %v2869, %v2871
      %v2885 = vsel %vm495, %v2871, %v2873
      %v2886 = vsel %vm495, %v2875, %v2877
      %v2887 = vsel %vm495, %v2877, %v2879
      %2896 = vst [vmem:[#allocation3 + $0x40] sm:$0xff] %v2880
      %2897 = vst [vmem:[#allocation3 + $0x48] sm:$0xff] %v2881
      %2898 = vst [vmem:[#allocation3 + $0x50] sm:$0xff] %v2882
      %2899 = vst [vmem:[#allocation3 + $0x58] sm:$0xff] %v2883
      %2900 = vst [vmem:[#allocation3 + $0x60] sm:$0xff] %v2884
      %2901 = vst [vmem:[#allocation3 + $0x68] sm:$0xff] %v2885
      %2902 = vst [vmem:[#allocation3 + $0x70] sm:$0xff] %v2886
      %2903 = vst [vmem:[#allocation3 + $0x78] sm:$0xff] %v2887
      %v2904 = vld [vmem:[#allocation2] sm:$0xff]
      %v2905 = vld [vmem:[#allocation2 + $0x8] sm:$0xff]
      %v2906 = vld [vmem:[#allocation2 + $0x10] sm:$0xff]
      %v2907 = vld [vmem:[#allocation2 + $0x20] sm:$0xff]
      %v2908 = vld [vmem:[#allocation2 + $0x28] sm:$0xff]
      %v2909 = vld [vmem:[#allocation2 + $0x30] sm:$0xff]
      %v2910 = vld [vmem:[#allocation2 + $0x40] sm:$0xff]
      %v2911 = vld [vmem:[#allocation2 + $0x48] sm:$0xff]
      %v2912 = vld [vmem:[#allocation2 + $0x50] sm:$0xff]
      %v2913 = vld [vmem:[#allocation2 + $0x60] sm:$0xff]
      %v2914 = vld [vmem:[#allocation2 + $0x68] sm:$0xff]
      %v2915 = vld [vmem:[#allocation2 + $0x70] sm:$0xff]
      %v2916 = vmul.f32 %v2904, %v508
      %v2917 = vmul.f32 %v2905, %v512
      %v2918 = vmul.f32 %v2906, %v510
      %v2919 = vmul.f32 %v2907, %v508
      %v2920 = vmul.f32 %v2908, %v512
      %v2921 = vmul.f32 %v2909, %v510
      %v2922 = vmul.f32 %v2910, %v508
      %v2923 = vmul.f32 %v2911, %v512
      %v2924 = vmul.f32 %v2912, %v510
      %v2925 = vmul.f32 %v2913, %v508
      %v2926 = vmul.f32 %v2914, %v512
      %v2927 = vmul.f32 %v2915, %v510
      %2940 = vrot.lane.b32.xlu0 %v2916, 15
      %v2941 = vpop.permute.xlu0 %2940
      %2942 = vrot.lane.b32.xlu0 %v2917, 15
      %v2943 = vpop.permute.xlu0 %2942
      %2944 = vrot.lane.b32.xlu0 %v2918, 15
      %v2945 = vpop.permute.xlu0 %2944
      %2946 = vrot.lane.b32.xlu0 %v2919, 15
      %v2947 = vpop.permute.xlu0 %2946
      %2948 = vrot.lane.b32.xlu0 %v2920, 15
      %v2949 = vpop.permute.xlu0 %2948
      %2950 = vrot.lane.b32.xlu0 %v2921, 15
      %v2951 = vpop.permute.xlu0 %2950
      %2952 = vrot.lane.b32.xlu0 %v2922, 15
      %v2953 = vpop.permute.xlu0 %2952
      %2954 = vrot.lane.b32.xlu0 %v2923, 15
      %v2955 = vpop.permute.xlu0 %2954
      %2956 = vrot.lane.b32.xlu0 %v2924, 15
      %v2957 = vpop.permute.xlu0 %2956
      %2958 = vrot.lane.b32.xlu0 %v2925, 15
      %v2959 = vpop.permute.xlu0 %2958
      %2960 = vrot.lane.b32.xlu0 %v2926, 15
      %v2961 = vpop.permute.xlu0 %2960
      %2962 = vrot.lane.b32.xlu0 %v2927, 15
      %v2963 = vpop.permute.xlu0 %2962
      %v2964 = vsel %vm528, %v2941, %v2943
      %v2965 = vsel %vm528, %v2943, %v2945
      %v2966 = vsel %vm528, %v2947, %v2949
      %v2967 = vsel %vm528, %v2949, %v2951
      %v2968 = vsel %vm528, %v2953, %v2955
      %v2969 = vsel %vm528, %v2955, %v2957
      %v2970 = vsel %vm528, %v2959, %v2961
      %v2971 = vsel %vm528, %v2961, %v2963
      %2980 = vst [vmem:[#allocation3 + $0x80] sm:$0xff] %v2964
      %2981 = vst [vmem:[#allocation3 + $0x88] sm:$0xff] %v2965
      %2982 = vst [vmem:[#allocation3 + $0x90] sm:$0xff] %v2966
      %2983 = vst [vmem:[#allocation3 + $0x98] sm:$0xff] %v2967
      %2984 = vst [vmem:[#allocation3 + $0xa0] sm:$0xff] %v2968
      %2985 = vst [vmem:[#allocation3 + $0xa8] sm:$0xff] %v2969
      %2986 = vst [vmem:[#allocation3 + $0xb0] sm:$0xff] %v2970
      %2987 = vst [vmem:[#allocation3 + $0xb8] sm:$0xff] %v2971
      %v2988 = vld [vmem:[#allocation2] sm:$0xff]
      %v2989 = vld [vmem:[#allocation2 + $0x8] sm:$0xff]
      %v2990 = vld [vmem:[#allocation2 + $0x10] sm:$0xff]
      %v2991 = vld [vmem:[#allocation2 + $0x20] sm:$0xff]
      %v2992 = vld [vmem:[#allocation2 + $0x28] sm:$0xff]
      %v2993 = vld [vmem:[#allocation2 + $0x30] sm:$0xff]
      %v2994 = vld [vmem:[#allocation2 + $0x40] sm:$0xff]
      %v2995 = vld [vmem:[#allocation2 + $0x48] sm:$0xff]
      %v2996 = vld [vmem:[#allocation2 + $0x50] sm:$0xff]
      %v2997 = vld [vmem:[#allocation2 + $0x60] sm:$0xff]
      %v2998 = vld [vmem:[#allocation2 + $0x68] sm:$0xff]
      %v2999 = vld [vmem:[#allocation2 + $0x70] sm:$0xff]
      %v3000 = vmul.f32 %v2988, %v539
      %v3001 = vmul.f32 %v2989, %v543
      %v3002 = vmul.f32 %v2990, %v541
      %v3003 = vmul.f32 %v2991, %v539
      %v3004 = vmul.f32 %v2992, %v543
      %v3005 = vmul.f32 %v2993, %v541
      %v3006 = vmul.f32 %v2994, %v539
      %v3007 = vmul.f32 %v2995, %v543
      %v3008 = vmul.f32 %v2996, %v541
      %v3009 = vmul.f32 %v2997, %v539
      %v3010 = vmul.f32 %v2998, %v543
      %v3011 = vmul.f32 %v2999, %v541
      %3024 = vrot.lane.b32.xlu0 %v3000, 1
      %v3025 = vpop.permute.xlu0 %3024
      %3026 = vrot.lane.b32.xlu0 %v3001, 1
      %v3027 = vpop.permute.xlu0 %3026
      %3028 = vrot.lane.b32.xlu0 %v3002, 1
      %v3029 = vpop.permute.xlu0 %3028
      %3030 = vrot.lane.b32.xlu0 %v3003, 1
      %v3031 = vpop.permute.xlu0 %3030
      %3032 = vrot.lane.b32.xlu0 %v3004, 1
      %v3033 = vpop.permute.xlu0 %3032
      %3034 = vrot.lane.b32.xlu0 %v3005, 1
      %v3035 = vpop.permute.xlu0 %3034
      %3036 = vrot.lane.b32.xlu0 %v3006, 1
      %v3037 = vpop.permute.xlu0 %3036
      %3038 = vrot.lane.b32.xlu0 %v3007, 1
      %v3039 = vpop.permute.xlu0 %3038
      %3040 = vrot.lane.b32.xlu0 %v3008, 1
      %v3041 = vpop.permute.xlu0 %3040
      %3042 = vrot.lane.b32.xlu0 %v3009, 1
      %v3043 = vpop.permute.xlu0 %3042
      %3044 = vrot.lane.b32.xlu0 %v3010, 1
      %v3045 = vpop.permute.xlu0 %3044
      %3046 = vrot.lane.b32.xlu0 %v3011, 1
      %v3047 = vpop.permute.xlu0 %3046
      %v3048 = vsel %vm562, %v3025, %v3027
      %v3049 = vsel %vm562, %v3027, %v3029
      %v3050 = vsel %vm562, %v3031, %v3033
      %v3051 = vsel %vm562, %v3033, %v3035
      %v3052 = vsel %vm562, %v3037, %v3039
      %v3053 = vsel %vm562, %v3039, %v3041
      %v3054 = vsel %vm562, %v3043, %v3045
      %v3055 = vsel %vm562, %v3045, %v3047
      %3064 = vst [vmem:[#allocation3 + $0xc0] sm:$0xff] %v3048
      %3065 = vst [vmem:[#allocation3 + $0xc8] sm:$0xff] %v3049
      %3066 = vst [vmem:[#allocation3 + $0xd0] sm:$0xff] %v3050
      %3067 = vst [vmem:[#allocation3 + $0xd8] sm:$0xff] %v3051
      %3068 = vst [vmem:[#allocation3 + $0xe0] sm:$0xff] %v3052
      %3069 = vst [vmem:[#allocation3 + $0xe8] sm:$0xff] %v3053
      %3070 = vst [vmem:[#allocation3 + $0xf0] sm:$0xff] %v3054
      %3071 = vst [vmem:[#allocation3 + $0xf8] sm:$0xff] %v3055
      %v3072 = vld [vmem:[#allocation2 + $0x8] sm:$0xff]
      %v3073 = vld [vmem:[#allocation2 + $0x10] sm:$0xff]
      %v3074 = vld [vmem:[#allocation2 + $0x28] sm:$0xff]
      %v3075 = vld [vmem:[#allocation2 + $0x30] sm:$0xff]
      %v3076 = vld [vmem:[#allocation2 + $0x48] sm:$0xff]
      %v3077 = vld [vmem:[#allocation2 + $0x50] sm:$0xff]
      %v3078 = vld [vmem:[#allocation2 + $0x68] sm:$0xff]
      %v3079 = vld [vmem:[#allocation2 + $0x70] sm:$0xff]
      %3080 = vst [vmem:[#allocation3 + $0x100] sm:$0xff] %v3072
      %3081 = vst [vmem:[#allocation3 + $0x108] sm:$0xff] %v3073
      %3082 = vst [vmem:[#allocation3 + $0x110] sm:$0xff] %v3074
      %3083 = vst [vmem:[#allocation3 + $0x118] sm:$0xff] %v3075
      %3084 = vst [vmem:[#allocation3 + $0x120] sm:$0xff] %v3076
      %3085 = vst [vmem:[#allocation3 + $0x128] sm:$0xff] %v3077
      %3086 = vst [vmem:[#allocation3 + $0x130] sm:$0xff] %v3078
      %3087 = vst [vmem:[#allocation3 + $0x138] sm:$0xff] %v3079
      %v3088 = vld [vmem:[#allocation2 + $0x8] sm:$0xff]
      %v3089 = vld [vmem:[#allocation2 + $0x10] sm:$0xff]
      %v3090 = vld [vmem:[#allocation2 + $0x18] sm:$0xff]
      %v3091 = vld [vmem:[#allocation2 + $0x28] sm:$0xff]
      %v3092 = vld [vmem:[#allocation2 + $0x30] sm:$0xff]
      %v3093 = vld [vmem:[#allocation2 + $0x38] sm:$0xff]
      %v3094 = vld [vmem:[#allocation2 + $0x48] sm:$0xff]
      %v3095 = vld [vmem:[#allocation2 + $0x50] sm:$0xff]
      %v3096 = vld [vmem:[#allocation2 + $0x58] sm:$0xff]
      %v3097 = vld [vmem:[#allocation2 + $0x68] sm:$0xff]
      %v3098 = vld [vmem:[#allocation2 + $0x70] sm:$0xff]
      %v3099 = vld [vmem:[#allocation2 + $0x78] sm:$0xff]
      %v3100 = vmul.f32 %v3088, %v577
      %v3101 = vmul.f32 %v3089, %v580
      %v3102 = vmul.f32 %v3090, %v579
      %v3103 = vmul.f32 %v3091, %v577
      %v3104 = vmul.f32 %v3092, %v580
      %v3105 = vmul.f32 %v3093, %v579
      %v3106 = vmul.f32 %v3094, %v577
      %v3107 = vmul.f32 %v3095, %v580
      %v3108 = vmul.f32 %v3096, %v579
      %v3109 = vmul.f32 %v3097, %v577
      %v3110 = vmul.f32 %v3098, %v580
      %v3111 = vmul.f32 %v3099, %v579
      %3124 = vrot.lane.b32.xlu0 %v3100, 127
      %v3125 = vpop.permute.xlu0 %3124
      %3126 = vrot.lane.b32.xlu0 %v3101, 127
      %v3127 = vpop.permute.xlu0 %3126
      %3128 = vrot.lane.b32.xlu0 %v3102, 127
      %v3129 = vpop.permute.xlu0 %3128
      %3130 = vrot.lane.b32.xlu0 %v3103, 127
      %v3131 = vpop.permute.xlu0 %3130
      %3132 = vrot.lane.b32.xlu0 %v3104, 127
      %v3133 = vpop.permute.xlu0 %3132
      %3134 = vrot.lane.b32.xlu0 %v3105, 127
      %v3135 = vpop.permute.xlu0 %3134
      %3136 = vrot.lane.b32.xlu0 %v3106, 127
      %v3137 = vpop.permute.xlu0 %3136
      %3138 = vrot.lane.b32.xlu0 %v3107, 127
      %v3139 = vpop.permute.xlu0 %3138
      %3140 = vrot.lane.b32.xlu0 %v3108, 127
      %v3141 = vpop.permute.xlu0 %3140
      %3142 = vrot.lane.b32.xlu0 %v3109, 127
      %v3143 = vpop.permute.xlu0 %3142
      %3144 = vrot.lane.b32.xlu0 %v3110, 127
      %v3145 = vpop.permute.xlu0 %3144
      %3146 = vrot.lane.b32.xlu0 %v3111, 127
      %v3147 = vpop.permute.xlu0 %3146
      %v3148 = vsel %vm542, %v3125, %v3127
      %v3149 = vsel %vm542, %v3127, %v3129
      %v3150 = vsel %vm542, %v3131, %v3133
      %v3151 = vsel %vm542, %v3133, %v3135
      %v3152 = vsel %vm542, %v3137, %v3139
      %v3153 = vsel %vm542, %v3139, %v3141
      %v3154 = vsel %vm542, %v3143, %v3145
      %v3155 = vsel %vm542, %v3145, %v3147
      %3164 = vst [vmem:[#allocation3 + $0x140] sm:$0xff] %v3148
      %3165 = vst [vmem:[#allocation3 + $0x148] sm:$0xff] %v3149
      %3166 = vst [vmem:[#allocation3 + $0x150] sm:$0xff] %v3150
      %3167 = vst [vmem:[#allocation3 + $0x158] sm:$0xff] %v3151
      %3168 = vst [vmem:[#allocation3 + $0x160] sm:$0xff] %v3152
      %3169 = vst [vmem:[#allocation3 + $0x168] sm:$0xff] %v3153
      %3170 = vst [vmem:[#allocation3 + $0x170] sm:$0xff] %v3154
      %3171 = vst [vmem:[#allocation3 + $0x178] sm:$0xff] %v3155
      %v3172 = vld [vmem:[#allocation2 + $0x8] sm:$0xff]
      %v3173 = vld [vmem:[#allocation2 + $0x10] sm:$0xff]
      %v3174 = vld [vmem:[#allocation2 + $0x18] sm:$0xff]
      %v3175 = vld [vmem:[#allocation2 + $0x28] sm:$0xff]
      %v3176 = vld [vmem:[#allocation2 + $0x30] sm:$0xff]
      %v3177 = vld [vmem:[#allocation2 + $0x38] sm:$0xff]
      %v3178 = vld [vmem:[#allocation2 + $0x48] sm:$0xff]
      %v3179 = vld [vmem:[#allocation2 + $0x50] sm:$0xff]
      %v3180 = vld [vmem:[#allocation2 + $0x58] sm:$0xff]
      %v3181 = vld [vmem:[#allocation2 + $0x68] sm:$0xff]
      %v3182 = vld [vmem:[#allocation2 + $0x70] sm:$0xff]
      %v3183 = vld [vmem:[#allocation2 + $0x78] sm:$0xff]
      %v3184 = vmul.f32 %v3172, %v609
      %v3185 = vmul.f32 %v3173, %v612
      %v3186 = vmul.f32 %v3174, %v611
      %v3187 = vmul.f32 %v3175, %v609
      %v3188 = vmul.f32 %v3176, %v612
      %v3189 = vmul.f32 %v3177, %v611
      %v3190 = vmul.f32 %v3178, %v609
      %v3191 = vmul.f32 %v3179, %v612
      %v3192 = vmul.f32 %v3180, %v611
      %v3193 = vmul.f32 %v3181, %v609
      %v3194 = vmul.f32 %v3182, %v612
      %v3195 = vmul.f32 %v3183, %v611
      %3208 = vrot.lane.b32.xlu0 %v3184, 113
      %v3209 = vpop.permute.xlu0 %3208
      %3210 = vrot.lane.b32.xlu0 %v3185, 113
      %v3211 = vpop.permute.xlu0 %3210
      %3212 = vrot.lane.b32.xlu0 %v3186, 113
      %v3213 = vpop.permute.xlu0 %3212
      %3214 = vrot.lane.b32.xlu0 %v3187, 113
      %v3215 = vpop.permute.xlu0 %3214
      %3216 = vrot.lane.b32.xlu0 %v3188, 113
      %v3217 = vpop.permute.xlu0 %3216
      %3218 = vrot.lane.b32.xlu0 %v3189, 113
      %v3219 = vpop.permute.xlu0 %3218
      %3220 = vrot.lane.b32.xlu0 %v3190, 113
      %v3221 = vpop.permute.xlu0 %3220
      %3222 = vrot.lane.b32.xlu0 %v3191, 113
      %v3223 = vpop.permute.xlu0 %3222
      %3224 = vrot.lane.b32.xlu0 %v3192, 113
      %v3225 = vpop.permute.xlu0 %3224
      %3226 = vrot.lane.b32.xlu0 %v3193, 113
      %v3227 = vpop.permute.xlu0 %3226
      %3228 = vrot.lane.b32.xlu0 %v3194, 113
      %v3229 = vpop.permute.xlu0 %3228
      %3230 = vrot.lane.b32.xlu0 %v3195, 113
      %v3231 = vpop.permute.xlu0 %3230
      %v3232 = vsel %vm511, %v3209, %v3211
      %v3233 = vsel %vm511, %v3211, %v3213
      %v3234 = vsel %vm511, %v3215, %v3217
      %v3235 = vsel %vm511, %v3217, %v3219
      %v3236 = vsel %vm511, %v3221, %v3223
      %v3237 = vsel %vm511, %v3223, %v3225
      %v3238 = vsel %vm511, %v3227, %v3229
      %v3239 = vsel %vm511, %v3229, %v3231
      %3248 = vst [vmem:[#allocation3 + $0x180] sm:$0xff] %v3232
      %3249 = vst [vmem:[#allocation3 + $0x188] sm:$0xff] %v3233
      %3250 = vst [vmem:[#allocation3 + $0x190] sm:$0xff] %v3234
      %3251 = vst [vmem:[#allocation3 + $0x198] sm:$0xff] %v3235
      %3252 = vst [vmem:[#allocation3 + $0x1a0] sm:$0xff] %v3236
      %3253 = vst [vmem:[#allocation3 + $0x1a8] sm:$0xff] %v3237
      %3254 = vst [vmem:[#allocation3 + $0x1b0] sm:$0xff] %v3238
      %3255 = vst [vmem:[#allocation3 + $0x1b8] sm:$0xff] %v3239
      %v3256 = vld [vmem:[#allocation2 + $0x8] sm:$0xff]
      %v3257 = vld [vmem:[#allocation2 + $0x10] sm:$0xff]
      %v3258 = vld [vmem:[#allocation2 + $0x18] sm:$0xff]
      %v3259 = vld [vmem:[#allocation2 + $0x28] sm:$0xff]
      %v3260 = vld [vmem:[#allocation2 + $0x30] sm:$0xff]
      %v3261 = vld [vmem:[#allocation2 + $0x38] sm:$0xff]
      %v3262 = vld [vmem:[#allocation2 + $0x48] sm:$0xff]
      %v3263 = vld [vmem:[#allocation2 + $0x50] sm:$0xff]
      %v3264 = vld [vmem:[#allocation2 + $0x58] sm:$0xff]
      %v3265 = vld [vmem:[#allocation2 + $0x68] sm:$0xff]
      %v3266 = vld [vmem:[#allocation2 + $0x70] sm:$0xff]
      %v3267 = vld [vmem:[#allocation2 + $0x78] sm:$0xff]
      %3280 = vrot.lane.b32.xlu0 %v3256, 112
      %v3281 = vpop.permute.xlu0 %3280
      %3282 = vrot.lane.b32.xlu0 %v3257, 112
      %v3283 = vpop.permute.xlu0 %3282
      %3284 = vrot.lane.b32.xlu0 %v3258, 112
      %v3285 = vpop.permute.xlu0 %3284
      %3286 = vrot.lane.b32.xlu0 %v3259, 112
      %v3287 = vpop.permute.xlu0 %3286
      %3288 = vrot.lane.b32.xlu0 %v3260, 112
      %v3289 = vpop.permute.xlu0 %3288
      %3290 = vrot.lane.b32.xlu0 %v3261, 112
      %v3291 = vpop.permute.xlu0 %3290
      %3292 = vrot.lane.b32.xlu0 %v3262, 112
      %v3293 = vpop.permute.xlu0 %3292
      %3294 = vrot.lane.b32.xlu0 %v3263, 112
      %v3295 = vpop.permute.xlu0 %3294
      %3296 = vrot.lane.b32.xlu0 %v3264, 112
      %v3297 = vpop.permute.xlu0 %3296
      %3298 = vrot.lane.b32.xlu0 %v3265, 112
      %v3299 = vpop.permute.xlu0 %3298
      %3300 = vrot.lane.b32.xlu0 %v3266, 112
      %v3301 = vpop.permute.xlu0 %3300
      %3302 = vrot.lane.b32.xlu0 %v3267, 112
      %v3303 = vpop.permute.xlu0 %3302
      %v3304 = vsel %vm649, %v3281, %v3283
      %v3305 = vsel %vm649, %v3283, %v3285
      %v3306 = vsel %vm649, %v3287, %v3289
      %v3307 = vsel %vm649, %v3289, %v3291
      %v3308 = vsel %vm649, %v3293, %v3295
      %v3309 = vsel %vm649, %v3295, %v3297
      %v3310 = vsel %vm649, %v3299, %v3301
      %v3311 = vsel %vm649, %v3301, %v3303
      %3320 = vst [vmem:[#allocation3 + $0x1c0] sm:$0xff] %v3304
      %3321 = vst [vmem:[#allocation3 + $0x1c8] sm:$0xff] %v3305
      %3322 = vst [vmem:[#allocation3 + $0x1d0] sm:$0xff] %v3306
      %3323 = vst [vmem:[#allocation3 + $0x1d8] sm:$0xff] %v3307
      %3324 = vst [vmem:[#allocation3 + $0x1e0] sm:$0xff] %v3308
      %3325 = vst [vmem:[#allocation3 + $0x1e8] sm:$0xff] %v3309
      %3326 = vst [vmem:[#allocation3 + $0x1f0] sm:$0xff] %v3310
      %3327 = vst [vmem:[#allocation3 + $0x1f8] sm:$0xff] %v3311
      %v3328 = vld [vmem:[#allocation2 + $0x8] sm:$0xff]
      %v3329 = vld [vmem:[#allocation2 + $0x10] sm:$0xff]
      %v3330 = vld [vmem:[#allocation2 + $0x18] sm:$0xff]
      %v3331 = vld [vmem:[#allocation2 + $0x28] sm:$0xff]
      %v3332 = vld [vmem:[#allocation2 + $0x30] sm:$0xff]
      %v3333 = vld [vmem:[#allocation2 + $0x38] sm:$0xff]
      %v3334 = vld [vmem:[#allocation2 + $0x48] sm:$0xff]
      %v3335 = vld [vmem:[#allocation2 + $0x50] sm:$0xff]
      %v3336 = vld [vmem:[#allocation2 + $0x58] sm:$0xff]
      %v3337 = vld [vmem:[#allocation2 + $0x68] sm:$0xff]
      %v3338 = vld [vmem:[#allocation2 + $0x70] sm:$0xff]
      %v3339 = vld [vmem:[#allocation2 + $0x78] sm:$0xff]
      %v3340 = vmul.f32 %v3328, %v660
      %v3341 = vmul.f32 %v3329, %v663
      %v3342 = vmul.f32 %v3330, %v662
      %v3343 = vmul.f32 %v3331, %v660
      %v3344 = vmul.f32 %v3332, %v663
      %v3345 = vmul.f32 %v3333, %v662
      %v3346 = vmul.f32 %v3334, %v660
      %v3347 = vmul.f32 %v3335, %v663
      %v3348 = vmul.f32 %v3336, %v662
      %v3349 = vmul.f32 %v3337, %v660
      %v3350 = vmul.f32 %v3338, %v663
      %v3351 = vmul.f32 %v3339, %v662
      %3364 = vrot.lane.b32.xlu0 %v3340, 111
      %v3365 = vpop.permute.xlu0 %3364
      %3366 = vrot.lane.b32.xlu0 %v3341, 111
      %v3367 = vpop.permute.xlu0 %3366
      %3368 = vrot.lane.b32.xlu0 %v3342, 111
      %v3369 = vpop.permute.xlu0 %3368
      %3370 = vrot.lane.b32.xlu0 %v3343, 111
      %v3371 = vpop.permute.xlu0 %3370
      %3372 = vrot.lane.b32.xlu0 %v3344, 111
      %v3373 = vpop.permute.xlu0 %3372
      %3374 = vrot.lane.b32.xlu0 %v3345, 111
      %v3375 = vpop.permute.xlu0 %3374
      %3376 = vrot.lane.b32.xlu0 %v3346, 111
      %v3377 = vpop.permute.xlu0 %3376
      %3378 = vrot.lane.b32.xlu0 %v3347, 111
      %v3379 = vpop.permute.xlu0 %3378
      %3380 = vrot.lane.b32.xlu0 %v3348, 111
      %v3381 = vpop.permute.xlu0 %3380
      %3382 = vrot.lane.b32.xlu0 %v3349, 111
      %v3383 = vpop.permute.xlu0 %3382
      %3384 = vrot.lane.b32.xlu0 %v3350, 111
      %v3385 = vpop.permute.xlu0 %3384
      %3386 = vrot.lane.b32.xlu0 %v3351, 111
      %v3387 = vpop.permute.xlu0 %3386
      %v3388 = vsel %vm456, %v3365, %v3367
      %v3389 = vsel %vm456, %v3367, %v3369
      %v3390 = vsel %vm456, %v3371, %v3373
      %v3391 = vsel %vm456, %v3373, %v3375
      %v3392 = vsel %vm456, %v3377, %v3379
      %v3393 = vsel %vm456, %v3379, %v3381
      %v3394 = vsel %vm456, %v3383, %v3385
      %v3395 = vsel %vm456, %v3385, %v3387
      %3404 = vst [vmem:[#allocation3 + $0x200] sm:$0xff] %v3388
      %3405 = vst [vmem:[#allocation3 + $0x208] sm:$0xff] %v3389
      %3406 = vst [vmem:[#allocation3 + $0x210] sm:$0xff] %v3390
      %3407 = vst [vmem:[#allocation3 + $0x218] sm:$0xff] %v3391
      %3408 = vst [vmem:[#allocation3 + $0x220] sm:$0xff] %v3392
      %3409 = vst [vmem:[#allocation3 + $0x228] sm:$0xff] %v3393
      %3410 = vst [vmem:[#allocation3 + $0x230] sm:$0xff] %v3394
      %3411 = vst [vmem:[#allocation3 + $0x238] sm:$0xff] %v3395
      %v3412 = vld [vmem:[%s8] sm:$0x7]
      %v3413 = vld [vmem:[#allocation3] sm:$0xff]
      %v3414 = vld [vmem:[#allocation3 + $0x8] sm:$0xff]
      %v3415 = vld [vmem:[#allocation3 + $0x10] sm:$0xff]
      %v3416 = vld [vmem:[#allocation3 + $0x18] sm:$0xff]
      %v3417 = vld [vmem:[#allocation3 + $0x20] sm:$0xff]
      %v3418 = vld [vmem:[#allocation3 + $0x28] sm:$0xff]
      %v3419 = vld [vmem:[#allocation3 + $0x30] sm:$0xff]
      %v3420 = vld [vmem:[#allocation3 + $0x38] sm:$0xff]
      %v3421 = vld [vmem:[#allocation3 + $0x40] sm:$0xff]
      %v3422 = vld [vmem:[#allocation3 + $0x48] sm:$0xff]
      %v3423 = vld [vmem:[#allocation3 + $0x50] sm:$0xff]
      %v3424 = vld [vmem:[#allocation3 + $0x58] sm:$0xff]
      %v3425 = vld [vmem:[#allocation3 + $0x60] sm:$0xff]
      %v3426 = vld [vmem:[#allocation3 + $0x68] sm:$0xff]
      %v3427 = vld [vmem:[#allocation3 + $0x70] sm:$0xff]
      %v3428 = vld [vmem:[#allocation3 + $0x78] sm:$0xff]
      %v3429 = vld [vmem:[#allocation3 + $0x80] sm:$0xff]
      %v3430 = vld [vmem:[#allocation3 + $0x88] sm:$0xff]
      %v3431 = vld [vmem:[#allocation3 + $0x90] sm:$0xff]
      %v3432 = vld [vmem:[#allocation3 + $0x98] sm:$0xff]
      %v3433 = vld [vmem:[#allocation3 + $0xa0] sm:$0xff]
      %v3434 = vld [vmem:[#allocation3 + $0xa8] sm:$0xff]
      %v3435 = vld [vmem:[#allocation3 + $0xb0] sm:$0xff]
      %v3436 = vld [vmem:[#allocation3 + $0xb8] sm:$0xff]
      %v3437 = vld [vmem:[#allocation3 + $0xc0] sm:$0xff]
      %v3438 = vld [vmem:[#allocation3 + $0xc8] sm:$0xff]
      %v3439 = vld [vmem:[#allocation3 + $0xd0] sm:$0xff]
      %v3440 = vld [vmem:[#allocation3 + $0xd8] sm:$0xff]
      %v3441 = vld [vmem:[#allocation3 + $0xe0] sm:$0xff]
      %v3442 = vld [vmem:[#allocation3 + $0xe8] sm:$0xff]
      %v3443 = vld [vmem:[#allocation3 + $0xf0] sm:$0xff]
      %v3444 = vld [vmem:[#allocation3 + $0xf8] sm:$0xff]
      %v3445 = vld [vmem:[#allocation3 + $0x100] sm:$0xff]
      %v3446 = vld [vmem:[#allocation3 + $0x108] sm:$0xff]
      %v3447 = vld [vmem:[#allocation3 + $0x110] sm:$0xff]
      %v3448 = vld [vmem:[#allocation3 + $0x118] sm:$0xff]
      %v3449 = vld [vmem:[#allocation3 + $0x120] sm:$0xff]
      %v3450 = vld [vmem:[#allocation3 + $0x128] sm:$0xff]
      %v3451 = vld [vmem:[#allocation3 + $0x130] sm:$0xff]
      %v3452 = vld [vmem:[#allocation3 + $0x138] sm:$0xff]
      %v3453 = vld [vmem:[#allocation3 + $0x140] sm:$0xff]
      %v3454 = vld [vmem:[#allocation3 + $0x148] sm:$0xff]
      %v3455 = vld [vmem:[#allocation3 + $0x150] sm:$0xff]
      %v3456 = vld [vmem:[#allocation3 + $0x158] sm:$0xff]
      %v3457 = vld [vmem:[#allocation3 + $0x160] sm:$0xff]
      %v3458 = vld [vmem:[#allocation3 + $0x168] sm:$0xff]
      %v3459 = vld [vmem:[#allocation3 + $0x170] sm:$0xff]
      %v3460 = vld [vmem:[#allocation3 + $0x178] sm:$0xff]
      %v3461 = vld [vmem:[#allocation3 + $0x180] sm:$0xff]
      %v3462 = vld [vmem:[#allocation3 + $0x188] sm:$0xff]
      %v3463 = vld [vmem:[#allocation3 + $0x190] sm:$0xff]
      %v3464 = vld [vmem:[#allocation3 + $0x198] sm:$0xff]
      %v3465 = vld [vmem:[#allocation3 + $0x1a0] sm:$0xff]
      %v3466 = vld [vmem:[#allocation3 + $0x1a8] sm:$0xff]
      %v3467 = vld [vmem:[#allocation3 + $0x1b0] sm:$0xff]
      %v3468 = vld [vmem:[#allocation3 + $0x1b8] sm:$0xff]
      %v3469 = vld [vmem:[#allocation3 + $0x1c0] sm:$0xff]
      %v3470 = vld [vmem:[#allocation3 + $0x1c8] sm:$0xff]
      %v3471 = vld [vmem:[#allocation3 + $0x1d0] sm:$0xff]
      %v3472 = vld [vmem:[#allocation3 + $0x1d8] sm:$0xff]
      %v3473 = vld [vmem:[#allocation3 + $0x1e0] sm:$0xff]
      %v3474 = vld [vmem:[#allocation3 + $0x1e8] sm:$0xff]
      %v3475 = vld [vmem:[#allocation3 + $0x1f0] sm:$0xff]
      %v3476 = vld [vmem:[#allocation3 + $0x1f8] sm:$0xff]
      %v3477 = vld [vmem:[#allocation3 + $0x200] sm:$0xff]
      %v3478 = vld [vmem:[#allocation3 + $0x208] sm:$0xff]
      %v3479 = vld [vmem:[#allocation3 + $0x210] sm:$0xff]
      %v3480 = vld [vmem:[#allocation3 + $0x218] sm:$0xff]
      %v3481 = vld [vmem:[#allocation3 + $0x220] sm:$0xff]
      %v3482 = vld [vmem:[#allocation3 + $0x228] sm:$0xff]
      %v3483 = vld [vmem:[#allocation3 + $0x230] sm:$0xff]
      %v3484 = vld [vmem:[#allocation3 + $0x238] sm:$0xff]
      %v3485 = vpack.c.bf16 %v3415, %v3413
      %v3486 = vpack.c.bf16 %v3416, %v3414
      %v3487 = vpack.c.bf16 %v3419, %v3417
      %v3488 = vpack.c.bf16 %v3420, %v3418
      %v3489 = vpack.c.bf16 %v3423, %v3421
      %v3490 = vpack.c.bf16 %v3424, %v3422
      %v3491 = vpack.c.bf16 %v3427, %v3425
      %v3492 = vpack.c.bf16 %v3428, %v3426
      %v3493 = vpack.c.bf16 %v3431, %v3429
      %v3494 = vpack.c.bf16 %v3432, %v3430
      %v3495 = vpack.c.bf16 %v3435, %v3433
      %v3496 = vpack.c.bf16 %v3436, %v3434
      %v3497 = vpack.c.bf16 %v3439, %v3437
      %v3498 = vpack.c.bf16 %v3440, %v3438
      %v3499 = vpack.c.bf16 %v3443, %v3441
      %v3500 = vpack.c.bf16 %v3444, %v3442
      %v3501 = vpack.c.bf16 %v3447, %v3445
      %v3502 = vpack.c.bf16 %v3448, %v3446
      %v3503 = vpack.c.bf16 %v3451, %v3449
      %v3504 = vpack.c.bf16 %v3452, %v3450
      %v3505 = vpack.c.bf16 %v3455, %v3453
      %v3506 = vpack.c.bf16 %v3456, %v3454
      %v3507 = vpack.c.bf16 %v3459, %v3457
      %v3508 = vpack.c.bf16 %v3460, %v3458
      %v3509 = vpack.c.bf16 %v3463, %v3461
      %v3510 = vpack.c.bf16 %v3464, %v3462
      %v3511 = vpack.c.bf16 %v3467, %v3465
      %v3512 = vpack.c.bf16 %v3468, %v3466
      %v3513 = vpack.c.bf16 %v3471, %v3469
      %v3514 = vpack.c.bf16 %v3472, %v3470
      %v3515 = vpack.c.bf16 %v3475, %v3473
      %v3516 = vpack.c.bf16 %v3476, %v3474
      %v3517 = vpack.c.bf16 %v3479, %v3477
      %v3518 = vpack.c.bf16 %v3480, %v3478
      %v3519 = vpack.c.bf16 %v3483, %v3481
      %v3520 = vpack.c.bf16 %v3484, %v3482
      %v3521 = vld [vmem:[#allocation4] sm:$0x1]
      %3523 = vset.pattern.permute.xlu0 0
      %3524 = vperm.xlu0 %3523, %v3521
      %v3525 = vpop.permute.xlu0 %3524
      %v3527 = vperm.slane %v3525, 0
      %3529 = vst [vmem:[#allocation1] ss:$9 sm:$0xff] %v3412
      %v3530 = vld [vmem:[#allocation1] sm:$0xff]
      %v3531 = vld [vmem:[#allocation1 + $0x9] sm:$0xff]
      %v3532 = vld [vmem:[#allocation1 + $0x12] sm:$0xff]
      %v3535 = vsel %vm1641, %v3532, 0
      %3537 = vmatpush.bf16.msra.mxu0 %v3499
      %3538 = vmatpush.bf16.msra.mxu0 %v3497
      %3539 = vmatpush.bf16.msra.mxu0 %v3495
      %3540 = vmatpush.bf16.msra.mxu0 %v3493
      %3541 = vmatpush.bf16.msra.mxu0 %v3491
      %3542 = vmatpush.bf16.msra.mxu0 %v3489
      %3543 = vmatpush.bf16.msra.mxu0 %v3487
      %3544 = vmatpush.bf16.msra.mxu0 %v3485
      %3545 = vmatmul.bf16.gmra.mxu0 %v3530
      %v3546 = vpop.f32.mrf.mxu0
      %v3547 = vadd.f32 %v3527, %v3546
      %v3548 = vpop.f32.mrf.mxu0
      %3549 = vdwg.mxu0
      %3550 = vmatpush.bf16.msra.mxu0 %v3515
      %3551 = vmatpush.bf16.msra.mxu0 %v3513
      %3552 = vmatpush.bf16.msra.mxu0 %v3511
      %3553 = vmatpush.bf16.msra.mxu0 %v3509
      %3554 = vmatpush.bf16.msra.mxu0 %v3507
      %3555 = vmatpush.bf16.msra.mxu0 %v3505
      %3556 = vmatpush.bf16.msra.mxu0 %v3503
      %3557 = vmatpush.bf16.msra.mxu0 %v3501
      %3558 = vmatmul.bf16.gmra.mxu0 %v3531
      %v3559 = vpop.f32.mrf.mxu0
      %v3560 = vadd.f32 %v3547, %v3559
      %v3561 = vpop.f32.mrf.mxu0
      %3562 = vdwg.mxu0
      %3563 = vmatpush.bf16.msra.mxu0 0
      %3564 = vmatpush.bf16.msra.mxu0 0
      %3565 = vmatpush.bf16.msra.mxu0 0
      %3566 = vmatpush.bf16.msra.mxu0 0
      %3567 = vmatpush.bf16.msra.mxu0 0
      %3568 = vmatpush.bf16.msra.mxu0 0
      %3569 = vmatpush.bf16.msra.mxu0 %v3519
      %3570 = vmatpush.bf16.msra.mxu0 %v3517
      %3571 = vmatmul.bf16.gmra.mxu0 %v3535
      %v3572 = vpop.f32.mrf.mxu0
      %v3573 = vadd.f32 %v3560, %v3572
      %v3574 = vpop.f32.mrf.mxu0
      %3575 = vdwg.mxu0
      %3576 = vmatpush.bf16.msra.mxu0 %v3500
      %3577 = vmatpush.bf16.msra.mxu0 %v3498
      %3578 = vmatpush.bf16.msra.mxu0 %v3496
      %3579 = vmatpush.bf16.msra.mxu0 %v3494
      %3580 = vmatpush.bf16.msra.mxu0 %v3492
      %3581 = vmatpush.bf16.msra.mxu0 %v3490
      %3582 = vmatpush.bf16.msra.mxu0 %v3488
      %3583 = vmatpush.bf16.msra.mxu0 %v3486
      %3584 = vmatmul.bf16.gmra.mxu0 %v3530
      %v3585 = vpop.f32.mrf.mxu0
      %v3586 = vadd.f32 %v3527, %v3585
      %v3587 = vpop.f32.mrf.mxu0
      %3588 = vdwg.mxu0
      %3589 = vmatpush.bf16.msra.mxu0 %v3516
      %3590 = vmatpush.bf16.msra.mxu0 %v3514
      %3591 = vmatpush.bf16.msra.mxu0 %v3512
      %3592 = vmatpush.bf16.msra.mxu0 %v3510
      %3593 = vmatpush.bf16.msra.mxu0 %v3508
      %3594 = vmatpush.bf16.msra.mxu0 %v3506
      %3595 = vmatpush.bf16.msra.mxu0 %v3504
      %3596 = vmatpush.bf16.msra.mxu0 %v3502
      %3597 = vmatmul.bf16.gmra.mxu0 %v3531
      %v3598 = vpop.f32.mrf.mxu0
      %v3599 = vadd.f32 %v3586, %v3598
      %v3600 = vpop.f32.mrf.mxu0
      %3601 = vdwg.mxu0
      %3602 = vmatpush.bf16.msra.mxu0 0
      %3603 = vmatpush.bf16.msra.mxu0 0
      %3604 = vmatpush.bf16.msra.mxu0 0
      %3605 = vmatpush.bf16.msra.mxu0 0
      %3606 = vmatpush.bf16.msra.mxu0 0
      %3607 = vmatpush.bf16.msra.mxu0 0
      %3608 = vmatpush.bf16.msra.mxu0 %v3520
      %3609 = vmatpush.bf16.msra.mxu0 %v3518
      %3610 = vmatmul.bf16.gmra.mxu0 %v3535
      %v3611 = vpop.f32.mrf.mxu0
      %v3612 = vadd.f32 %v3599, %v3611
      %v3613 = vpop.f32.mrf.mxu0
      %3614 = vdwg.mxu0
      %v3615 = vmax.f32 %v3573, 0.0
      %v3616 = vmax.f32 %v3612, 0.0
      %v3617 = vld [vmem:[%s372] sm:$0x3]
      %v3620 = vrot.slane %v3616, 7
      %vm3621 = vcmask 1040384
      %v3622 = vsel %vm3621, %v3615, %v3620
      %v3624 = vadd.f32 %v3617, %v3622
      %3625 = vst.msk [vmem:[%s376] sm:$0x3] %vm443, %v3624
      %p3626 = scmp.lt.s32.totalorder %s23, 1
      %s3627 = scalar_select %p3626, %s23, 1
      %s3628 = smul.addr %s3627, 2
      %s3629 = scalar_lea.vmem %s10, %s3628
      // Predicated region
      $region61: #{refine_net_forward.1} parent=59 // pred_check
        %p3630 = pneg %p261
      $region62: #{refine_net_forward.1} parent=59 // pred_check_branch
        %3632 = sbr.rel (%p3630) target = $region64
      $region63: #{refine_net_forward.1} parent=59 // pred_region
        _
      $region64: #{refine_net_forward.1} parent=59 // pred_fallthru
        _
    $region60: #{refine_net_forward.1} parent=5 // pred_fallthru
      _
    %p3633 = scmp.le.s32.totalorder 2, %s18
    // Predicated region
    $region65: #{refine_net_forward.1} parent=5 // pred_check
      %p3634 = pneg %p3633
    $region66: #{refine_net_forward.1} parent=5 // pred_check_branch
      %3636 = sbr.rel (%p3634) target = $region68
    $region67: #{refine_net_forward.1} parent=5 // pred_region
      %s3637 = ssub.s32 %s18, 2
      // Predicated region
      $region69: #{refine_net_forward.1} parent=67 // pred_check
        %p3638 = pneg %p267
      $region70: #{refine_net_forward.1} parent=67 // pred_check_branch
        %3640 = sbr.rel (%p3638) target = $region72
      $region71: #{refine_net_forward.1} parent=67 // pred_region
        %p3641 = scmp.lt.s32.totalorder %s24, 1
        %s3642 = scalar_select %p3641, %s24, 1
        %s3643 = smul.addr %s3642, 2
        %s3644 = scalar_lea.vmem %s10, %s3643
      $region72: #{refine_net_forward.1} parent=67 // pred_fallthru
        _
    $region68: #{refine_net_forward.1} parent=5 // pred_fallthru
      _
  $region6: #{refine_net_forward.1} parent=0 // loop_footer
    %s22 = sadd.s32 1, %s18
  $region7: #{refine_net_forward.1} parent=0 // loop_footer_branch
    %17 = sbr.rel target = $region3
  $region8: #{refine_net_forward.1} parent=0 // loop_exit
    _

</llo_original>
